<compile_context>
chip_gen: v7x
topology: tpu7x:2x2x1
jax: 0.10.0
libtpu: 0.0.40
codegen_flags: <defaults>
</compile_context>

<pallas_src>
import jax
import jax.numpy as jnp
from jax.experimental import pallas as pl
from jax.experimental.pallas import tpu as pltpu


_VMEM_LIMIT = 64 * 1024 * 1024   # <= physical VMEM on v5e/v6e/v7x


def _round_up(x, m):
    return ((x + m - 1) // m) * m


# ----------------------------------------------------------------------------
# Kernel 1: tiled matmul with K-accumulation + fused (+shift, ReLU) epilogue.
#   out = act(x @ w + shift)      x:(M,K) bf16, w:(K,N) bf16, shift:(N,) f32
# ----------------------------------------------------------------------------
def matmul_bias_act(x, w, shift, *, relu=True, out_dtype=jnp.bfloat16,
                    tm_target=512, tk_target=512, k_tile_threshold=2048):
    M, K = x.shape
    Kw, N = w.shape
    assert Kw == K

    # Row tiling: pad M to a multiple of the tile instead of collapsing to a
    # single whole-M block (keeps pipelining + megacore sharding for big M).
    tm = tm_target if M >= tm_target else _round_up(M, 8)
    M_pad = _round_up(M, tm)

    # Contraction tiling: only tile when K is large (keeps per-buffer VMEM in
    # the low-MiB range on v7x for real ResNeXt-101 widths).
    if K > k_tile_threshold:
        tk = tk_target                     # multiple of 128
        K_pad = _round_up(K, tk)
    else:
        tk = K
        K_pad = K

    if M_pad != M or K_pad != K:
        x = jnp.pad(x, ((0, M_pad - M), (0, K_pad - K)))
    if K_pad != K:
        w = jnp.pad(w, ((0, K_pad - K), (0, 0)))

    shift = shift.reshape(1, N).astype(jnp.float32)

    def kernel(x_ref, w_ref, shift_ref, o_ref, acc_ref):
        k = pl.program_id(1)

        @pl.when(k == 0)
        def _():
            acc_ref[...] = jnp.zeros_like(acc_ref)

        acc_ref[...] += jnp.dot(x_ref[...], w_ref[...],
                                preferred_element_type=jnp.float32)

        @pl.when(k == pl.num_programs(1) - 1)
        def _():
            out = acc_ref[...] + shift_ref[...]
            if relu:
                out = jnp.maximum(out, 0.0)
            o_ref[...] = out.astype(o_ref.dtype)

    out = pl.pallas_call(
        kernel,
        out_shape=jax.ShapeDtypeStruct((M_pad, N), out_dtype),
        grid=(pl.cdiv(M_pad, tm), pl.cdiv(K_pad, tk)),
        in_specs=[
            pl.BlockSpec((tm, tk), lambda m, k: (m, k)),
            pl.BlockSpec((tk, N), lambda m, k: (k, 0)),
            pl.BlockSpec((1, N), lambda m, k: (0, 0)),
        ],
        out_specs=pl.BlockSpec((tm, N), lambda m, k: (m, 0)),
        scratch_shapes=[pltpu.VMEM((tm, N), jnp.float32)],
        compiler_params=pltpu.CompilerParams(
            dimension_semantics=("parallel", "arbitrary"),
            vmem_limit_bytes=_VMEM_LIMIT),
    )(x, w, shift)
    return out[:M] if M_pad != M else out


# ----------------------------------------------------------------------------
# Kernel 2: fused bottleneck tail.
#   h3 = relu(h2 @ w3 + xf @ w_ds + shift)       (conv3+BN, downsample+BN, add)
#   feats = mean_rows(h3)                         (global average pool)
#   logits = feats @ w_fc + b_fc                  (the detached `fc` Linear)
# Neither h3 nor feats ever hit HBM; only the (B, n_classes) logits are stored.
# ----------------------------------------------------------------------------
def bottleneck_tail_pool_fc(h2, xf, w3, w_ds, shift, w_fc, b_fc, *, ts_target=512):
    B, S, mid = h2.shape
    c_in = xf.shape[-1]
    c_out = w3.shape[-1]
    n_cls = w_fc.shape[-1]

    assert S % 8 == 0
    ts = ts_target if (S >= ts_target and S % ts_target == 0) else S
    # TODO(synk): for very large, non-divisible S add zero-padding + row mask.
    n_s = S // ts
    inv_s = 1.0 / float(S)

    shift = shift.reshape(1, c_out).astype(jnp.float32)
    b_fc = b_fc.reshape(1, n_cls).astype(jnp.float32)

    def kernel(h2_ref, xf_ref, w3_ref, wds_ref, sh_ref, wfc_ref, bfc_ref,
               o_ref, acc_ref):
        s = pl.program_id(1)

        @pl.when(s == 0)
        def _():
            acc_ref[...] = jnp.zeros_like(acc_ref)

        # Two MXU passes on the same row tile; residual add stays in-register.
        h3 = jnp.dot(h2_ref[0], w3_ref[...], preferred_element_type=jnp.float32)
        h3 = h3 + jnp.dot(xf_ref[0], wds_ref[...],
                          preferred_element_type=jnp.float32)
        h3 = jnp.maximum(h3 + sh_ref[...], 0.0)

        # Global-average-pool partial sums accumulate in VMEM across s steps.
        acc_ref[...] += jnp.sum(h3, axis=0, keepdims=True)

        @pl.when(s == pl.num_programs(1) - 1)
        def _():
            feats = acc_ref[...] * inv_s                    # (1, c_out)
            logits = jnp.dot(feats, wfc_ref[...],
                             preferred_element_type=jnp.float32) + bfc_ref[...]
            o_ref[...] = logits.reshape(o_ref.shape).astype(o_ref.dtype)

    out = pl.pallas_call(
        kernel,
        out_shape=jax.ShapeDtypeStruct((B, 1, n_cls), jnp.float32),
        grid=(B, n_s),
        in_specs=[
            pl.BlockSpec((1, ts, mid), lambda b, s: (b, s, 0)),
            pl.BlockSpec((1, ts, c_in), lambda b, s: (b, s, 0)),
            pl.BlockSpec((mid, c_out), lambda b, s: (0, 0)),
            pl.BlockSpec((c_in, c_out), lambda b, s: (0, 0)),
            pl.BlockSpec((1, c_out), lambda b, s: (0, 0)),
            pl.BlockSpec((c_out, n_cls), lambda b, s: (0, 0)),
            pl.BlockSpec((1, n_cls), lambda b, s: (0, 0)),
        ],
        out_specs=pl.BlockSpec((1, 1, n_cls), lambda b, s: (b, 0, 0)),
        scratch_shapes=[pltpu.VMEM((1, c_out), jnp.float32)],
        compiler_params=pltpu.CompilerParams(
            dimension_semantics=("parallel", "arbitrary"),
            vmem_limit_bytes=_VMEM_LIMIT),
    )(h2, xf, w3, w_ds, shift, w_fc, b_fc)
    return out.reshape(B, n_cls)


# ----------------------------------------------------------------------------
# Plain-JAX glue (layout plumbing only)
# ----------------------------------------------------------------------------
def im2col_3d(x, ksize, strides, pads):
    """x: (B, T, H, W, C) channels-last -> (B*To*Ho*Wo, kt*kh*kw*C) patches."""
    kt, kh, kw = ksize
    st, sh, sw = strides
    x = jnp.pad(x, ((0, 0), (pads[0],) * 2, (pads[1],) * 2, (pads[2],) * 2, (0, 0)))
    B, Tp, Hp, Wp, C = x.shape
    To = (Tp - kt) // st + 1
    Ho = (Hp - kh) // sh + 1
    Wo = (Wp - kw) // sw + 1
    cols = []
    for dt in range(kt):
        for dh in range(kh):
            for dw in range(kw):
                cols.append(
                    x[:, dt:dt + To * st:st, dh:dh + Ho * sh:sh, dw:dw + Wo * sw:sw, :]
                )
    patches = jnp.stack(cols, axis=-2)            # (B,To,Ho,Wo, taps, C)
    return patches.reshape(B * To * Ho * Wo, kt * kh * kw * C), (B, To, Ho, Wo)


def maxpool3d(x, window=3, stride=2, pad=1):
    """PyTorch MaxPool3d(3, stride=2, padding=1) on channels-last (glue)."""
    init = jnp.array(-jnp.inf, dtype=x.dtype)
    return jax.lax.reduce_window(
        x, init, jax.lax.max,
        window_dimensions=(1, window, window, window, 1),
        window_strides=(1, stride, stride, stride, 1),
        padding=((0, 0), (pad, pad), (pad, pad), (pad, pad), (0, 0)),
    )


def conv_weight_to_matmul(w):
    """PyTorch Conv3d weight (C_out, C_in, kt, kh, kw) -> (kt*kh*kw*C_in, C_out)."""
    return jnp.transpose(w, (2, 3, 4, 1, 0)).reshape(-1, w.shape[0])


# ----------------------------------------------------------------------------
# Deterministic synthetic parameters (BN folded; scale pre-multiplied into W)
# ----------------------------------------------------------------------------
def folded_bn(key, c, eps=1e-5):
    k1, k2, k3, k4 = jax.random.split(key, 4)
    gamma = 1.0 + 0.1 * jax.random.normal(k1, (c,), jnp.float32)
    beta = 0.1 * jax.random.normal(k2, (c,), jnp.float32)
    mean = 0.1 * jax.random.normal(k3, (c,), jnp.float32)
    var = jnp.abs(jax.random.normal(k4, (c,), jnp.float32)) + 0.5
    scale = gamma * jax.lax.rsqrt(var + eps)
    shift = beta - mean * scale
    return scale, shift


def make_params(key, c_in=3, c_stem=64, mid=32, groups=4, c_out=128, n_classes=16):
    ks = jax.random.split(key, 16)
    cg = mid // groups
    p = {"groups": groups}

    def fold(w_mat, scale):                      # scale folded into weight cols
        return (w_mat * scale[None, :]).astype(jnp.bfloat16)

    # Stem conv (bias=False in ResNeXt) + BN
    w_stem = conv_weight_to_matmul(
        0.05 * jax.random.normal(ks[0], (c_stem, c_in, 7, 7, 7), jnp.float32))
    s_stem, b_stem = folded_bn(ks[1], c_stem)
    p["w_stem"], p["sh_stem"] = fold(w_stem, s_stem), b_stem

    # Bottleneck conv1 1x1x1 + BN
    w1 = conv_weight_to_matmul(
        0.05 * jax.random.normal(ks[2], (mid, c_stem, 1, 1, 1), jnp.float32))
    s1, b1 = folded_bn(ks[3], mid)
    p["w1"], p["sh1"] = fold(w1, s1), b1

    # Bottleneck conv2 3x3x3 grouped (cardinality=groups), expressed as ONE
    # block-diagonal weight so the grouped conv is a single lane-dense matmul.
    w2_full = jnp.zeros((mid, mid, 3, 3, 3), jnp.float32)
    for g in range(groups):
        wg = 0.05 * jax.random.normal(ks[4 + g], (cg, cg, 3, 3, 3), jnp.float32)
        w2_full = w2_full.at[g * cg:(g + 1) * cg, g * cg:(g + 1) * cg].set(wg)
    s2, b2 = folded_bn(ks[8], mid)
    p["w2"], p["sh2"] = fold(conv_weight_to_matmul(w2_full), s2), b2

    # Bottleneck conv3 1x1x1 + BN, and downsample (shortcut B) 1x1x1 + BN.
    # Their shifts are merged since both feed the same residual add.
    w3 = conv_weight_to_matmul(
        0.05 * jax.random.normal(ks[9], (c_out, mid, 1, 1, 1), jnp.float32))
    s3, b3 = folded_bn(ks[10], c_out)
    w_ds = conv_weight_to_matmul(
        0.05 * jax.random.normal(ks[11], (c_out, c_stem, 1, 1, 1), jnp.float32))
    s_ds, b_ds = folded_bn(ks[12], c_out)
    p["w3"] = fold(w3, s3)
    p["w_ds"] = fold(w_ds, s_ds)
    p["sh3ds"] = b3 + b_ds

    # fc: Linear(c_out, n_classes)  (the detached `self.fc`)
    p["w_fc"] = jnp.transpose(
        0.05 * jax.random.normal(ks[13], (n_classes, c_out), jnp.float32))
    p["b_fc"] = 0.05 * jax.random.normal(ks[14], (n_classes,), jnp.float32)
    return p


# ----------------------------------------------------------------------------
# Forward pass == ActionClassifier.forward: fc(features(vids).view(B, -1))
# ----------------------------------------------------------------------------
def action_classifier_forward(vids, params):
    # vids: (B, 3, T, H, W) NCDHW -> NDHWC, bf16 activations (f32 accumulation
    # inside every kernel).
    x = jnp.transpose(vids, (0, 2, 3, 4, 1)).astype(jnp.bfloat16)

    # --- stem: Conv3d(3->64, 7x7x7, stride(1,2,2), pad 3) + BN + ReLU ---
    patches, (B, To, Ho, Wo) = im2col_3d(x, (7, 7, 7), (1, 2, 2), (3, 3, 3))
    y = matmul_bias_act(patches, params["w_stem"], params["sh_stem"], relu=True)
    x = y.reshape(B, To, Ho, Wo, -1)

    # --- MaxPool3d(3, stride 2, pad 1) --- (windowing glue)
    x = maxpool3d(x)
    B, T, H, W, C = x.shape
    S = T * H * W
    xf = x.reshape(B * S, C)

    # --- ResNeXt bottleneck, conv1 1x1x1 + BN + ReLU ---
    h1 = matmul_bias_act(xf, params["w1"], params["sh1"], relu=True)
    mid = h1.shape[-1]
    h1 = h1.reshape(B, T, H, W, mid)

    # --- grouped 3x3x3 conv + BN + ReLU: single pallas_call (block-diag W) ---
    patches2, _ = im2col_3d(h1, (3, 3, 3), (1, 1, 1), (1, 1, 1))
    h2 = matmul_bias_act(patches2, params["w2"], params["sh2"], relu=True)

    # --- conv3+BN, downsample+BN, residual add, ReLU, global avg pool, fc:
    #     all fused in one kernel; returns logits directly ---
    logits = bottleneck_tail_pool_fc(
        h2.reshape(B, S, mid), xf.reshape(B, S, C),
        params["w3"], params["w_ds"], params["sh3ds"],
        params["w_fc"], params["b_fc"])
    return logits


if __name__ == "__main__":
    key = jax.random.PRNGKey(0)
    k_data, k_params = jax.random.split(key)

    # small shapes: batch=2, channels=3, duration=8, sample_size=16
    vids = jax.random.normal(k_data, (2, 3, 8, 16, 16), jnp.float32)
    params = make_params(k_params)

    logits = action_classifier_forward(vids, params)
    jax.block_until_ready(logits)
    assert logits.shape == (2, 16) and logits.dtype == jnp.float32
    print("KERNEL_OK")
</pallas_src>

<mosaic_0001>
module attributes {stable_mosaic.version = 11 : i64} {
  func.func @kernel(%arg0: i32, %arg1: i32, %arg2: memref<512x1029xbf16, #tpu.memory_space<vmem>>, %arg3: memref<1029x64xbf16, #tpu.memory_space<vmem>>, %arg4: memref<1x64xf32, #tpu.memory_space<vmem>>, %arg5: memref<512x64xbf16, #tpu.memory_space<vmem>>, %arg6: memref<512x64xf32, #tpu.memory_space<vmem>>) attributes {dimension_semantics = [#tpu.dimension_semantics<parallel>, #tpu.dimension_semantics<arbitrary>], iteration_bounds = array<i64: 2, 1>, scalar_prefetch = 0 : i64, scratch_operands = 1 : i64, tpu.core_type = #tpu.core_type<tc>, window_params = [{transform_indices = @transform_0, window_bounds = array<i64: 512, 1029>}, {transform_indices = @transform_1, window_bounds = array<i64: 1029, 64>}, {pipeline_mode = #tpu.pipeline_mode<synchronous>, transform_indices = @transform_2, window_bounds = array<i64: 1, 64>}, {transform_indices = @transform_3, window_bounds = array<i64: 512, 64>}]} {
    %c0_i32 = arith.constant 0 : i32
    %0 = arith.cmpi eq, %arg1, %c0_i32 : i32
    %1 = arith.extui %0 : i1 to i32
    %c0_i32_0 = arith.constant 0 : i32
    %2 = arith.cmpi ne, %1, %c0_i32_0 : i32
    scf.if %2 {
      %cst_10 = arith.constant 0.000000e+00 : f32
      %12 = vector.broadcast %cst_10 : f32 to vector<512x64xf32>
      %c0_11 = arith.constant 0 : index
      %c0_12 = arith.constant 0 : index
      %13 = vector.load %arg6[%c0_11, %c0_12] : memref<512x64xf32, #tpu.memory_space<vmem>>, vector<512x64xf32>
      tpu.vector_store %arg6[%c0_11, %c0_12], %12 {strides = array<i32>} : memref<512x64xf32, #tpu.memory_space<vmem>>, vector<512x64xf32>,
    } else {
    }
    %c0 = arith.constant 0 : index
    %c0_1 = arith.constant 0 : index
    %3 = vector.load %arg6[%c0, %c0_1] : memref<512x64xf32, #tpu.memory_space<vmem>>, vector<512x64xf32>
    %c0_2 = arith.constant 0 : index
    %c0_3 = arith.constant 0 : index
    %4 = vector.load %arg2[%c0_2, %c0_3] : memref<512x1029xbf16, #tpu.memory_space<vmem>>, vector<512x1029xbf16>
    %c0_4 = arith.constant 0 : index
    %c0_5 = arith.constant 0 : index
    %5 = vector.load %arg3[%c0_4, %c0_5] : memref<1029x64xbf16, #tpu.memory_space<vmem>>, vector<1029x64xbf16>
    %cst = arith.constant dense<0.000000e+00> : vector<512x64xf32>
    %6 = tpu.matmul %4, %5, %cst {dimension_numbers = #tpu.dot_dimension_numbers<[1], [0], [0], [1], [0, 0, 1, 1], [], []>} : vector<512x1029xbf16>, vector<1029x64xbf16>, vector<512x64xf32> -> vector<512x64xf32>
    %7 = arith.addf %3, %6 : vector<512x64xf32>
    %c0_6 = arith.constant 0 : index
    %c0_7 = arith.constant 0 : index
    %8 = vector.load %arg6[%c0_6, %c0_7] : memref<512x64xf32, #tpu.memory_space<vmem>>, vector<512x64xf32>
    tpu.vector_store %arg6[%c0_6, %c0_7], %7 {strides = array<i32>} : memref<512x64xf32, #tpu.memory_space<vmem>>, vector<512x64xf32>,
    %c0_i32_8 = arith.constant 0 : i32
    %9 = arith.cmpi eq, %arg1, %c0_i32_8 : i32
    %10 = arith.extui %9 : i1 to i32
    %c0_i32_9 = arith.constant 0 : i32
    %11 = arith.cmpi ne, %10, %c0_i32_9 : i32
    scf.if %11 {
      %c0_10 = arith.constant 0 : index
      %c0_11 = arith.constant 0 : index
      %12 = vector.load %arg6[%c0_10, %c0_11] : memref<512x64xf32, #tpu.memory_space<vmem>>, vector<512x64xf32>
      %c0_12 = arith.constant 0 : index
      %c0_13 = arith.constant 0 : index
      %13 = vector.load %arg4[%c0_12, %c0_13] : memref<1x64xf32, #tpu.memory_space<vmem>>, vector<1x64xf32>
      %14 = vector.broadcast %13 : vector<1x64xf32> to vector<512x64xf32>
      %15 = arith.addf %12, %14 : vector<512x64xf32>
      %cst_14 = arith.constant 0.000000e+00 : f32
      %16 = vector.broadcast %cst_14 : f32 to vector<512x64xf32>
      %17 = arith.maximumf %15, %16 : vector<512x64xf32>
      %18 = arith.truncf %17 : vector<512x64xf32> to vector<512x64xbf16>
      %c0_15 = arith.constant 0 : index
      %c0_16 = arith.constant 0 : index
      %19 = vector.load %arg5[%c0_15, %c0_16] : memref<512x64xbf16, #tpu.memory_space<vmem>>, vector<512x64xbf16>
      tpu.vector_store %arg5[%c0_15, %c0_16], %18 {strides = array<i32>} : memref<512x64xbf16, #tpu.memory_space<vmem>>, vector<512x64xbf16>,
    } else {
    }
    return
  }
  func.func @transform_0(%arg0: i32, %arg1: i32) -> (i32, i32) {
    %c0_i32 = arith.constant 0 : i32
    return %arg0, %arg1 : i32, i32
  }
  func.func @transform_1(%arg0: i32, %arg1: i32) -> (i32, i32) {
    %c0_i32 = arith.constant 0 : i32
    %c0_i32_0 = arith.constant 0 : i32
    return %arg1, %c0_i32 : i32, i32
  }
  func.func @transform_2(%arg0: i32, %arg1: i32) -> (i32, i32) {
    %c0_i32 = arith.constant 0 : i32
    %c0_i32_0 = arith.constant 0 : i32
    %c0_i32_1 = arith.constant 0 : i32
    return %c0_i32, %c0_i32_0 : i32, i32
  }
  func.func @transform_3(%arg0: i32, %arg1: i32) -> (i32, i32) {
    %c0_i32 = arith.constant 0 : i32
    %c0_i32_0 = arith.constant 0 : i32
    return %arg0, %c0_i32 : i32, i32
  }
}

</mosaic_0001>

<llo_original>
// kernel: tpu_custom_call.1
$region0: #{tpu_custom_call.1}
  #allocation0 [shape = 'u32[]', space=smem, size = 0x4, offset = 0x4, fixed_abs, tag = 'smem constant byte address 0x4 - core index']
  #allocation1 [shape = 'u32[144,128]{1,0:T(1,128)}', space=vmem, size = 0x12000, scoped, tag = 'internal scratch']
  #allocation2 [shape = 'f32[512,64]{1,0:T(8,128)}', space=vmem, size = 0x40000, scoped, tag = 'scratch operand']
  %s0 = inlined_call_operand.hbm [shape: bf16[1024,1029], index: 0, kind: input, shape index: {}]
  %s1 = inlined_call_operand.hbm [shape: bf16[1029,64], index: 1, kind: input, shape index: {}]
  %s2 = inlined_call_operand.hbm [shape: f32[1,64], index: 2, kind: input, shape index: {}]
  %s3 = inlined_call_operand.hbm [shape: bf16[1024,64], index: 3, kind: output, shape index: {}]
  %s4 = sld [smem:[#allocation0]]
  $region65: #{tpu_custom_call.1} parent=0
    _
  %s6 = ssub.s32 1, %s4
  %s7 = scalar_select 0, %s6, %s4
  $region1: #{tpu_custom_call.1} parent=0
    #allocation3 [shape = 'u8[2359296]{0}', space=vmem, size = 0x240000, scoped, tag = 'input window, operand 0']
    #allocation4 [shape = 's32[2]{0}', space=sflag, size = 0x8, scoped, tag = 'scoped memory for tpu_custom_call.1']
    #allocation5 [shape = 's32[2]{0}', space=sflag, size = 0x8, scoped, tag = 'scoped memory for tpu_custom_call.1']
    #allocation6 [shape = 'u8[264192]{0}', space=vmem, size = 0x40800, scoped, tag = 'input window, operand 1, single buffered']
    #allocation7 [shape = 's32[1]{0}', space=sflag, size = 0x4, scoped, tag = 'scoped memory for tpu_custom_call.1']
    #allocation8 [shape = 'u8[512]{0}', space=vmem, size = 0x400, scoped, tag = 'input window, operand 2, single buffered']
    #allocation9 [shape = 'u8[262144]{0}', space=vmem, size = 0x40000, scoped, tag = 'output window, operand 0']
    %8 = vsyncpa [#allocation4], 0
    %s9 = scalar_lea.sflag [#allocation4], 1
    %10 = vsyncpa %s9, 0
    %11 = vsyncpa [#allocation7], 0
    %12 = vsyncpa [#allocation5], 0
    %s13 = scalar_lea.sflag [#allocation5], 1
    %14 = vsyncpa %s13, 0
    loop: start=0, step=1, limit=4
    $region2: #{tpu_custom_call.1} parent=1 // loop_pre_header
      _
    $region3: #{tpu_custom_call.1} parent=1 // loop_header
      %s16 = sphi 0, %s20
      %p17 = scmp.ge.s32.totalorder %s16, 4
      %s23 = sphi 0, %s35
      %s24 = sphi 0, %s31
      %s25 = sphi 0, %s23
      %s26 = sphi 0, %s24
      %s27 = sphi 0, %s25
      %s28 = sphi 0, %s26
      %s40 = sphi 0, %s42
      %s43 = sphi 0, %s40
      %s44 = sphi 0, %s43
      %s60 = sphi 0, %s44
      %s66 = sphi 0, %s68
      %s69 = sphi 0, %s66
      %s70 = sphi 0, %s69
      %s86 = sphi 0, %s70
      %s90 = sphi 0, %s90
      %s92 = sphi 0, %s90
      %s93 = sphi 0, %s92
      %s107 = sphi 0, %s93
      %s113 = sphi 0, %s115
      %s116 = sphi 0, %s113
      %s117 = sphi 0, %s116
      %s133 = sphi 0, %s117
    $region4: #{tpu_custom_call.1} parent=1 // loop_header_branch
      %19 = sbr.rel (%p17) target = $region8
    $region5: #{tpu_custom_call.1} parent=1 // loop_body
      %s21 = ssub.s32 %s16, 1
      %s22 = ssub.s32 %s16, 2
      %s29 = sadd.s32 1, %s24
      %p30 = scmp.ge.s32.totalorder %s29, 1
      %s31 = scalar_select %p30, 0, %s29
      %s32 = sadd.s32 1, %s23
      %s33 = scalar_select %p30, %s32, %s23
      %p34 = scmp.ge.s32.totalorder %s33, 2
      %s35 = scalar_select %p34, 0, %s33
      %s36 = ssub.s32 %s23, %s35
      %s37 = ssub.s32 %s24, %s31
      %s38 = sor.u32 %s36, %s37
      %p39 = scmp.eq.s32.totalorder %s38, 0
      %s41 = sadd.s32 %s40, 1
      %s42 = scalar_select %p39, %s40, %s41
      %p45 = pneg %p39
      %p46 = scmp.eq.s32.totalorder %s16, 1
      %p47 = por %p45, %p46
      %p48 = scmp.ne.s32.totalorder %s40, %s43
      %p49 = scmp.eq.s32.totalorder %s16, 0
      %p50 = por %p48, %p49
      %p51 = scmp.ne.s32.totalorder %s40, %s43
      %p52 = scmp.eq.s32.totalorder %s21, 1
      %p53 = por %p51, %p52
      %p54 = scmp.ne.s32.totalorder %s43, %s44
      %p55 = scmp.eq.s32.totalorder %s21, 0
      %p56 = por %p54, %p55
      %p57 = scmp.ne.s32.totalorder %s43, %s44
      %p58 = scmp.eq.s32.totalorder %s22, 1
      %p59 = por %p57, %p58
      %p61 = scmp.ne.s32.totalorder %s44, %s60
      %p62 = scmp.eq.s32.totalorder %s22, 0
      %p63 = por %p61, %p62
      %s64 = ssub.s32 %s24, %s31
      %p65 = scmp.eq.s32.totalorder %s64, 0
      %s67 = sadd.s32 %s66, 1
      %s68 = scalar_select %p65, %s66, %s67
      %p71 = pneg %p65
      %p72 = scmp.eq.s32.totalorder %s16, 1
      %p73 = por %p71, %p72
      %p74 = scmp.ne.s32.totalorder %s66, %s69
      %p75 = scmp.eq.s32.totalorder %s16, 0
      %p76 = por %p74, %p75
      %p77 = scmp.ne.s32.totalorder %s66, %s69
      %p78 = scmp.eq.s32.totalorder %s21, 1
      %p79 = por %p77, %p78
      %p80 = scmp.ne.s32.totalorder %s69, %s70
      %p81 = scmp.eq.s32.totalorder %s21, 0
      %p82 = por %p80, %p81
      %p83 = scmp.ne.s32.totalorder %s69, %s70
      %p84 = scmp.eq.s32.totalorder %s22, 1
      %p85 = por %p83, %p84
      %p87 = scmp.ne.s32.totalorder %s70, %s86
      %p88 = scmp.eq.s32.totalorder %s22, 0
      %p89 = por %p87, %p88
      %s91 = sadd.s32 %s90, 1
      %p94 = scmp.eq.s32.totalorder %s16, 1
      %p95 = scmp.ne.s32.totalorder %s90, %s92
      %p96 = scmp.eq.s32.totalorder %s16, 0
      %p97 = por %p95, %p96
      %p98 = scmp.ne.s32.totalorder %s90, %s92
      %p99 = scmp.eq.s32.totalorder %s21, 1
      %p100 = por %p98, %p99
      %p101 = scmp.ne.s32.totalorder %s92, %s93
      %p102 = scmp.eq.s32.totalorder %s21, 0
      %p103 = por %p101, %p102
      %p104 = scmp.ne.s32.totalorder %s92, %s93
      %p105 = scmp.eq.s32.totalorder %s22, 1
      %p106 = por %p104, %p105
      %p108 = scmp.ne.s32.totalorder %s93, %s107
      %p109 = scmp.eq.s32.totalorder %s22, 0
      %p110 = por %p108, %p109
      %s111 = ssub.s32 %s23, %s35
      %p112 = scmp.eq.s32.totalorder %s111, 0
      %s114 = sadd.s32 %s113, 1
      %s115 = scalar_select %p112, %s113, %s114
      %p118 = pneg %p112
      %p119 = scmp.eq.s32.totalorder %s16, 1
      %p120 = por %p118, %p119
      %p121 = scmp.ne.s32.totalorder %s113, %s116
      %p122 = scmp.eq.s32.totalorder %s16, 0
      %p123 = por %p121, %p122
      %p124 = scmp.ne.s32.totalorder %s113, %s116
      %p125 = scmp.eq.s32.totalorder %s21, 1
      %p126 = por %p124, %p125
      %p127 = scmp.ne.s32.totalorder %s116, %s117
      %p128 = scmp.eq.s32.totalorder %s21, 0
      %p129 = por %p127, %p128
      %p130 = scmp.ne.s32.totalorder %s116, %s117
      %p131 = scmp.eq.s32.totalorder %s22, 1
      %p132 = por %p130, %p131
      %p134 = scmp.ne.s32.totalorder %s117, %s133
      %p135 = scmp.eq.s32.totalorder %s22, 0
      %p136 = por %p134, %p135
      %p137 = scmp.le.s32.totalorder 1, %s16
      %p138 = scmp.lt.s32.totalorder %s16, 3
      %p139 = pnand %p137, %p138
      %p140 = pneg %p139
      // Predicated region
      $region9: #{tpu_custom_call.1} parent=5 // pred_check
        _
      $region10: #{tpu_custom_call.1} parent=5 // pred_check_branch
        %142 = sbr.rel (%p139) target = $region12
      $region11: #{tpu_custom_call.1} parent=5 // pred_region
        %s143 = ssub.s32 %s16, 1
        // Predicated region
        $region13: #{tpu_custom_call.1} parent=11 // pred_check
          %p144 = pneg %p82
        $region14: #{tpu_custom_call.1} parent=11 // pred_check_branch
          %146 = sbr.rel (%p144) target = $region16
        $region15: #{tpu_custom_call.1} parent=11 // pred_region
          %s147 = smul.u32 129, %s26
          %s149 = ssub.s32 8256, 8256
          %150 = vsyncadd [#allocation7], %s149
          %s151 = smul.addr %s147, 64
          %s152 = scalar_lea.hbm %s1, %s151
          %s153 = sshll.u32 [#allocation6], 4
          %s154 = int_to_ptr.vmem [resolvable:$true] %s153
          %159 = dma.hbm_to_vmem [thread:$0]  %s152, 8256, %s154, [#allocation7], 64, 64, 4
        $region16: #{tpu_custom_call.1} parent=11 // pred_fallthru
          _
        // Predicated region
        $region17: #{tpu_custom_call.1} parent=11 // pred_check
          %p160 = pneg %p103
        $region18: #{tpu_custom_call.1} parent=11 // pred_check_branch
          %162 = sbr.rel (%p160) target = $region20
        $region19: #{tpu_custom_call.1} parent=11 // pred_region
          %s164 = ssub.s32 16, 16
          %165 = vsyncadd [#allocation7], %s164
          %s167 = sshll.u32 [#allocation8], 4
          %s168 = int_to_ptr.vmem [resolvable:$true] %s167
          %170 = dma.hbm_to_vmem [thread:$0]  %s2, 16, %s168, [#allocation7]
        $region20: #{tpu_custom_call.1} parent=11 // pred_fallthru
          _
      $region12: #{tpu_custom_call.1} parent=5 // pred_fallthru
        _
      %p171 = scmp.lt.s32.totalorder %s16, 2
      // Predicated region
      $region21: #{tpu_custom_call.1} parent=5 // pred_check
        %p172 = pneg %p171
      $region22: #{tpu_custom_call.1} parent=5 // pred_check_branch
        %174 = sbr.rel (%p172) target = $region24
      $region23: #{tpu_custom_call.1} parent=5 // pred_region
        // Predicated region
        $region25: #{tpu_custom_call.1} parent=23 // pred_check
          %p175 = pneg %p50
        $region26: #{tpu_custom_call.1} parent=23 // pred_check_branch
          %177 = sbr.rel (%p175) target = $region28
        $region27: #{tpu_custom_call.1} parent=23 // pred_region
          %s178 = sand.u32 %s40, 1
          %s179 = scalar_lea.sflag [#allocation4], %s178
          %s180 = sand.u32 %s40, 1
          %s181 = smul.addr %s180, 2304
          %s182 = scalar_lea.vmem [#allocation3], %s181
          %s183 = smul.u32 64, %s23
          %s184 = smul.u32 9, %s24
          %s186 = ssub.s32 36864, 36864
          %187 = vsyncadd %s179, %s186
          %s188 = smul.addr %s183, 9
          %s189 = sadd.s32 %s184, %s188
          %s190 = smul.addr %s189, 64
          %s191 = scalar_lea.hbm %s0, %s190
          %s192 = sshll.u32 %s182, 4
          %s193 = int_to_ptr.vmem [resolvable:$true] %s192
          %198 = dma.hbm_to_vmem [thread:$0]  %s191, 36864, %s193, %s179, 576, 576, 36
        $region28: #{tpu_custom_call.1} parent=23 // pred_fallthru
          _
      $region24: #{tpu_custom_call.1} parent=5 // pred_fallthru
        _
      %p199 = scmp.le.s32.totalorder 1, %s16
      %p200 = scmp.lt.s32.totalorder %s16, 3
      %p201 = pnand %p199, %p200
      %p202 = pneg %p201
      // Predicated region
      $region29: #{tpu_custom_call.1} parent=5 // pred_check
        _
      $region30: #{tpu_custom_call.1} parent=5 // pred_check_branch
        %204 = sbr.rel (%p201) target = $region32
      $region31: #{tpu_custom_call.1} parent=5 // pred_region
        %s205 = ssub.s32 %s16, 1
        %s206 = sand.u32 %s43, 1
        %s207 = scalar_lea.sflag [#allocation4], %s206
        %s208 = sand.u32 %s43, 1
        %s209 = smul.addr %s208, 2304
        %s210 = scalar_lea.vmem [#allocation3], %s209
        // Predicated region
        $region33: #{tpu_custom_call.1} parent=31 // pred_check
          %p211 = pneg %p56
        $region34: #{tpu_custom_call.1} parent=31 // pred_check_branch
          %213 = sbr.rel (%p211) target = $region36
        $region35: #{tpu_custom_call.1} parent=31 // pred_region
          %214 = dma.done %s207, 36864
        $region36: #{tpu_custom_call.1} parent=31 // pred_fallthru
          _
        // Predicated region
        $region37: #{tpu_custom_call.1} parent=31 // pred_check
          %p215 = pneg %p82
        $region38: #{tpu_custom_call.1} parent=31 // pred_check_branch
          %217 = sbr.rel (%p215) target = $region40
        $region39: #{tpu_custom_call.1} parent=31 // pred_region
          %218 = dma.done [#allocation7], 8256
        $region40: #{tpu_custom_call.1} parent=31 // pred_fallthru
          _
        // Predicated region
        $region41: #{tpu_custom_call.1} parent=31 // pred_check
          %p219 = pneg %p103
        $region42: #{tpu_custom_call.1} parent=31 // pred_check_branch
          %221 = sbr.rel (%p219) target = $region44
        $region43: #{tpu_custom_call.1} parent=31 // pred_region
          %222 = dma.done [#allocation7], 16
        $region44: #{tpu_custom_call.1} parent=31 // pred_fallthru
          _
        %s223 = sand.u32 %s43, 1
        %s224 = scalar_lea.sflag [#allocation4], %s223
        %s225 = sand.u32 %s43, 1
        %s226 = smul.addr %s225, 2304
        %s227 = scalar_lea.vmem [#allocation3], %s226
        %p228 = pneg %p56
        %p229 = pneg %p53
        %p230 = pneg %p82
        %p231 = pneg %p79
        %p232 = pneg %p103
        %p233 = pneg %p100
        %p234 = pneg %p129
        %p235 = pneg %p126
        %s236 = sand.u32 %s116, 1
        %s237 = scalar_lea.sflag [#allocation5], %s236
        %s238 = sand.u32 %s116, 1
        %s239 = smul.addr %s238, 256
        %s240 = scalar_lea.vmem [#allocation9], %s239
        %s241 = smul.u32 64, %s25
        %s242 = smul.u32 9, %s26
        %s243 = smul.u32 129, %s26
        %s244 = smul.u32 64, %s25
        %p246 = scmp.eq.s32.totalorder %s26, 0
        // Predicated region
        $region45: #{tpu_custom_call.1} parent=31 // pred_check
          %p247 = pneg %p246
        $region46: #{tpu_custom_call.1} parent=31 // pred_check_branch
          %249 = sbr.rel (%p247) target = $region48
        $region47: #{tpu_custom_call.1} parent=31 // pred_region
          %vm250 = vcmask 523264
          %251 = vst.msk [vmem:[#allocation2] sm:$0xff] %vm250, 0.0
          %252 = vst.msk [vmem:[#allocation2 + $0x8] sm:$0xff] %vm250, 0.0
          %253 = vst.msk [vmem:[#allocation2 + $0x10] sm:$0xff] %vm250, 0.0
          %254 = vst.msk [vmem:[#allocation2 + $0x18] sm:$0xff] %vm250, 0.0
          %255 = vst.msk [vmem:[#allocation2 + $0x20] sm:$0xff] %vm250, 0.0
          %256 = vst.msk [vmem:[#allocation2 + $0x28] sm:$0xff] %vm250, 0.0
          %257 = vst.msk [vmem:[#allocation2 + $0x30] sm:$0xff] %vm250, 0.0
          %258 = vst.msk [vmem:[#allocation2 + $0x38] sm:$0xff] %vm250, 0.0
          %259 = vst.msk [vmem:[#allocation2 + $0x40] sm:$0xff] %vm250, 0.0
          %260 = vst.msk [vmem:[#allocation2 + $0x48] sm:$0xff] %vm250, 0.0
          %261 = vst.msk [vmem:[#allocation2 + $0x50] sm:$0xff] %vm250, 0.0
          %262 = vst.msk [vmem:[#allocation2 + $0x58] sm:$0xff] %vm250, 0.0
          %263 = vst.msk [vmem:[#allocation2 + $0x60] sm:$0xff] %vm250, 0.0
          %264 = vst.msk [vmem:[#allocation2 + $0x68] sm:$0xff] %vm250, 0.0
          %265 = vst.msk [vmem:[#allocation2 + $0x70] sm:$0xff] %vm250, 0.0
          %266 = vst.msk [vmem:[#allocation2 + $0x78] sm:$0xff] %vm250, 0.0
          %267 = vst.msk [vmem:[#allocation2 + $0x80] sm:$0xff] %vm250, 0.0
          %268 = vst.msk [vmem:[#allocation2 + $0x88] sm:$0xff] %vm250, 0.0
          %269 = vst.msk [vmem:[#allocation2 + $0x90] sm:$0xff] %vm250, 0.0
          %270 = vst.msk [vmem:[#allocation2 + $0x98] sm:$0xff] %vm250, 0.0
          %271 = vst.msk [vmem:[#allocation2 + $0xa0] sm:$0xff] %vm250, 0.0
          %272 = vst.msk [vmem:[#allocation2 + $0xa8] sm:$0xff] %vm250, 0.0
          %273 = vst.msk [vmem:[#allocation2 + $0xb0] sm:$0xff] %vm250, 0.0
          %274 = vst.msk [vmem:[#allocation2 + $0xb8] sm:$0xff] %vm250, 0.0
          %275 = vst.msk [vmem:[#allocation2 + $0xc0] sm:$0xff] %vm250, 0.0
          %276 = vst.msk [vmem:[#allocation2 + $0xc8] sm:$0xff] %vm250, 0.0
          %277 = vst.msk [vmem:[#allocation2 + $0xd0] sm:$0xff] %vm250, 0.0
          %278 = vst.msk [vmem:[#allocation2 + $0xd8] sm:$0xff] %vm250, 0.0
          %279 = vst.msk [vmem:[#allocation2 + $0xe0] sm:$0xff] %vm250, 0.0
          %280 = vst.msk [vmem:[#allocation2 + $0xe8] sm:$0xff] %vm250, 0.0
          %281 = vst.msk [vmem:[#allocation2 + $0xf0] sm:$0xff] %vm250, 0.0
          %282 = vst.msk [vmem:[#allocation2 + $0xf8] sm:$0xff] %vm250, 0.0
          %283 = vst.msk [vmem:[#allocation2 + $0x100] sm:$0xff] %vm250, 0.0
          %284 = vst.msk [vmem:[#allocation2 + $0x108] sm:$0xff] %vm250, 0.0
          %285 = vst.msk [vmem:[#allocation2 + $0x110] sm:$0xff] %vm250, 0.0
          %286 = vst.msk [vmem:[#allocation2 + $0x118] sm:$0xff] %vm250, 0.0
          %287 = vst.msk [vmem:[#allocation2 + $0x120] sm:$0xff] %vm250, 0.0
          %288 = vst.msk [vmem:[#allocation2 + $0x128] sm:$0xff] %vm250, 0.0
          %289 = vst.msk [vmem:[#allocation2 + $0x130] sm:$0xff] %vm250, 0.0
          %290 = vst.msk [vmem:[#allocation2 + $0x138] sm:$0xff] %vm250, 0.0
          %291 = vst.msk [vmem:[#allocation2 + $0x140] sm:$0xff] %vm250, 0.0
          %292 = vst.msk [vmem:[#allocation2 + $0x148] sm:$0xff] %vm250, 0.0
          %293 = vst.msk [vmem:[#allocation2 + $0x150] sm:$0xff] %vm250, 0.0
          %294 = vst.msk [vmem:[#allocation2 + $0x158] sm:$0xff] %vm250, 0.0
          %295 = vst.msk [vmem:[#allocation2 + $0x160] sm:$0xff] %vm250, 0.0
          %296 = vst.msk [vmem:[#allocation2 + $0x168] sm:$0xff] %vm250, 0.0
          %297 = vst.msk [vmem:[#allocation2 + $0x170] sm:$0xff] %vm250, 0.0
          %298 = vst.msk [vmem:[#allocation2 + $0x178] sm:$0xff] %vm250, 0.0
          %299 = vst.msk [vmem:[#allocation2 + $0x180] sm:$0xff] %vm250, 0.0
          %300 = vst.msk [vmem:[#allocation2 + $0x188] sm:$0xff] %vm250, 0.0
          %301 = vst.msk [vmem:[#allocation2 + $0x190] sm:$0xff] %vm250, 0.0
          %302 = vst.msk [vmem:[#allocation2 + $0x198] sm:$0xff] %vm250, 0.0
          %303 = vst.msk [vmem:[#allocation2 + $0x1a0] sm:$0xff] %vm250, 0.0
          %304 = vst.msk [vmem:[#allocation2 + $0x1a8] sm:$0xff] %vm250, 0.0
          %305 = vst.msk [vmem:[#allocation2 + $0x1b0] sm:$0xff] %vm250, 0.0
          %306 = vst.msk [vmem:[#allocation2 + $0x1b8] sm:$0xff] %vm250, 0.0
          %307 = vst.msk [vmem:[#allocation2 + $0x1c0] sm:$0xff] %vm250, 0.0
          %308 = vst.msk [vmem:[#allocation2 + $0x1c8] sm:$0xff] %vm250, 0.0
          %309 = vst.msk [vmem:[#allocation2 + $0x1d0] sm:$0xff] %vm250, 0.0
          %310 = vst.msk [vmem:[#allocation2 + $0x1d8] sm:$0xff] %vm250, 0.0
          %311 = vst.msk [vmem:[#allocation2 + $0x1e0] sm:$0xff] %vm250, 0.0
          %312 = vst.msk [vmem:[#allocation2 + $0x1e8] sm:$0xff] %vm250, 0.0
          %313 = vst.msk [vmem:[#allocation2 + $0x1f0] sm:$0xff] %vm250, 0.0
          %314 = vst.msk [vmem:[#allocation2 + $0x1f8] sm:$0xff] %vm250, 0.0
        $region48: #{tpu_custom_call.1} parent=31 // pred_fallthru
          _
        %v315 = vld [vmem:[#allocation2] sm:$0xff]
        %v316 = vld [vmem:[#allocation2 + $0x8] sm:$0xff]
        %v317 = vld [vmem:[#allocation2 + $0x10] sm:$0xff]
        %v318 = vld [vmem:[#allocation2 + $0x18] sm:$0xff]
        %v319 = vld [vmem:[#allocation2 + $0x20] sm:$0xff]
        %v320 = vld [vmem:[#allocation2 + $0x28] sm:$0xff]
        %v321 = vld [vmem:[#allocation2 + $0x30] sm:$0xff]
        %v322 = vld [vmem:[#allocation2 + $0x38] sm:$0xff]
        %v323 = vld [vmem:[#allocation2 + $0x40] sm:$0xff]
        %v324 = vld [vmem:[#allocation2 + $0x48] sm:$0xff]
        %v325 = vld [vmem:[#allocation2 + $0x50] sm:$0xff]
        %v326 = vld [vmem:[#allocation2 + $0x58] sm:$0xff]
        %v327 = vld [vmem:[#allocation2 + $0x60] sm:$0xff]
        %v328 = vld [vmem:[#allocation2 + $0x68] sm:$0xff]
        %v329 = vld [vmem:[#allocation2 + $0x70] sm:$0xff]
        %v330 = vld [vmem:[#allocation2 + $0x78] sm:$0xff]
        %v331 = vld [vmem:[#allocation2 + $0x80] sm:$0xff]
        %v332 = vld [vmem:[#allocation2 + $0x88] sm:$0xff]
        %v333 = vld [vmem:[#allocation2 + $0x90] sm:$0xff]
        %v334 = vld [vmem:[#allocation2 + $0x98] sm:$0xff]
        %v335 = vld [vmem:[#allocation2 + $0xa0] sm:$0xff]
        %v336 = vld [vmem:[#allocation2 + $0xa8] sm:$0xff]
        %v337 = vld [vmem:[#allocation2 + $0xb0] sm:$0xff]
        %v338 = vld [vmem:[#allocation2 + $0xb8] sm:$0xff]
        %v339 = vld [vmem:[#allocation2 + $0xc0] sm:$0xff]
        %v340 = vld [vmem:[#allocation2 + $0xc8] sm:$0xff]
        %v341 = vld [vmem:[#allocation2 + $0xd0] sm:$0xff]
        %v342 = vld [vmem:[#allocation2 + $0xd8] sm:$0xff]
        %v343 = vld [vmem:[#allocation2 + $0xe0] sm:$0xff]
        %v344 = vld [vmem:[#allocation2 + $0xe8] sm:$0xff]
        %v345 = vld [vmem:[#allocation2 + $0xf0] sm:$0xff]
        %v346 = vld [vmem:[#allocation2 + $0xf8] sm:$0xff]
        %v347 = vld [vmem:[#allocation2 + $0x100] sm:$0xff]
        %v348 = vld [vmem:[#allocation2 + $0x108] sm:$0xff]
        %v349 = vld [vmem:[#allocation2 + $0x110] sm:$0xff]
        %v350 = vld [vmem:[#allocation2 + $0x118] sm:$0xff]
        %v351 = vld [vmem:[#allocation2 + $0x120] sm:$0xff]
        %v352 = vld [vmem:[#allocation2 + $0x128] sm:$0xff]
        %v353 = vld [vmem:[#allocation2 + $0x130] sm:$0xff]
        %v354 = vld [vmem:[#allocation2 + $0x138] sm:$0xff]
        %v355 = vld [vmem:[#allocation2 + $0x140] sm:$0xff]
        %v356 = vld [vmem:[#allocation2 + $0x148] sm:$0xff]
        %v357 = vld [vmem:[#allocation2 + $0x150] sm:$0xff]
        %v358 = vld [vmem:[#allocation2 + $0x158] sm:$0xff]
        %v359 = vld [vmem:[#allocation2 + $0x160] sm:$0xff]
        %v360 = vld [vmem:[#allocation2 + $0x168] sm:$0xff]
        %v361 = vld [vmem:[#allocation2 + $0x170] sm:$0xff]
        %v362 = vld [vmem:[#allocation2 + $0x178] sm:$0xff]
        %v363 = vld [vmem:[#allocation2 + $0x180] sm:$0xff]
        %v364 = vld [vmem:[#allocation2 + $0x188] sm:$0xff]
        %v365 = vld [vmem:[#allocation2 + $0x190] sm:$0xff]
        %v366 = vld [vmem:[#allocation2 + $0x198] sm:$0xff]
        %v367 = vld [vmem:[#allocation2 + $0x1a0] sm:$0xff]
        %v368 = vld [vmem:[#allocation2 + $0x1a8] sm:$0xff]
        %v369 = vld [vmem:[#allocation2 + $0x1b0] sm:$0xff]
        %v370 = vld [vmem:[#allocation2 + $0x1b8] sm:$0xff]
        %v371 = vld [vmem:[#allocation2 + $0x1c0] sm:$0xff]
        %v372 = vld [vmem:[#allocation2 + $0x1c8] sm:$0xff]
        %v373 = vld [vmem:[#allocation2 + $0x1d0] sm:$0xff]
        %v374 = vld [vmem:[#allocation2 + $0x1d8] sm:$0xff]
        %v375 = vld [vmem:[#allocation2 + $0x1e0] sm:$0xff]
        %v376 = vld [vmem:[#allocation2 + $0x1e8] sm:$0xff]
        %v377 = vld [vmem:[#allocation2 + $0x1f0] sm:$0xff]
        %v378 = vld [vmem:[#allocation2 + $0x1f8] sm:$0xff]
        %v379 = vld [vmem:[%s210] sm:$0xff]
        %v380 = vld [vmem:[%s210 + $0x8] sm:$0xff]
        %v381 = vld [vmem:[%s210 + $0x10] sm:$0xff]
        %v382 = vld [vmem:[%s210 + $0x18] sm:$0xff]
        %v383 = vld [vmem:[%s210 + $0x20] sm:$0xf]
        %v384 = vld [vmem:[%s210 + $0x24] sm:$0xff]
        %v385 = vld [vmem:[%s210 + $0x2c] sm:$0xff]
        %v386 = vld [vmem:[%s210 + $0x34] sm:$0xff]
        %v387 = vld [vmem:[%s210 + $0x3c] sm:$0xff]
        %v388 = vld [vmem:[%s210 + $0x44] sm:$0xf]
        %v389 = vld [vmem:[%s210 + $0x48] sm:$0xff]
        %v390 = vld [vmem:[%s210 + $0x50] sm:$0xff]
        %v391 = vld [vmem:[%s210 + $0x58] sm:$0xff]
        %v392 = vld [vmem:[%s210 + $0x60] sm:$0xff]
        %v393 = vld [vmem:[%s210 + $0x68] sm:$0xf]
        %v394 = vld [vmem:[%s210 + $0x6c] sm:$0xff]
        %v395 = vld [vmem:[%s210 + $0x74] sm:$0xff]
        %v396 = vld [vmem:[%s210 + $0x7c] sm:$0xff]
        %v397 = vld [vmem:[%s210 + $0x84] sm:$0xff]
        %v398 = vld [vmem:[%s210 + $0x8c] sm:$0xf]
        %v399 = vld [vmem:[%s210 + $0x90] sm:$0xff]
        %v400 = vld [vmem:[%s210 + $0x98] sm:$0xff]
        %v401 = vld [vmem:[%s210 + $0xa0] sm:$0xff]
        %v402 = vld [vmem:[%s210 + $0xa8] sm:$0xff]
        %v403 = vld [vmem:[%s210 + $0xb0] sm:$0xf]
        %v404 = vld [vmem:[%s210 + $0xb4] sm:$0xff]
        %v405 = vld [vmem:[%s210 + $0xbc] sm:$0xff]
        %v406 = vld [vmem:[%s210 + $0xc4] sm:$0xff]
        %v407 = vld [vmem:[%s210 + $0xcc] sm:$0xff]
        %v408 = vld [vmem:[%s210 + $0xd4] sm:$0xf]
        %v409 = vld [vmem:[%s210 + $0xd8] sm:$0xff]
        %v410 = vld [vmem:[%s210 + $0xe0] sm:$0xff]
        %v411 = vld [vmem:[%s210 + $0xe8] sm:$0xff]
        %v412 = vld [vmem:[%s210 + $0xf0] sm:$0xff]
        %v413 = vld [vmem:[%s210 + $0xf8] sm:$0xf]
        %v414 = vld [vmem:[%s210 + $0xfc] sm:$0xff]
        %v415 = vld [vmem:[%s210 + $0x104] sm:$0xff]
        %v416 = vld [vmem:[%s210 + $0x10c] sm:$0xff]
        %v417 = vld [vmem:[%s210 + $0x114] sm:$0xff]
        %v418 = vld [vmem:[%s210 + $0x11c] sm:$0xf]
        %v419 = vld [vmem:[%s210 + $0x120] sm:$0xff]
        %v420 = vld [vmem:[%s210 + $0x128] sm:$0xff]
        %v421 = vld [vmem:[%s210 + $0x130] sm:$0xff]
        %v422 = vld [vmem:[%s210 + $0x138] sm:$0xff]
        %v423 = vld [vmem:[%s210 + $0x140] sm:$0xf]
        %v424 = vld [vmem:[%s210 + $0x144] sm:$0xff]
        %v425 = vld [vmem:[%s210 + $0x14c] sm:$0xff]
        %v426 = vld [vmem:[%s210 + $0x154] sm:$0xff]
        %v427 = vld [vmem:[%s210 + $0x15c] sm:$0xff]
        %v428 = vld [vmem:[%s210 + $0x164] sm:$0xf]
        %v429 = vld [vmem:[%s210 + $0x168] sm:$0xff]
        %v430 = vld [vmem:[%s210 + $0x170] sm:$0xff]
        %v431 = vld [vmem:[%s210 + $0x178] sm:$0xff]
        %v432 = vld [vmem:[%s210 + $0x180] sm:$0xff]
        %v433 = vld [vmem:[%s210 + $0x188] sm:$0xf]
        %v434 = vld [vmem:[%s210 + $0x18c] sm:$0xff]
        %v435 = vld [vmem:[%s210 + $0x194] sm:$0xff]
        %v436 = vld [vmem:[%s210 + $0x19c] sm:$0xff]
        %v437 = vld [vmem:[%s210 + $0x1a4] sm:$0xff]
        %v438 = vld [vmem:[%s210 + $0x1ac] sm:$0xf]
        %v439 = vld [vmem:[%s210 + $0x1b0] sm:$0xff]
        %v440 = vld [vmem:[%s210 + $0x1b8] sm:$0xff]
        %v441 = vld [vmem:[%s210 + $0x1c0] sm:$0xff]
        %v442 = vld [vmem:[%s210 + $0x1c8] sm:$0xff]
        %v443 = vld [vmem:[%s210 + $0x1d0] sm:$0xf]
        %v444 = vld [vmem:[%s210 + $0x1d4] sm:$0xff]
        %v445 = vld [vmem:[%s210 + $0x1dc] sm:$0xff]
        %v446 = vld [vmem:[%s210 + $0x1e4] sm:$0xff]
        %v447 = vld [vmem:[%s210 + $0x1ec] sm:$0xff]
        %v448 = vld [vmem:[%s210 + $0x1f4] sm:$0xf]
        %v449 = vld [vmem:[%s210 + $0x1f8] sm:$0xff]
        %v450 = vld [vmem:[%s210 + $0x200] sm:$0xff]
        %v451 = vld [vmem:[%s210 + $0x208] sm:$0xff]
        %v452 = vld [vmem:[%s210 + $0x210] sm:$0xff]
        %v453 = vld [vmem:[%s210 + $0x218] sm:$0xf]
        %v454 = vld [vmem:[%s210 + $0x21c] sm:$0xff]
        %v455 = vld [vmem:[%s210 + $0x224] sm:$0xff]
        %v456 = vld [vmem:[%s210 + $0x22c] sm:$0xff]
        %v457 = vld [vmem:[%s210 + $0x234] sm:$0xff]
        %v458 = vld [vmem:[%s210 + $0x23c] sm:$0xf]
        %v459 = vld [vmem:[%s210 + $0x240] sm:$0xff]
        %v460 = vld [vmem:[%s210 + $0x248] sm:$0xff]
        %v461 = vld [vmem:[%s210 + $0x250] sm:$0xff]
        %v462 = vld [vmem:[%s210 + $0x258] sm:$0xff]
        %v463 = vld [vmem:[%s210 + $0x260] sm:$0xf]
        %v464 = vld [vmem:[%s210 + $0x264] sm:$0xff]
        %v465 = vld [vmem:[%s210 + $0x26c] sm:$0xff]
        %v466 = vld [vmem:[%s210 + $0x274] sm:$0xff]
        %v467 = vld [vmem:[%s210 + $0x27c] sm:$0xff]
        %v468 = vld [vmem:[%s210 + $0x284] sm:$0xf]
        %v469 = vld [vmem:[%s210 + $0x288] sm:$0xff]
        %v470 = vld [vmem:[%s210 + $0x290] sm:$0xff]
        %v471 = vld [vmem:[%s210 + $0x298] sm:$0xff]
        %v472 = vld [vmem:[%s210 + $0x2a0] sm:$0xff]
        %v473 = vld [vmem:[%s210 + $0x2a8] sm:$0xf]
        %v474 = vld [vmem:[%s210 + $0x2ac] sm:$0xff]
        %v475 = vld [vmem:[%s210 + $0x2b4] sm:$0xff]
        %v476 = vld [vmem:[%s210 + $0x2bc] sm:$0xff]
        %v477 = vld [vmem:[%s210 + $0x2c4] sm:$0xff]
        %v478 = vld [vmem:[%s210 + $0x2cc] sm:$0xf]
        %v479 = vld [vmem:[%s210 + $0x2d0] sm:$0xff]
        %v480 = vld [vmem:[%s210 + $0x2d8] sm:$0xff]
        %v481 = vld [vmem:[%s210 + $0x2e0] sm:$0xff]
        %v482 = vld [vmem:[%s210 + $0x2e8] sm:$0xff]
        %v483 = vld [vmem:[%s210 + $0x2f0] sm:$0xf]
        %v484 = vld [vmem:[%s210 + $0x2f4] sm:$0xff]
        %v485 = vld [vmem:[%s210 + $0x2fc] sm:$0xff]
        %v486 = vld [vmem:[%s210 + $0x304] sm:$0xff]
        %v487 = vld [vmem:[%s210 + $0x30c] sm:$0xff]
        %v488 = vld [vmem:[%s210 + $0x314] sm:$0xf]
        %v489 = vld [vmem:[%s210 + $0x318] sm:$0xff]
        %v490 = vld [vmem:[%s210 + $0x320] sm:$0xff]
        %v491 = vld [vmem:[%s210 + $0x328] sm:$0xff]
        %v492 = vld [vmem:[%s210 + $0x330] sm:$0xff]
        %v493 = vld [vmem:[%s210 + $0x338] sm:$0xf]
        %v494 = vld [vmem:[%s210 + $0x33c] sm:$0xff]
        %v495 = vld [vmem:[%s210 + $0x344] sm:$0xff]
        %v496 = vld [vmem:[%s210 + $0x34c] sm:$0xff]
        %v497 = vld [vmem:[%s210 + $0x354] sm:$0xff]
        %v498 = vld [vmem:[%s210 + $0x35c] sm:$0xf]
        %v499 = vld [vmem:[%s210 + $0x360] sm:$0xff]
        %v500 = vld [vmem:[%s210 + $0x368] sm:$0xff]
        %v501 = vld [vmem:[%s210 + $0x370] sm:$0xff]
        %v502 = vld [vmem:[%s210 + $0x378] sm:$0xff]
        %v503 = vld [vmem:[%s210 + $0x380] sm:$0xf]
        %v504 = vld [vmem:[%s210 + $0x384] sm:$0xff]
        %v505 = vld [vmem:[%s210 + $0x38c] sm:$0xff]
        %v506 = vld [vmem:[%s210 + $0x394] sm:$0xff]
        %v507 = vld [vmem:[%s210 + $0x39c] sm:$0xff]
        %v508 = vld [vmem:[%s210 + $0x3a4] sm:$0xf]
        %v509 = vld [vmem:[%s210 + $0x3a8] sm:$0xff]
        %v510 = vld [vmem:[%s210 + $0x3b0] sm:$0xff]
        %v511 = vld [vmem:[%s210 + $0x3b8] sm:$0xff]
        %v512 = vld [vmem:[%s210 + $0x3c0] sm:$0xff]
        %v513 = vld [vmem:[%s210 + $0x3c8] sm:$0xf]
        %v514 = vld [vmem:[%s210 + $0x3cc] sm:$0xff]
        %v515 = vld [vmem:[%s210 + $0x3d4] sm:$0xff]
        %v516 = vld [vmem:[%s210 + $0x3dc] sm:$0xff]
        %v517 = vld [vmem:[%s210 + $0x3e4] sm:$0xff]
        %v518 = vld [vmem:[%s210 + $0x3ec] sm:$0xf]
        %v519 = vld [vmem:[%s210 + $0x3f0] sm:$0xff]
        %v520 = vld [vmem:[%s210 + $0x3f8] sm:$0xff]
        %v521 = vld [vmem:[%s210 + $0x400] sm:$0xff]
        %v522 = vld [vmem:[%s210 + $0x408] sm:$0xff]
        %v523 = vld [vmem:[%s210 + $0x410] sm:$0xf]
        %v524 = vld [vmem:[%s210 + $0x414] sm:$0xff]
        %v525 = vld [vmem:[%s210 + $0x41c] sm:$0xff]
        %v526 = vld [vmem:[%s210 + $0x424] sm:$0xff]
        %v527 = vld [vmem:[%s210 + $0x42c] sm:$0xff]
        %v528 = vld [vmem:[%s210 + $0x434] sm:$0xf]
        %v529 = vld [vmem:[%s210 + $0x438] sm:$0xff]
        %v530 = vld [vmem:[%s210 + $0x440] sm:$0xff]
        %v531 = vld [vmem:[%s210 + $0x448] sm:$0xff]
        %v532 = vld [vmem:[%s210 + $0x450] sm:$0xff]
        %v533 = vld [vmem:[%s210 + $0x458] sm:$0xf]
        %v534 = vld [vmem:[%s210 + $0x45c] sm:$0xff]
        %v535 = vld [vmem:[%s210 + $0x464] sm:$0xff]
        %v536 = vld [vmem:[%s210 + $0x46c] sm:$0xff]
        %v537 = vld [vmem:[%s210 + $0x474] sm:$0xff]
        %v538 = vld [vmem:[%s210 + $0x47c] sm:$0xf]
        %v539 = vld [vmem:[%s210 + $0x480] sm:$0xff]
        %v540 = vld [vmem:[%s210 + $0x488] sm:$0xff]
        %v541 = vld [vmem:[%s210 + $0x490] sm:$0xff]
        %v542 = vld [vmem:[%s210 + $0x498] sm:$0xff]
        %v543 = vld [vmem:[%s210 + $0x4a0] sm:$0xf]
        %v544 = vld [vmem:[%s210 + $0x4a4] sm:$0xff]
        %v545 = vld [vmem:[%s210 + $0x4ac] sm:$0xff]
        %v546 = vld [vmem:[%s210 + $0x4b4] sm:$0xff]
        %v547 = vld [vmem:[%s210 + $0x4bc] sm:$0xff]
        %v548 = vld [vmem:[%s210 + $0x4c4] sm:$0xf]
        %v549 = vld [vmem:[%s210 + $0x4c8] sm:$0xff]
        %v550 = vld [vmem:[%s210 + $0x4d0] sm:$0xff]
        %v551 = vld [vmem:[%s210 + $0x4d8] sm:$0xff]
        %v552 = vld [vmem:[%s210 + $0x4e0] sm:$0xff]
        %v553 = vld [vmem:[%s210 + $0x4e8] sm:$0xf]
        %v554 = vld [vmem:[%s210 + $0x4ec] sm:$0xff]
        %v555 = vld [vmem:[%s210 + $0x4f4] sm:$0xff]
        %v556 = vld [vmem:[%s210 + $0x4fc] sm:$0xff]
        %v557 = vld [vmem:[%s210 + $0x504] sm:$0xff]
        %v558 = vld [vmem:[%s210 + $0x50c] sm:$0xf]
        %v559 = vld [vmem:[%s210 + $0x510] sm:$0xff]
        %v560 = vld [vmem:[%s210 + $0x518] sm:$0xff]
        %v561 = vld [vmem:[%s210 + $0x520] sm:$0xff]
        %v562 = vld [vmem:[%s210 + $0x528] sm:$0xff]
        %v563 = vld [vmem:[%s210 + $0x530] sm:$0xf]
        %v564 = vld [vmem:[%s210 + $0x534] sm:$0xff]
        %v565 = vld [vmem:[%s210 + $0x53c] sm:$0xff]
        %v566 = vld [vmem:[%s210 + $0x544] sm:$0xff]
        %v567 = vld [vmem:[%s210 + $0x54c] sm:$0xff]
        %v568 = vld [vmem:[%s210 + $0x554] sm:$0xf]
        %v569 = vld [vmem:[%s210 + $0x558] sm:$0xff]
        %v570 = vld [vmem:[%s210 + $0x560] sm:$0xff]
        %v571 = vld [vmem:[%s210 + $0x568] sm:$0xff]
        %v572 = vld [vmem:[%s210 + $0x570] sm:$0xff]
        %v573 = vld [vmem:[%s210 + $0x578] sm:$0xf]
        %v574 = vld [vmem:[%s210 + $0x57c] sm:$0xff]
        %v575 = vld [vmem:[%s210 + $0x584] sm:$0xff]
        %v576 = vld [vmem:[%s210 + $0x58c] sm:$0xff]
        %v577 = vld [vmem:[%s210 + $0x594] sm:$0xff]
        %v578 = vld [vmem:[%s210 + $0x59c] sm:$0xf]
        %v579 = vld [vmem:[%s210 + $0x5a0] sm:$0xff]
        %v580 = vld [vmem:[%s210 + $0x5a8] sm:$0xff]
        %v581 = vld [vmem:[%s210 + $0x5b0] sm:$0xff]
        %v582 = vld [vmem:[%s210 + $0x5b8] sm:$0xff]
        %v583 = vld [vmem:[%s210 + $0x5c0] sm:$0xf]
        %v584 = vld [vmem:[%s210 + $0x5c4] sm:$0xff]
        %v585 = vld [vmem:[%s210 + $0x5cc] sm:$0xff]
        %v586 = vld [vmem:[%s210 + $0x5d4] sm:$0xff]
        %v587 = vld [vmem:[%s210 + $0x5dc] sm:$0xff]
        %v588 = vld [vmem:[%s210 + $0x5e4] sm:$0xf]
        %v589 = vld [vmem:[%s210 + $0x5e8] sm:$0xff]
        %v590 = vld [vmem:[%s210 + $0x5f0] sm:$0xff]
        %v591 = vld [vmem:[%s210 + $0x5f8] sm:$0xff]
        %v592 = vld [vmem:[%s210 + $0x600] sm:$0xff]
        %v593 = vld [vmem:[%s210 + $0x608] sm:$0xf]
        %v594 = vld [vmem:[%s210 + $0x60c] sm:$0xff]
        %v595 = vld [vmem:[%s210 + $0x614] sm:$0xff]
        %v596 = vld [vmem:[%s210 + $0x61c] sm:$0xff]
        %v597 = vld [vmem:[%s210 + $0x624] sm:$0xff]
        %v598 = vld [vmem:[%s210 + $0x62c] sm:$0xf]
        %v599 = vld [vmem:[%s210 + $0x630] sm:$0xff]
        %v600 = vld [vmem:[%s210 + $0x638] sm:$0xff]
        %v601 = vld [vmem:[%s210 + $0x640] sm:$0xff]
        %v602 = vld [vmem:[%s210 + $0x648] sm:$0xff]
        %v603 = vld [vmem:[%s210 + $0x650] sm:$0xf]
        %v604 = vld [vmem:[%s210 + $0x654] sm:$0xff]
        %v605 = vld [vmem:[%s210 + $0x65c] sm:$0xff]
        %v606 = vld [vmem:[%s210 + $0x664] sm:$0xff]
        %v607 = vld [vmem:[%s210 + $0x66c] sm:$0xff]
        %v608 = vld [vmem:[%s210 + $0x674] sm:$0xf]
        %v609 = vld [vmem:[%s210 + $0x678] sm:$0xff]
        %v610 = vld [vmem:[%s210 + $0x680] sm:$0xff]
        %v611 = vld [vmem:[%s210 + $0x688] sm:$0xff]
        %v612 = vld [vmem:[%s210 + $0x690] sm:$0xff]
        %v613 = vld [vmem:[%s210 + $0x698] sm:$0xf]
        %v614 = vld [vmem:[%s210 + $0x69c] sm:$0xff]
        %v615 = vld [vmem:[%s210 + $0x6a4] sm:$0xff]
        %v616 = vld [vmem:[%s210 + $0x6ac] sm:$0xff]
        %v617 = vld [vmem:[%s210 + $0x6b4] sm:$0xff]
        %v618 = vld [vmem:[%s210 + $0x6bc] sm:$0xf]
        %v619 = vld [vmem:[%s210 + $0x6c0] sm:$0xff]
        %v620 = vld [vmem:[%s210 + $0x6c8] sm:$0xff]
        %v621 = vld [vmem:[%s210 + $0x6d0] sm:$0xff]
        %v622 = vld [vmem:[%s210 + $0x6d8] sm:$0xff]
        %v623 = vld [vmem:[%s210 + $0x6e0] sm:$0xf]
        %v624 = vld [vmem:[%s210 + $0x6e4] sm:$0xff]
        %v625 = vld [vmem:[%s210 + $0x6ec] sm:$0xff]
        %v626 = vld [vmem:[%s210 + $0x6f4] sm:$0xff]
        %v627 = vld [vmem:[%s210 + $0x6fc] sm:$0xff]
        %v628 = vld [vmem:[%s210 + $0x704] sm:$0xf]
        %v629 = vld [vmem:[%s210 + $0x708] sm:$0xff]
        %v630 = vld [vmem:[%s210 + $0x710] sm:$0xff]
        %v631 = vld [vmem:[%s210 + $0x718] sm:$0xff]
        %v632 = vld [vmem:[%s210 + $0x720] sm:$0xff]
        %v633 = vld [vmem:[%s210 + $0x728] sm:$0xf]
        %v634 = vld [vmem:[%s210 + $0x72c] sm:$0xff]
        %v635 = vld [vmem:[%s210 + $0x734] sm:$0xff]
        %v636 = vld [vmem:[%s210 + $0x73c] sm:$0xff]
        %v637 = vld [vmem:[%s210 + $0x744] sm:$0xff]
        %v638 = vld [vmem:[%s210 + $0x74c] sm:$0xf]
        %v639 = vld [vmem:[%s210 + $0x750] sm:$0xff]
        %v640 = vld [vmem:[%s210 + $0x758] sm:$0xff]
        %v641 = vld [vmem:[%s210 + $0x760] sm:$0xff]
        %v642 = vld [vmem:[%s210 + $0x768] sm:$0xff]
        %v643 = vld [vmem:[%s210 + $0x770] sm:$0xf]
        %v644 = vld [vmem:[%s210 + $0x774] sm:$0xff]
        %v645 = vld [vmem:[%s210 + $0x77c] sm:$0xff]
        %v646 = vld [vmem:[%s210 + $0x784] sm:$0xff]
        %v647 = vld [vmem:[%s210 + $0x78c] sm:$0xff]
        %v648 = vld [vmem:[%s210 + $0x794] sm:$0xf]
        %v649 = vld [vmem:[%s210 + $0x798] sm:$0xff]
        %v650 = vld [vmem:[%s210 + $0x7a0] sm:$0xff]
        %v651 = vld [vmem:[%s210 + $0x7a8] sm:$0xff]
        %v652 = vld [vmem:[%s210 + $0x7b0] sm:$0xff]
        %v653 = vld [vmem:[%s210 + $0x7b8] sm:$0xf]
        %v654 = vld [vmem:[%s210 + $0x7bc] sm:$0xff]
        %v655 = vld [vmem:[%s210 + $0x7c4] sm:$0xff]
        %v656 = vld [vmem:[%s210 + $0x7cc] sm:$0xff]
        %v657 = vld [vmem:[%s210 + $0x7d4] sm:$0xff]
        %v658 = vld [vmem:[%s210 + $0x7dc] sm:$0xf]
        %v659 = vld [vmem:[%s210 + $0x7e0] sm:$0xff]
        %v660 = vld [vmem:[%s210 + $0x7e8] sm:$0xff]
        %v661 = vld [vmem:[%s210 + $0x7f0] sm:$0xff]
        %v662 = vld [vmem:[%s210 + $0x7f8] sm:$0xff]
        %v663 = vld [vmem:[%s210 + $0x800] sm:$0xf]
        %v664 = vld [vmem:[%s210 + $0x804] sm:$0xff]
        %v665 = vld [vmem:[%s210 + $0x80c] sm:$0xff]
        %v666 = vld [vmem:[%s210 + $0x814] sm:$0xff]
        %v667 = vld [vmem:[%s210 + $0x81c] sm:$0xff]
        %v668 = vld [vmem:[%s210 + $0x824] sm:$0xf]
        %v669 = vld [vmem:[%s210 + $0x828] sm:$0xff]
        %v670 = vld [vmem:[%s210 + $0x830] sm:$0xff]
        %v671 = vld [vmem:[%s210 + $0x838] sm:$0xff]
        %v672 = vld [vmem:[%s210 + $0x840] sm:$0xff]
        %v673 = vld [vmem:[%s210 + $0x848] sm:$0xf]
        %v674 = vld [vmem:[%s210 + $0x84c] sm:$0xff]
        %v675 = vld [vmem:[%s210 + $0x854] sm:$0xff]
        %v676 = vld [vmem:[%s210 + $0x85c] sm:$0xff]
        %v677 = vld [vmem:[%s210 + $0x864] sm:$0xff]
        %v678 = vld [vmem:[%s210 + $0x86c] sm:$0xf]
        %v679 = vld [vmem:[%s210 + $0x870] sm:$0xff]
        %v680 = vld [vmem:[%s210 + $0x878] sm:$0xff]
        %v681 = vld [vmem:[%s210 + $0x880] sm:$0xff]
        %v682 = vld [vmem:[%s210 + $0x888] sm:$0xff]
        %v683 = vld [vmem:[%s210 + $0x890] sm:$0xf]
        %v684 = vld [vmem:[%s210 + $0x894] sm:$0xff]
        %v685 = vld [vmem:[%s210 + $0x89c] sm:$0xff]
        %v686 = vld [vmem:[%s210 + $0x8a4] sm:$0xff]
        %v687 = vld [vmem:[%s210 + $0x8ac] sm:$0xff]
        %v688 = vld [vmem:[%s210 + $0x8b4] sm:$0xf]
        %v689 = vld [vmem:[%s210 + $0x8b8] sm:$0xff]
        %v690 = vld [vmem:[%s210 + $0x8c0] sm:$0xff]
        %v691 = vld [vmem:[%s210 + $0x8c8] sm:$0xff]
        %v692 = vld [vmem:[%s210 + $0x8d0] sm:$0xff]
        %v693 = vld [vmem:[%s210 + $0x8d8] sm:$0xf]
        %v694 = vld [vmem:[%s210 + $0x8dc] sm:$0xff]
        %v695 = vld [vmem:[%s210 + $0x8e4] sm:$0xff]
        %v696 = vld [vmem:[%s210 + $0x8ec] sm:$0xff]
        %v697 = vld [vmem:[%s210 + $0x8f4] sm:$0xff]
        %v698 = vld [vmem:[%s210 + $0x8fc] sm:$0xf]
        %v699 = vld [vmem:[#allocation6] sm:$0xf]
        %v700 = vld [vmem:[#allocation6 + $0x4] sm:$0xf]
        %v701 = vld [vmem:[#allocation6 + $0x8] sm:$0xf]
        %v702 = vld [vmem:[#allocation6 + $0xc] sm:$0xf]
        %v703 = vld [vmem:[#allocation6 + $0x10] sm:$0xf]
        %v704 = vld [vmem:[#allocation6 + $0x14] sm:$0xf]
        %v705 = vld [vmem:[#allocation6 + $0x18] sm:$0xf]
        %v706 = vld [vmem:[#allocation6 + $0x1c] sm:$0xf]
        %v707 = vld [vmem:[#allocation6 + $0x20] sm:$0xf]
        %v708 = vld [vmem:[#allocation6 + $0x24] sm:$0xf]
        %v709 = vld [vmem:[#allocation6 + $0x28] sm:$0xf]
        %v710 = vld [vmem:[#allocation6 + $0x2c] sm:$0xf]
        %v711 = vld [vmem:[#allocation6 + $0x30] sm:$0xf]
        %v712 = vld [vmem:[#allocation6 + $0x34] sm:$0xf]
        %v713 = vld [vmem:[#allocation6 + $0x38] sm:$0xf]
        %v714 = vld [vmem:[#allocation6 + $0x3c] sm:$0xf]
        %v715 = vld [vmem:[#allocation6 + $0x40] sm:$0xf]
        %v716 = vld [vmem:[#allocation6 + $0x44] sm:$0xf]
        %v717 = vld [vmem:[#allocation6 + $0x48] sm:$0xf]
        %v718 = vld [vmem:[#allocation6 + $0x4c] sm:$0xf]
        %v719 = vld [vmem:[#allocation6 + $0x50] sm:$0xf]
        %v720 = vld [vmem:[#allocation6 + $0x54] sm:$0xf]
        %v721 = vld [vmem:[#allocation6 + $0x58] sm:$0xf]
        %v722 = vld [vmem:[#allocation6 + $0x5c] sm:$0xf]
        %v723 = vld [vmem:[#allocation6 + $0x60] sm:$0xf]
        %v724 = vld [vmem:[#allocation6 + $0x64] sm:$0xf]
        %v725 = vld [vmem:[#allocation6 + $0x68] sm:$0xf]
        %v726 = vld [vmem:[#allocation6 + $0x6c] sm:$0xf]
        %v727 = vld [vmem:[#allocation6 + $0x70] sm:$0xf]
        %v728 = vld [vmem:[#allocation6 + $0x74] sm:$0xf]
        %v729 = vld [vmem:[#allocation6 + $0x78] sm:$0xf]
        %v730 = vld [vmem:[#allocation6 + $0x7c] sm:$0xf]
        %v731 = vld [vmem:[#allocation6 + $0x80] sm:$0xf]
        %v732 = vld [vmem:[#allocation6 + $0x84] sm:$0xf]
        %v733 = vld [vmem:[#allocation6 + $0x88] sm:$0xf]
        %v734 = vld [vmem:[#allocation6 + $0x8c] sm:$0xf]
        %v735 = vld [vmem:[#allocation6 + $0x90] sm:$0xf]
        %v736 = vld [vmem:[#allocation6 + $0x94] sm:$0xf]
        %v737 = vld [vmem:[#allocation6 + $0x98] sm:$0xf]
        %v738 = vld [vmem:[#allocation6 + $0x9c] sm:$0xf]
        %v739 = vld [vmem:[#allocation6 + $0xa0] sm:$0xf]
        %v740 = vld [vmem:[#allocation6 + $0xa4] sm:$0xf]
        %v741 = vld [vmem:[#allocation6 + $0xa8] sm:$0xf]
        %v742 = vld [vmem:[#allocation6 + $0xac] sm:$0xf]
        %v743 = vld [vmem:[#allocation6 + $0xb0] sm:$0xf]
        %v744 = vld [vmem:[#allocation6 + $0xb4] sm:$0xf]
        %v745 = vld [vmem:[#allocation6 + $0xb8] sm:$0xf]
        %v746 = vld [vmem:[#allocation6 + $0xbc] sm:$0xf]
        %v747 = vld [vmem:[#allocation6 + $0xc0] sm:$0xf]
        %v748 = vld [vmem:[#allocation6 + $0xc4] sm:$0xf]
        %v749 = vld [vmem:[#allocation6 + $0xc8] sm:$0xf]
        %v750 = vld [vmem:[#allocation6 + $0xcc] sm:$0xf]
        %v751 = vld [vmem:[#allocation6 + $0xd0] sm:$0xf]
        %v752 = vld [vmem:[#allocation6 + $0xd4] sm:$0xf]
        %v753 = vld [vmem:[#allocation6 + $0xd8] sm:$0xf]
        %v754 = vld [vmem:[#allocation6 + $0xdc] sm:$0xf]
        %v755 = vld [vmem:[#allocation6 + $0xe0] sm:$0xf]
        %v756 = vld [vmem:[#allocation6 + $0xe4] sm:$0xf]
        %v757 = vld [vmem:[#allocation6 + $0xe8] sm:$0xf]
        %v758 = vld [vmem:[#allocation6 + $0xec] sm:$0xf]
        %v759 = vld [vmem:[#allocation6 + $0xf0] sm:$0xf]
        %v760 = vld [vmem:[#allocation6 + $0xf4] sm:$0xf]
        %v761 = vld [vmem:[#allocation6 + $0xf8] sm:$0xf]
        %v762 = vld [vmem:[#allocation6 + $0xfc] sm:$0xf]
        %v763 = vld [vmem:[#allocation6 + $0x100] sm:$0xf]
        %v764 = vld [vmem:[#allocation6 + $0x104] sm:$0xf]
        %v765 = vld [vmem:[#allocation6 + $0x108] sm:$0xf]
        %v766 = vld [vmem:[#allocation6 + $0x10c] sm:$0xf]
        %v767 = vld [vmem:[#allocation6 + $0x110] sm:$0xf]
        %v768 = vld [vmem:[#allocation6 + $0x114] sm:$0xf]
        %v769 = vld [vmem:[#allocation6 + $0x118] sm:$0xf]
        %v770 = vld [vmem:[#allocation6 + $0x11c] sm:$0xf]
        %v771 = vld [vmem:[#allocation6 + $0x120] sm:$0xf]
        %v772 = vld [vmem:[#allocation6 + $0x124] sm:$0xf]
        %v773 = vld [vmem:[#allocation6 + $0x128] sm:$0xf]
        %v774 = vld [vmem:[#allocation6 + $0x12c] sm:$0xf]
        %v775 = vld [vmem:[#allocation6 + $0x130] sm:$0xf]
        %v776 = vld [vmem:[#allocation6 + $0x134] sm:$0xf]
        %v777 = vld [vmem:[#allocation6 + $0x138] sm:$0xf]
        %v778 = vld [vmem:[#allocation6 + $0x13c] sm:$0xf]
        %v779 = vld [vmem:[#allocation6 + $0x140] sm:$0xf]
        %v780 = vld [vmem:[#allocation6 + $0x144] sm:$0xf]
        %v781 = vld [vmem:[#allocation6 + $0x148] sm:$0xf]
        %v782 = vld [vmem:[#allocation6 + $0x14c] sm:$0xf]
        %v783 = vld [vmem:[#allocation6 + $0x150] sm:$0xf]
        %v784 = vld [vmem:[#allocation6 + $0x154] sm:$0xf]
        %v785 = vld [vmem:[#allocation6 + $0x158] sm:$0xf]
        %v786 = vld [vmem:[#allocation6 + $0x15c] sm:$0xf]
        %v787 = vld [vmem:[#allocation6 + $0x160] sm:$0xf]
        %v788 = vld [vmem:[#allocation6 + $0x164] sm:$0xf]
        %v789 = vld [vmem:[#allocation6 + $0x168] sm:$0xf]
        %v790 = vld [vmem:[#allocation6 + $0x16c] sm:$0xf]
        %v791 = vld [vmem:[#allocation6 + $0x170] sm:$0xf]
        %v792 = vld [vmem:[#allocation6 + $0x174] sm:$0xf]
        %v793 = vld [vmem:[#allocation6 + $0x178] sm:$0xf]
        %v794 = vld [vmem:[#allocation6 + $0x17c] sm:$0xf]
        %v795 = vld [vmem:[#allocation6 + $0x180] sm:$0xf]
        %v796 = vld [vmem:[#allocation6 + $0x184] sm:$0xf]
        %v797 = vld [vmem:[#allocation6 + $0x188] sm:$0xf]
        %v798 = vld [vmem:[#allocation6 + $0x18c] sm:$0xf]
        %v799 = vld [vmem:[#allocation6 + $0x190] sm:$0xf]
        %v800 = vld [vmem:[#allocation6 + $0x194] sm:$0xf]
        %v801 = vld [vmem:[#allocation6 + $0x198] sm:$0xf]
        %v802 = vld [vmem:[#allocation6 + $0x19c] sm:$0xf]
        %v803 = vld [vmem:[#allocation6 + $0x1a0] sm:$0xf]
        %v804 = vld [vmem:[#allocation6 + $0x1a4] sm:$0xf]
        %v805 = vld [vmem:[#allocation6 + $0x1a8] sm:$0xf]
        %v806 = vld [vmem:[#allocation6 + $0x1ac] sm:$0xf]
        %v807 = vld [vmem:[#allocation6 + $0x1b0] sm:$0xf]
        %v808 = vld [vmem:[#allocation6 + $0x1b4] sm:$0xf]
        %v809 = vld [vmem:[#allocation6 + $0x1b8] sm:$0xf]
        %v810 = vld [vmem:[#allocation6 + $0x1bc] sm:$0xf]
        %v811 = vld [vmem:[#allocation6 + $0x1c0] sm:$0xf]
        %v812 = vld [vmem:[#allocation6 + $0x1c4] sm:$0xf]
        %v813 = vld [vmem:[#allocation6 + $0x1c8] sm:$0xf]
        %v814 = vld [vmem:[#allocation6 + $0x1cc] sm:$0xf]
        %v815 = vld [vmem:[#allocation6 + $0x1d0] sm:$0xf]
        %v816 = vld [vmem:[#allocation6 + $0x1d4] sm:$0xf]
        %v817 = vld [vmem:[#allocation6 + $0x1d8] sm:$0xf]
        %v818 = vld [vmem:[#allocation6 + $0x1dc] sm:$0xf]
        %v819 = vld [vmem:[#allocation6 + $0x1e0] sm:$0xf]
        %v820 = vld [vmem:[#allocation6 + $0x1e4] sm:$0xf]
        %v821 = vld [vmem:[#allocation6 + $0x1e8] sm:$0xf]
        %v822 = vld [vmem:[#allocation6 + $0x1ec] sm:$0xf]
        %v823 = vld [vmem:[#allocation6 + $0x1f0] sm:$0xf]
        %v824 = vld [vmem:[#allocation6 + $0x1f4] sm:$0xf]
        %v825 = vld [vmem:[#allocation6 + $0x1f8] sm:$0xf]
        %v826 = vld [vmem:[#allocation6 + $0x1fc] sm:$0xf]
        %v827 = vld [vmem:[#allocation6 + $0x200] sm:$0x7]
        %v1148 = vunpack.c.l.b16 %v379
        %v1149 = vunpack.c.h.b16 %v379
        %v1150 = vunpack.c.l.b16 %v380
        %v1151 = vunpack.c.h.b16 %v380
        %v1152 = vunpack.c.l.b16 %v381
        %v1153 = vunpack.c.h.b16 %v381
        %v1154 = vunpack.c.l.b16 %v382
        %v1155 = vunpack.c.h.b16 %v382
        %v1156 = vunpack.c.l.b16 %v383
        %v1157 = vunpack.c.l.b16 %v384
        %v1158 = vunpack.c.h.b16 %v384
        %v1159 = vunpack.c.l.b16 %v385
        %v1160 = vunpack.c.h.b16 %v385
        %v1161 = vunpack.c.l.b16 %v386
        %v1162 = vunpack.c.h.b16 %v386
        %v1163 = vunpack.c.l.b16 %v387
        %v1164 = vunpack.c.h.b16 %v387
        %v1165 = vunpack.c.l.b16 %v388
        %v1166 = vunpack.c.l.b16 %v389
        %v1167 = vunpack.c.h.b16 %v389
        %v1168 = vunpack.c.l.b16 %v390
        %v1169 = vunpack.c.h.b16 %v390
        %v1170 = vunpack.c.l.b16 %v391
        %v1171 = vunpack.c.h.b16 %v391
        %v1172 = vunpack.c.l.b16 %v392
        %v1173 = vunpack.c.h.b16 %v392
        %v1174 = vunpack.c.l.b16 %v393
        %v1175 = vunpack.c.l.b16 %v394
        %v1176 = vunpack.c.h.b16 %v394
        %v1177 = vunpack.c.l.b16 %v395
        %v1178 = vunpack.c.h.b16 %v395
        %v1179 = vunpack.c.l.b16 %v396
        %v1180 = vunpack.c.h.b16 %v396
        %v1181 = vunpack.c.l.b16 %v397
        %v1182 = vunpack.c.h.b16 %v397
        %v1183 = vunpack.c.l.b16 %v398
        %v1184 = vunpack.c.l.b16 %v399
        %v1185 = vunpack.c.h.b16 %v399
        %v1186 = vunpack.c.l.b16 %v400
        %v1187 = vunpack.c.h.b16 %v400
        %v1188 = vunpack.c.l.b16 %v401
        %v1189 = vunpack.c.h.b16 %v401
        %v1190 = vunpack.c.l.b16 %v402
        %v1191 = vunpack.c.h.b16 %v402
        %v1192 = vunpack.c.l.b16 %v403
        %v1193 = vunpack.c.l.b16 %v404
        %v1194 = vunpack.c.h.b16 %v404
        %v1195 = vunpack.c.l.b16 %v405
        %v1196 = vunpack.c.h.b16 %v405
        %v1197 = vunpack.c.l.b16 %v406
        %v1198 = vunpack.c.h.b16 %v406
        %v1199 = vunpack.c.l.b16 %v407
        %v1200 = vunpack.c.h.b16 %v407
        %v1201 = vunpack.c.l.b16 %v408
        %v1202 = vunpack.c.l.b16 %v409
        %v1203 = vunpack.c.h.b16 %v409
        %v1204 = vunpack.c.l.b16 %v410
        %v1205 = vunpack.c.h.b16 %v410
        %v1206 = vunpack.c.l.b16 %v411
        %v1207 = vunpack.c.h.b16 %v411
        %v1208 = vunpack.c.l.b16 %v412
        %v1209 = vunpack.c.h.b16 %v412
        %v1210 = vunpack.c.l.b16 %v413
        %v1211 = vunpack.c.l.b16 %v414
        %v1212 = vunpack.c.h.b16 %v414
        %v1213 = vunpack.c.l.b16 %v415
        %v1214 = vunpack.c.h.b16 %v415
        %v1215 = vunpack.c.l.b16 %v416
        %v1216 = vunpack.c.h.b16 %v416
        %v1217 = vunpack.c.l.b16 %v417
        %v1218 = vunpack.c.h.b16 %v417
        %v1219 = vunpack.c.l.b16 %v418
        %v1220 = vunpack.c.l.b16 %v419
        %v1221 = vunpack.c.h.b16 %v419
        %v1222 = vunpack.c.l.b16 %v420
        %v1223 = vunpack.c.h.b16 %v420
        %v1224 = vunpack.c.l.b16 %v421
        %v1225 = vunpack.c.h.b16 %v421
        %v1226 = vunpack.c.l.b16 %v422
        %v1227 = vunpack.c.h.b16 %v422
        %v1228 = vunpack.c.l.b16 %v423
        %v1229 = vunpack.c.l.b16 %v424
        %v1230 = vunpack.c.h.b16 %v424
        %v1231 = vunpack.c.l.b16 %v425
        %v1232 = vunpack.c.h.b16 %v425
        %v1233 = vunpack.c.l.b16 %v426
        %v1234 = vunpack.c.h.b16 %v426
        %v1235 = vunpack.c.l.b16 %v427
        %v1236 = vunpack.c.h.b16 %v427
        %v1237 = vunpack.c.l.b16 %v428
        %v1238 = vunpack.c.l.b16 %v429
        %v1239 = vunpack.c.h.b16 %v429
        %v1240 = vunpack.c.l.b16 %v430
        %v1241 = vunpack.c.h.b16 %v430
        %v1242 = vunpack.c.l.b16 %v431
        %v1243 = vunpack.c.h.b16 %v431
        %v1244 = vunpack.c.l.b16 %v432
        %v1245 = vunpack.c.h.b16 %v432
        %v1246 = vunpack.c.l.b16 %v433
        %v1247 = vunpack.c.l.b16 %v434
        %v1248 = vunpack.c.h.b16 %v434
        %v1249 = vunpack.c.l.b16 %v435
        %v1250 = vunpack.c.h.b16 %v435
        %v1251 = vunpack.c.l.b16 %v436
        %v1252 = vunpack.c.h.b16 %v436
        %v1253 = vunpack.c.l.b16 %v437
        %v1254 = vunpack.c.h.b16 %v437
        %v1255 = vunpack.c.l.b16 %v438
        %v1256 = vunpack.c.l.b16 %v439
        %v1257 = vunpack.c.h.b16 %v439
        %v1258 = vunpack.c.l.b16 %v440
        %v1259 = vunpack.c.h.b16 %v440
        %v1260 = vunpack.c.l.b16 %v441
        %v1261 = vunpack.c.h.b16 %v441
        %v1262 = vunpack.c.l.b16 %v442
        %v1263 = vunpack.c.h.b16 %v442
        %v1264 = vunpack.c.l.b16 %v443
        %v1265 = vunpack.c.l.b16 %v444
        %v1266 = vunpack.c.h.b16 %v444
        %v1267 = vunpack.c.l.b16 %v445
        %v1268 = vunpack.c.h.b16 %v445
        %v1269 = vunpack.c.l.b16 %v446
        %v1270 = vunpack.c.h.b16 %v446
        %v1271 = vunpack.c.l.b16 %v447
        %v1272 = vunpack.c.h.b16 %v447
        %v1273 = vunpack.c.l.b16 %v448
        %v1274 = vunpack.c.l.b16 %v449
        %v1275 = vunpack.c.h.b16 %v449
        %v1276 = vunpack.c.l.b16 %v450
        %v1277 = vunpack.c.h.b16 %v450
        %v1278 = vunpack.c.l.b16 %v451
        %v1279 = vunpack.c.h.b16 %v451
        %v1280 = vunpack.c.l.b16 %v452
        %v1281 = vunpack.c.h.b16 %v452
        %v1282 = vunpack.c.l.b16 %v453
        %v1283 = vunpack.c.l.b16 %v454
        %v1284 = vunpack.c.h.b16 %v454
        %v1285 = vunpack.c.l.b16 %v455
        %v1286 = vunpack.c.h.b16 %v455
        %v1287 = vunpack.c.l.b16 %v456
        %v1288 = vunpack.c.h.b16 %v456
        %v1289 = vunpack.c.l.b16 %v457
        %v1290 = vunpack.c.h.b16 %v457
        %v1291 = vunpack.c.l.b16 %v458
        %v1292 = vunpack.c.l.b16 %v459
        %v1293 = vunpack.c.h.b16 %v459
        %v1294 = vunpack.c.l.b16 %v460
        %v1295 = vunpack.c.h.b16 %v460
        %v1296 = vunpack.c.l.b16 %v461
        %v1297 = vunpack.c.h.b16 %v461
        %v1298 = vunpack.c.l.b16 %v462
        %v1299 = vunpack.c.h.b16 %v462
        %v1300 = vunpack.c.l.b16 %v463
        %v1301 = vunpack.c.l.b16 %v464
        %v1302 = vunpack.c.h.b16 %v464
        %v1303 = vunpack.c.l.b16 %v465
        %v1304 = vunpack.c.h.b16 %v465
        %v1305 = vunpack.c.l.b16 %v466
        %v1306 = vunpack.c.h.b16 %v466
        %v1307 = vunpack.c.l.b16 %v467
        %v1308 = vunpack.c.h.b16 %v467
        %v1309 = vunpack.c.l.b16 %v468
        %v1310 = vunpack.c.l.b16 %v469
        %v1311 = vunpack.c.h.b16 %v469
        %v1312 = vunpack.c.l.b16 %v470
        %v1313 = vunpack.c.h.b16 %v470
        %v1314 = vunpack.c.l.b16 %v471
        %v1315 = vunpack.c.h.b16 %v471
        %v1316 = vunpack.c.l.b16 %v472
        %v1317 = vunpack.c.h.b16 %v472
        %v1318 = vunpack.c.l.b16 %v473
        %v1319 = vunpack.c.l.b16 %v474
        %v1320 = vunpack.c.h.b16 %v474
        %v1321 = vunpack.c.l.b16 %v475
        %v1322 = vunpack.c.h.b16 %v475
        %v1323 = vunpack.c.l.b16 %v476
        %v1324 = vunpack.c.h.b16 %v476
        %v1325 = vunpack.c.l.b16 %v477
        %v1326 = vunpack.c.h.b16 %v477
        %v1327 = vunpack.c.l.b16 %v478
        %v1328 = vunpack.c.l.b16 %v479
        %v1329 = vunpack.c.h.b16 %v479
        %v1330 = vunpack.c.l.b16 %v480
        %v1331 = vunpack.c.h.b16 %v480
        %v1332 = vunpack.c.l.b16 %v481
        %v1333 = vunpack.c.h.b16 %v481
        %v1334 = vunpack.c.l.b16 %v482
        %v1335 = vunpack.c.h.b16 %v482
        %v1336 = vunpack.c.l.b16 %v483
        %v1337 = vunpack.c.l.b16 %v484
        %v1338 = vunpack.c.h.b16 %v484
        %v1339 = vunpack.c.l.b16 %v485
        %v1340 = vunpack.c.h.b16 %v485
        %v1341 = vunpack.c.l.b16 %v486
        %v1342 = vunpack.c.h.b16 %v486
        %v1343 = vunpack.c.l.b16 %v487
        %v1344 = vunpack.c.h.b16 %v487
        %v1345 = vunpack.c.l.b16 %v488
        %v1346 = vunpack.c.l.b16 %v489
        %v1347 = vunpack.c.h.b16 %v489
        %v1348 = vunpack.c.l.b16 %v490
        %v1349 = vunpack.c.h.b16 %v490
        %v1350 = vunpack.c.l.b16 %v491
        %v1351 = vunpack.c.h.b16 %v491
        %v1352 = vunpack.c.l.b16 %v492
        %v1353 = vunpack.c.h.b16 %v492
        %v1354 = vunpack.c.l.b16 %v493
        %v1355 = vunpack.c.l.b16 %v494
        %v1356 = vunpack.c.h.b16 %v494
        %v1357 = vunpack.c.l.b16 %v495
        %v1358 = vunpack.c.h.b16 %v495
        %v1359 = vunpack.c.l.b16 %v496
        %v1360 = vunpack.c.h.b16 %v496
        %v1361 = vunpack.c.l.b16 %v497
        %v1362 = vunpack.c.h.b16 %v497
        %v1363 = vunpack.c.l.b16 %v498
        %v1364 = vunpack.c.l.b16 %v499
        %v1365 = vunpack.c.h.b16 %v499
        %v1366 = vunpack.c.l.b16 %v500
        %v1367 = vunpack.c.h.b16 %v500
        %v1368 = vunpack.c.l.b16 %v501
        %v1369 = vunpack.c.h.b16 %v501
        %v1370 = vunpack.c.l.b16 %v502
        %v1371 = vunpack.c.h.b16 %v502
        %v1372 = vunpack.c.l.b16 %v503
        %v1373 = vunpack.c.l.b16 %v504
        %v1374 = vunpack.c.h.b16 %v504
        %v1375 = vunpack.c.l.b16 %v505
        %v1376 = vunpack.c.h.b16 %v505
        %v1377 = vunpack.c.l.b16 %v506
        %v1378 = vunpack.c.h.b16 %v506
        %v1379 = vunpack.c.l.b16 %v507
        %v1380 = vunpack.c.h.b16 %v507
        %v1381 = vunpack.c.l.b16 %v508
        %v1382 = vunpack.c.l.b16 %v509
        %v1383 = vunpack.c.h.b16 %v509
        %v1384 = vunpack.c.l.b16 %v510
        %v1385 = vunpack.c.h.b16 %v510
        %v1386 = vunpack.c.l.b16 %v511
        %v1387 = vunpack.c.h.b16 %v511
        %v1388 = vunpack.c.l.b16 %v512
        %v1389 = vunpack.c.h.b16 %v512
        %v1390 = vunpack.c.l.b16 %v513
        %v1391 = vunpack.c.l.b16 %v514
        %v1392 = vunpack.c.h.b16 %v514
        %v1393 = vunpack.c.l.b16 %v515
        %v1394 = vunpack.c.h.b16 %v515
        %v1395 = vunpack.c.l.b16 %v516
        %v1396 = vunpack.c.h.b16 %v516
        %v1397 = vunpack.c.l.b16 %v517
        %v1398 = vunpack.c.h.b16 %v517
        %v1399 = vunpack.c.l.b16 %v518
        %v1400 = vunpack.c.l.b16 %v519
        %v1401 = vunpack.c.h.b16 %v519
        %v1402 = vunpack.c.l.b16 %v520
        %v1403 = vunpack.c.h.b16 %v520
        %v1404 = vunpack.c.l.b16 %v521
        %v1405 = vunpack.c.h.b16 %v521
        %v1406 = vunpack.c.l.b16 %v522
        %v1407 = vunpack.c.h.b16 %v522
        %v1408 = vunpack.c.l.b16 %v523
        %v1409 = vunpack.c.l.b16 %v524
        %v1410 = vunpack.c.h.b16 %v524
        %v1411 = vunpack.c.l.b16 %v525
        %v1412 = vunpack.c.h.b16 %v525
        %v1413 = vunpack.c.l.b16 %v526
        %v1414 = vunpack.c.h.b16 %v526
        %v1415 = vunpack.c.l.b16 %v527
        %v1416 = vunpack.c.h.b16 %v527
        %v1417 = vunpack.c.l.b16 %v528
        %v1418 = vunpack.c.l.b16 %v529
        %v1419 = vunpack.c.h.b16 %v529
        %v1420 = vunpack.c.l.b16 %v530
        %v1421 = vunpack.c.h.b16 %v530
        %v1422 = vunpack.c.l.b16 %v531
        %v1423 = vunpack.c.h.b16 %v531
        %v1424 = vunpack.c.l.b16 %v532
        %v1425 = vunpack.c.h.b16 %v532
        %v1426 = vunpack.c.l.b16 %v533
        %v1427 = vunpack.c.l.b16 %v534
        %v1428 = vunpack.c.h.b16 %v534
        %v1429 = vunpack.c.l.b16 %v535
        %v1430 = vunpack.c.h.b16 %v535
        %v1431 = vunpack.c.l.b16 %v536
        %v1432 = vunpack.c.h.b16 %v536
        %v1433 = vunpack.c.l.b16 %v537
        %v1434 = vunpack.c.h.b16 %v537
        %v1435 = vunpack.c.l.b16 %v538
        %v1436 = vunpack.c.l.b16 %v539
        %v1437 = vunpack.c.h.b16 %v539
        %v1438 = vunpack.c.l.b16 %v540
        %v1439 = vunpack.c.h.b16 %v540
        %v1440 = vunpack.c.l.b16 %v541
        %v1441 = vunpack.c.h.b16 %v541
        %v1442 = vunpack.c.l.b16 %v542
        %v1443 = vunpack.c.h.b16 %v542
        %v1444 = vunpack.c.l.b16 %v543
        %v1445 = vunpack.c.l.b16 %v544
        %v1446 = vunpack.c.h.b16 %v544
        %v1447 = vunpack.c.l.b16 %v545
        %v1448 = vunpack.c.h.b16 %v545
        %v1449 = vunpack.c.l.b16 %v546
        %v1450 = vunpack.c.h.b16 %v546
        %v1451 = vunpack.c.l.b16 %v547
        %v1452 = vunpack.c.h.b16 %v547
        %v1453 = vunpack.c.l.b16 %v548
        %v1454 = vunpack.c.l.b16 %v549
        %v1455 = vunpack.c.h.b16 %v549
        %v1456 = vunpack.c.l.b16 %v550
        %v1457 = vunpack.c.h.b16 %v550
        %v1458 = vunpack.c.l.b16 %v551
        %v1459 = vunpack.c.h.b16 %v551
        %v1460 = vunpack.c.l.b16 %v552
        %v1461 = vunpack.c.h.b16 %v552
        %v1462 = vunpack.c.l.b16 %v553
        %v1463 = vunpack.c.l.b16 %v554
        %v1464 = vunpack.c.h.b16 %v554
        %v1465 = vunpack.c.l.b16 %v555
        %v1466 = vunpack.c.h.b16 %v555
        %v1467 = vunpack.c.l.b16 %v556
        %v1468 = vunpack.c.h.b16 %v556
        %v1469 = vunpack.c.l.b16 %v557
        %v1470 = vunpack.c.h.b16 %v557
        %v1471 = vunpack.c.l.b16 %v558
        %v1472 = vunpack.c.l.b16 %v559
        %v1473 = vunpack.c.h.b16 %v559
        %v1474 = vunpack.c.l.b16 %v560
        %v1475 = vunpack.c.h.b16 %v560
        %v1476 = vunpack.c.l.b16 %v561
        %v1477 = vunpack.c.h.b16 %v561
        %v1478 = vunpack.c.l.b16 %v562
        %v1479 = vunpack.c.h.b16 %v562
        %v1480 = vunpack.c.l.b16 %v563
        %v1481 = vunpack.c.l.b16 %v564
        %v1482 = vunpack.c.h.b16 %v564
        %v1483 = vunpack.c.l.b16 %v565
        %v1484 = vunpack.c.h.b16 %v565
        %v1485 = vunpack.c.l.b16 %v566
        %v1486 = vunpack.c.h.b16 %v566
        %v1487 = vunpack.c.l.b16 %v567
        %v1488 = vunpack.c.h.b16 %v567
        %v1489 = vunpack.c.l.b16 %v568
        %v1490 = vunpack.c.l.b16 %v569
        %v1491 = vunpack.c.h.b16 %v569
        %v1492 = vunpack.c.l.b16 %v570
        %v1493 = vunpack.c.h.b16 %v570
        %v1494 = vunpack.c.l.b16 %v571
        %v1495 = vunpack.c.h.b16 %v571
        %v1496 = vunpack.c.l.b16 %v572
        %v1497 = vunpack.c.h.b16 %v572
        %v1498 = vunpack.c.l.b16 %v573
        %v1499 = vunpack.c.l.b16 %v574
        %v1500 = vunpack.c.h.b16 %v574
        %v1501 = vunpack.c.l.b16 %v575
        %v1502 = vunpack.c.h.b16 %v575
        %v1503 = vunpack.c.l.b16 %v576
        %v1504 = vunpack.c.h.b16 %v576
        %v1505 = vunpack.c.l.b16 %v577
        %v1506 = vunpack.c.h.b16 %v577
        %v1507 = vunpack.c.l.b16 %v578
        %v1508 = vunpack.c.l.b16 %v579
        %v1509 = vunpack.c.h.b16 %v579
        %v1510 = vunpack.c.l.b16 %v580
        %v1511 = vunpack.c.h.b16 %v580
        %v1512 = vunpack.c.l.b16 %v581
        %v1513 = vunpack.c.h.b16 %v581
        %v1514 = vunpack.c.l.b16 %v582
        %v1515 = vunpack.c.h.b16 %v582
        %v1516 = vunpack.c.l.b16 %v583
        %v1517 = vunpack.c.l.b16 %v584
        %v1518 = vunpack.c.h.b16 %v584
        %v1519 = vunpack.c.l.b16 %v585
        %v1520 = vunpack.c.h.b16 %v585
        %v1521 = vunpack.c.l.b16 %v586
        %v1522 = vunpack.c.h.b16 %v586
        %v1523 = vunpack.c.l.b16 %v587
        %v1524 = vunpack.c.h.b16 %v587
        %v1525 = vunpack.c.l.b16 %v588
        %v1526 = vunpack.c.l.b16 %v589
        %v1527 = vunpack.c.h.b16 %v589
        %v1528 = vunpack.c.l.b16 %v590
        %v1529 = vunpack.c.h.b16 %v590
        %v1530 = vunpack.c.l.b16 %v591
        %v1531 = vunpack.c.h.b16 %v591
        %v1532 = vunpack.c.l.b16 %v592
        %v1533 = vunpack.c.h.b16 %v592
        %v1534 = vunpack.c.l.b16 %v593
        %v1535 = vunpack.c.l.b16 %v594
        %v1536 = vunpack.c.h.b16 %v594
        %v1537 = vunpack.c.l.b16 %v595
        %v1538 = vunpack.c.h.b16 %v595
        %v1539 = vunpack.c.l.b16 %v596
        %v1540 = vunpack.c.h.b16 %v596
        %v1541 = vunpack.c.l.b16 %v597
        %v1542 = vunpack.c.h.b16 %v597
        %v1543 = vunpack.c.l.b16 %v598
        %v1544 = vunpack.c.l.b16 %v599
        %v1545 = vunpack.c.h.b16 %v599
        %v1546 = vunpack.c.l.b16 %v600
        %v1547 = vunpack.c.h.b16 %v600
        %v1548 = vunpack.c.l.b16 %v601
        %v1549 = vunpack.c.h.b16 %v601
        %v1550 = vunpack.c.l.b16 %v602
        %v1551 = vunpack.c.h.b16 %v602
        %v1552 = vunpack.c.l.b16 %v603
        %v1553 = vunpack.c.l.b16 %v604
        %v1554 = vunpack.c.h.b16 %v604
        %v1555 = vunpack.c.l.b16 %v605
        %v1556 = vunpack.c.h.b16 %v605
        %v1557 = vunpack.c.l.b16 %v606
        %v1558 = vunpack.c.h.b16 %v606
        %v1559 = vunpack.c.l.b16 %v607
        %v1560 = vunpack.c.h.b16 %v607
        %v1561 = vunpack.c.l.b16 %v608
        %v1562 = vunpack.c.l.b16 %v609
        %v1563 = vunpack.c.h.b16 %v609
        %v1564 = vunpack.c.l.b16 %v610
        %v1565 = vunpack.c.h.b16 %v610
        %v1566 = vunpack.c.l.b16 %v611
        %v1567 = vunpack.c.h.b16 %v611
        %v1568 = vunpack.c.l.b16 %v612
        %v1569 = vunpack.c.h.b16 %v612
        %v1570 = vunpack.c.l.b16 %v613
        %v1571 = vunpack.c.l.b16 %v614
        %v1572 = vunpack.c.h.b16 %v614
        %v1573 = vunpack.c.l.b16 %v615
        %v1574 = vunpack.c.h.b16 %v615
        %v1575 = vunpack.c.l.b16 %v616
        %v1576 = vunpack.c.h.b16 %v616
        %v1577 = vunpack.c.l.b16 %v617
        %v1578 = vunpack.c.h.b16 %v617
        %v1579 = vunpack.c.l.b16 %v618
        %v1580 = vunpack.c.l.b16 %v619
        %v1581 = vunpack.c.h.b16 %v619
        %v1582 = vunpack.c.l.b16 %v620
        %v1583 = vunpack.c.h.b16 %v620
        %v1584 = vunpack.c.l.b16 %v621
        %v1585 = vunpack.c.h.b16 %v621
        %v1586 = vunpack.c.l.b16 %v622
        %v1587 = vunpack.c.h.b16 %v622
        %v1588 = vunpack.c.l.b16 %v623
        %v1589 = vunpack.c.l.b16 %v624
        %v1590 = vunpack.c.h.b16 %v624
        %v1591 = vunpack.c.l.b16 %v625
        %v1592 = vunpack.c.h.b16 %v625
        %v1593 = vunpack.c.l.b16 %v626
        %v1594 = vunpack.c.h.b16 %v626
        %v1595 = vunpack.c.l.b16 %v627
        %v1596 = vunpack.c.h.b16 %v627
        %v1597 = vunpack.c.l.b16 %v628
        %v1598 = vunpack.c.l.b16 %v629
        %v1599 = vunpack.c.h.b16 %v629
        %v1600 = vunpack.c.l.b16 %v630
        %v1601 = vunpack.c.h.b16 %v630
        %v1602 = vunpack.c.l.b16 %v631
        %v1603 = vunpack.c.h.b16 %v631
        %v1604 = vunpack.c.l.b16 %v632
        %v1605 = vunpack.c.h.b16 %v632
        %v1606 = vunpack.c.l.b16 %v633
        %v1607 = vunpack.c.l.b16 %v634
        %v1608 = vunpack.c.h.b16 %v634
        %v1609 = vunpack.c.l.b16 %v635
        %v1610 = vunpack.c.h.b16 %v635
        %v1611 = vunpack.c.l.b16 %v636
        %v1612 = vunpack.c.h.b16 %v636
        %v1613 = vunpack.c.l.b16 %v637
        %v1614 = vunpack.c.h.b16 %v637
        %v1615 = vunpack.c.l.b16 %v638
        %v1616 = vunpack.c.l.b16 %v639
        %v1617 = vunpack.c.h.b16 %v639
        %v1618 = vunpack.c.l.b16 %v640
        %v1619 = vunpack.c.h.b16 %v640
        %v1620 = vunpack.c.l.b16 %v641
        %v1621 = vunpack.c.h.b16 %v641
        %v1622 = vunpack.c.l.b16 %v642
        %v1623 = vunpack.c.h.b16 %v642
        %v1624 = vunpack.c.l.b16 %v643
        %v1625 = vunpack.c.l.b16 %v644
        %v1626 = vunpack.c.h.b16 %v644
        %v1627 = vunpack.c.l.b16 %v645
        %v1628 = vunpack.c.h.b16 %v645
        %v1629 = vunpack.c.l.b16 %v646
        %v1630 = vunpack.c.h.b16 %v646
        %v1631 = vunpack.c.l.b16 %v647
        %v1632 = vunpack.c.h.b16 %v647
        %v1633 = vunpack.c.l.b16 %v648
        %v1634 = vunpack.c.l.b16 %v649
        %v1635 = vunpack.c.h.b16 %v649
        %v1636 = vunpack.c.l.b16 %v650
        %v1637 = vunpack.c.h.b16 %v650
        %v1638 = vunpack.c.l.b16 %v651
        %v1639 = vunpack.c.h.b16 %v651
        %v1640 = vunpack.c.l.b16 %v652
        %v1641 = vunpack.c.h.b16 %v652
        %v1642 = vunpack.c.l.b16 %v653
        %v1643 = vunpack.c.l.b16 %v654
        %v1644 = vunpack.c.h.b16 %v654
        %v1645 = vunpack.c.l.b16 %v655
        %v1646 = vunpack.c.h.b16 %v655
        %v1647 = vunpack.c.l.b16 %v656
        %v1648 = vunpack.c.h.b16 %v656
        %v1649 = vunpack.c.l.b16 %v657
        %v1650 = vunpack.c.h.b16 %v657
        %v1651 = vunpack.c.l.b16 %v658
        %v1652 = vunpack.c.l.b16 %v659
        %v1653 = vunpack.c.h.b16 %v659
        %v1654 = vunpack.c.l.b16 %v660
        %v1655 = vunpack.c.h.b16 %v660
        %v1656 = vunpack.c.l.b16 %v661
        %v1657 = vunpack.c.h.b16 %v661
        %v1658 = vunpack.c.l.b16 %v662
        %v1659 = vunpack.c.h.b16 %v662
        %v1660 = vunpack.c.l.b16 %v663
        %v1661 = vunpack.c.l.b16 %v664
        %v1662 = vunpack.c.h.b16 %v664
        %v1663 = vunpack.c.l.b16 %v665
        %v1664 = vunpack.c.h.b16 %v665
        %v1665 = vunpack.c.l.b16 %v666
        %v1666 = vunpack.c.h.b16 %v666
        %v1667 = vunpack.c.l.b16 %v667
        %v1668 = vunpack.c.h.b16 %v667
        %v1669 = vunpack.c.l.b16 %v668
        %v1670 = vunpack.c.l.b16 %v669
        %v1671 = vunpack.c.h.b16 %v669
        %v1672 = vunpack.c.l.b16 %v670
        %v1673 = vunpack.c.h.b16 %v670
        %v1674 = vunpack.c.l.b16 %v671
        %v1675 = vunpack.c.h.b16 %v671
        %v1676 = vunpack.c.l.b16 %v672
        %v1677 = vunpack.c.h.b16 %v672
        %v1678 = vunpack.c.l.b16 %v673
        %v1679 = vunpack.c.l.b16 %v674
        %v1680 = vunpack.c.h.b16 %v674
        %v1681 = vunpack.c.l.b16 %v675
        %v1682 = vunpack.c.h.b16 %v675
        %v1683 = vunpack.c.l.b16 %v676
        %v1684 = vunpack.c.h.b16 %v676
        %v1685 = vunpack.c.l.b16 %v677
        %v1686 = vunpack.c.h.b16 %v677
        %v1687 = vunpack.c.l.b16 %v678
        %v1688 = vunpack.c.l.b16 %v679
        %v1689 = vunpack.c.h.b16 %v679
        %v1690 = vunpack.c.l.b16 %v680
        %v1691 = vunpack.c.h.b16 %v680
        %v1692 = vunpack.c.l.b16 %v681
        %v1693 = vunpack.c.h.b16 %v681
        %v1694 = vunpack.c.l.b16 %v682
        %v1695 = vunpack.c.h.b16 %v682
        %v1696 = vunpack.c.l.b16 %v683
        %v1697 = vunpack.c.l.b16 %v684
        %v1698 = vunpack.c.h.b16 %v684
        %v1699 = vunpack.c.l.b16 %v685
        %v1700 = vunpack.c.h.b16 %v685
        %v1701 = vunpack.c.l.b16 %v686
        %v1702 = vunpack.c.h.b16 %v686
        %v1703 = vunpack.c.l.b16 %v687
        %v1704 = vunpack.c.h.b16 %v687
        %v1705 = vunpack.c.l.b16 %v688
        %v1706 = vunpack.c.l.b16 %v689
        %v1707 = vunpack.c.h.b16 %v689
        %v1708 = vunpack.c.l.b16 %v690
        %v1709 = vunpack.c.h.b16 %v690
        %v1710 = vunpack.c.l.b16 %v691
        %v1711 = vunpack.c.h.b16 %v691
        %v1712 = vunpack.c.l.b16 %v692
        %v1713 = vunpack.c.h.b16 %v692
        %v1714 = vunpack.c.l.b16 %v693
        %v1715 = vunpack.c.l.b16 %v694
        %v1716 = vunpack.c.h.b16 %v694
        %v1717 = vunpack.c.l.b16 %v695
        %v1718 = vunpack.c.h.b16 %v695
        %v1719 = vunpack.c.l.b16 %v696
        %v1720 = vunpack.c.h.b16 %v696
        %v1721 = vunpack.c.l.b16 %v697
        %v1722 = vunpack.c.h.b16 %v697
        %v1723 = vunpack.c.l.b16 %v698
        %v1724 = vpack.c.b16 %v1157, %v1148
        %v1725 = vpack.c.b16 %v1158, %v1149
        %v1726 = vpack.c.b16 %v1159, %v1150
        %v1727 = vpack.c.b16 %v1160, %v1151
        %v1728 = vpack.c.b16 %v1161, %v1152
        %v1729 = vpack.c.b16 %v1162, %v1153
        %v1730 = vpack.c.b16 %v1163, %v1154
        %v1731 = vpack.c.b16 %v1164, %v1155
        %v1732 = vpack.c.b16 %v1165, %v1156
        %v1733 = vpack.c.b16 %v1175, %v1166
        %v1734 = vpack.c.b16 %v1176, %v1167
        %v1735 = vpack.c.b16 %v1177, %v1168
        %v1736 = vpack.c.b16 %v1178, %v1169
        %v1737 = vpack.c.b16 %v1179, %v1170
        %v1738 = vpack.c.b16 %v1180, %v1171
        %v1739 = vpack.c.b16 %v1181, %v1172
        %v1740 = vpack.c.b16 %v1182, %v1173
        %v1741 = vpack.c.b16 %v1183, %v1174
        %v1742 = vpack.c.b16 %v1193, %v1184
        %v1743 = vpack.c.b16 %v1194, %v1185
        %v1744 = vpack.c.b16 %v1195, %v1186
        %v1745 = vpack.c.b16 %v1196, %v1187
        %v1746 = vpack.c.b16 %v1197, %v1188
        %v1747 = vpack.c.b16 %v1198, %v1189
        %v1748 = vpack.c.b16 %v1199, %v1190
        %v1749 = vpack.c.b16 %v1200, %v1191
        %v1750 = vpack.c.b16 %v1201, %v1192
        %v1751 = vpack.c.b16 %v1211, %v1202
        %v1752 = vpack.c.b16 %v1212, %v1203
        %v1753 = vpack.c.b16 %v1213, %v1204
        %v1754 = vpack.c.b16 %v1214, %v1205
        %v1755 = vpack.c.b16 %v1215, %v1206
        %v1756 = vpack.c.b16 %v1216, %v1207
        %v1757 = vpack.c.b16 %v1217, %v1208
        %v1758 = vpack.c.b16 %v1218, %v1209
        %v1759 = vpack.c.b16 %v1219, %v1210
        %v1760 = vpack.c.b16 %v1229, %v1220
        %v1761 = vpack.c.b16 %v1230, %v1221
        %v1762 = vpack.c.b16 %v1231, %v1222
        %v1763 = vpack.c.b16 %v1232, %v1223
        %v1764 = vpack.c.b16 %v1233, %v1224
        %v1765 = vpack.c.b16 %v1234, %v1225
        %v1766 = vpack.c.b16 %v1235, %v1226
        %v1767 = vpack.c.b16 %v1236, %v1227
        %v1768 = vpack.c.b16 %v1237, %v1228
        %v1769 = vpack.c.b16 %v1247, %v1238
        %v1770 = vpack.c.b16 %v1248, %v1239
        %v1771 = vpack.c.b16 %v1249, %v1240
        %v1772 = vpack.c.b16 %v1250, %v1241
        %v1773 = vpack.c.b16 %v1251, %v1242
        %v1774 = vpack.c.b16 %v1252, %v1243
        %v1775 = vpack.c.b16 %v1253, %v1244
        %v1776 = vpack.c.b16 %v1254, %v1245
        %v1777 = vpack.c.b16 %v1255, %v1246
        %v1778 = vpack.c.b16 %v1265, %v1256
        %v1779 = vpack.c.b16 %v1266, %v1257
        %v1780 = vpack.c.b16 %v1267, %v1258
        %v1781 = vpack.c.b16 %v1268, %v1259
        %v1782 = vpack.c.b16 %v1269, %v1260
        %v1783 = vpack.c.b16 %v1270, %v1261
        %v1784 = vpack.c.b16 %v1271, %v1262
        %v1785 = vpack.c.b16 %v1272, %v1263
        %v1786 = vpack.c.b16 %v1273, %v1264
        %v1787 = vpack.c.b16 %v1283, %v1274
        %v1788 = vpack.c.b16 %v1284, %v1275
        %v1789 = vpack.c.b16 %v1285, %v1276
        %v1790 = vpack.c.b16 %v1286, %v1277
        %v1791 = vpack.c.b16 %v1287, %v1278
        %v1792 = vpack.c.b16 %v1288, %v1279
        %v1793 = vpack.c.b16 %v1289, %v1280
        %v1794 = vpack.c.b16 %v1290, %v1281
        %v1795 = vpack.c.b16 %v1291, %v1282
        %v1796 = vpack.c.b16 %v1301, %v1292
        %v1797 = vpack.c.b16 %v1302, %v1293
        %v1798 = vpack.c.b16 %v1303, %v1294
        %v1799 = vpack.c.b16 %v1304, %v1295
        %v1800 = vpack.c.b16 %v1305, %v1296
        %v1801 = vpack.c.b16 %v1306, %v1297
        %v1802 = vpack.c.b16 %v1307, %v1298
        %v1803 = vpack.c.b16 %v1308, %v1299
        %v1804 = vpack.c.b16 %v1309, %v1300
        %v1805 = vpack.c.b16 %v1319, %v1310
        %v1806 = vpack.c.b16 %v1320, %v1311
        %v1807 = vpack.c.b16 %v1321, %v1312
        %v1808 = vpack.c.b16 %v1322, %v1313
        %v1809 = vpack.c.b16 %v1323, %v1314
        %v1810 = vpack.c.b16 %v1324, %v1315
        %v1811 = vpack.c.b16 %v1325, %v1316
        %v1812 = vpack.c.b16 %v1326, %v1317
        %v1813 = vpack.c.b16 %v1327, %v1318
        %v1814 = vpack.c.b16 %v1337, %v1328
        %v1815 = vpack.c.b16 %v1338, %v1329
        %v1816 = vpack.c.b16 %v1339, %v1330
        %v1817 = vpack.c.b16 %v1340, %v1331
        %v1818 = vpack.c.b16 %v1341, %v1332
        %v1819 = vpack.c.b16 %v1342, %v1333
        %v1820 = vpack.c.b16 %v1343, %v1334
        %v1821 = vpack.c.b16 %v1344, %v1335
        %v1822 = vpack.c.b16 %v1345, %v1336
        %v1823 = vpack.c.b16 %v1355, %v1346
        %v1824 = vpack.c.b16 %v1356, %v1347
        %v1825 = vpack.c.b16 %v1357, %v1348
        %v1826 = vpack.c.b16 %v1358, %v1349
        %v1827 = vpack.c.b16 %v1359, %v1350
        %v1828 = vpack.c.b16 %v1360, %v1351
        %v1829 = vpack.c.b16 %v1361, %v1352
        %v1830 = vpack.c.b16 %v1362, %v1353
        %v1831 = vpack.c.b16 %v1363, %v1354
        %v1832 = vpack.c.b16 %v1373, %v1364
        %v1833 = vpack.c.b16 %v1374, %v1365
        %v1834 = vpack.c.b16 %v1375, %v1366
        %v1835 = vpack.c.b16 %v1376, %v1367
        %v1836 = vpack.c.b16 %v1377, %v1368
        %v1837 = vpack.c.b16 %v1378, %v1369
        %v1838 = vpack.c.b16 %v1379, %v1370
        %v1839 = vpack.c.b16 %v1380, %v1371
        %v1840 = vpack.c.b16 %v1381, %v1372
        %v1841 = vpack.c.b16 %v1391, %v1382
        %v1842 = vpack.c.b16 %v1392, %v1383
        %v1843 = vpack.c.b16 %v1393, %v1384
        %v1844 = vpack.c.b16 %v1394, %v1385
        %v1845 = vpack.c.b16 %v1395, %v1386
        %v1846 = vpack.c.b16 %v1396, %v1387
        %v1847 = vpack.c.b16 %v1397, %v1388
        %v1848 = vpack.c.b16 %v1398, %v1389
        %v1849 = vpack.c.b16 %v1399, %v1390
        %v1850 = vpack.c.b16 %v1409, %v1400
        %v1851 = vpack.c.b16 %v1410, %v1401
        %v1852 = vpack.c.b16 %v1411, %v1402
        %v1853 = vpack.c.b16 %v1412, %v1403
        %v1854 = vpack.c.b16 %v1413, %v1404
        %v1855 = vpack.c.b16 %v1414, %v1405
        %v1856 = vpack.c.b16 %v1415, %v1406
        %v1857 = vpack.c.b16 %v1416, %v1407
        %v1858 = vpack.c.b16 %v1417, %v1408
        %v1859 = vpack.c.b16 %v1427, %v1418
        %v1860 = vpack.c.b16 %v1428, %v1419
        %v1861 = vpack.c.b16 %v1429, %v1420
        %v1862 = vpack.c.b16 %v1430, %v1421
        %v1863 = vpack.c.b16 %v1431, %v1422
        %v1864 = vpack.c.b16 %v1432, %v1423
        %v1865 = vpack.c.b16 %v1433, %v1424
        %v1866 = vpack.c.b16 %v1434, %v1425
        %v1867 = vpack.c.b16 %v1435, %v1426
        %v1868 = vpack.c.b16 %v1445, %v1436
        %v1869 = vpack.c.b16 %v1446, %v1437
        %v1870 = vpack.c.b16 %v1447, %v1438
        %v1871 = vpack.c.b16 %v1448, %v1439
        %v1872 = vpack.c.b16 %v1449, %v1440
        %v1873 = vpack.c.b16 %v1450, %v1441
        %v1874 = vpack.c.b16 %v1451, %v1442
        %v1875 = vpack.c.b16 %v1452, %v1443
        %v1876 = vpack.c.b16 %v1453, %v1444
        %v1877 = vpack.c.b16 %v1463, %v1454
        %v1878 = vpack.c.b16 %v1464, %v1455
        %v1879 = vpack.c.b16 %v1465, %v1456
        %v1880 = vpack.c.b16 %v1466, %v1457
        %v1881 = vpack.c.b16 %v1467, %v1458
        %v1882 = vpack.c.b16 %v1468, %v1459
        %v1883 = vpack.c.b16 %v1469, %v1460
        %v1884 = vpack.c.b16 %v1470, %v1461
        %v1885 = vpack.c.b16 %v1471, %v1462
        %v1886 = vpack.c.b16 %v1481, %v1472
        %v1887 = vpack.c.b16 %v1482, %v1473
        %v1888 = vpack.c.b16 %v1483, %v1474
        %v1889 = vpack.c.b16 %v1484, %v1475
        %v1890 = vpack.c.b16 %v1485, %v1476
        %v1891 = vpack.c.b16 %v1486, %v1477
        %v1892 = vpack.c.b16 %v1487, %v1478
        %v1893 = vpack.c.b16 %v1488, %v1479
        %v1894 = vpack.c.b16 %v1489, %v1480
        %v1895 = vpack.c.b16 %v1499, %v1490
        %v1896 = vpack.c.b16 %v1500, %v1491
        %v1897 = vpack.c.b16 %v1501, %v1492
        %v1898 = vpack.c.b16 %v1502, %v1493
        %v1899 = vpack.c.b16 %v1503, %v1494
        %v1900 = vpack.c.b16 %v1504, %v1495
        %v1901 = vpack.c.b16 %v1505, %v1496
        %v1902 = vpack.c.b16 %v1506, %v1497
        %v1903 = vpack.c.b16 %v1507, %v1498
        %v1904 = vpack.c.b16 %v1517, %v1508
        %v1905 = vpack.c.b16 %v1518, %v1509
        %v1906 = vpack.c.b16 %v1519, %v1510
        %v1907 = vpack.c.b16 %v1520, %v1511
        %v1908 = vpack.c.b16 %v1521, %v1512
        %v1909 = vpack.c.b16 %v1522, %v1513
        %v1910 = vpack.c.b16 %v1523, %v1514
        %v1911 = vpack.c.b16 %v1524, %v1515
        %v1912 = vpack.c.b16 %v1525, %v1516
        %v1913 = vpack.c.b16 %v1535, %v1526
        %v1914 = vpack.c.b16 %v1536, %v1527
        %v1915 = vpack.c.b16 %v1537, %v1528
        %v1916 = vpack.c.b16 %v1538, %v1529
        %v1917 = vpack.c.b16 %v1539, %v1530
        %v1918 = vpack.c.b16 %v1540, %v1531
        %v1919 = vpack.c.b16 %v1541, %v1532
        %v1920 = vpack.c.b16 %v1542, %v1533
        %v1921 = vpack.c.b16 %v1543, %v1534
        %v1922 = vpack.c.b16 %v1553, %v1544
        %v1923 = vpack.c.b16 %v1554, %v1545
        %v1924 = vpack.c.b16 %v1555, %v1546
        %v1925 = vpack.c.b16 %v1556, %v1547
        %v1926 = vpack.c.b16 %v1557, %v1548
        %v1927 = vpack.c.b16 %v1558, %v1549
        %v1928 = vpack.c.b16 %v1559, %v1550
        %v1929 = vpack.c.b16 %v1560, %v1551
        %v1930 = vpack.c.b16 %v1561, %v1552
        %v1931 = vpack.c.b16 %v1571, %v1562
        %v1932 = vpack.c.b16 %v1572, %v1563
        %v1933 = vpack.c.b16 %v1573, %v1564
        %v1934 = vpack.c.b16 %v1574, %v1565
        %v1935 = vpack.c.b16 %v1575, %v1566
        %v1936 = vpack.c.b16 %v1576, %v1567
        %v1937 = vpack.c.b16 %v1577, %v1568
        %v1938 = vpack.c.b16 %v1578, %v1569
        %v1939 = vpack.c.b16 %v1579, %v1570
        %v1940 = vpack.c.b16 %v1589, %v1580
        %v1941 = vpack.c.b16 %v1590, %v1581
        %v1942 = vpack.c.b16 %v1591, %v1582
        %v1943 = vpack.c.b16 %v1592, %v1583
        %v1944 = vpack.c.b16 %v1593, %v1584
        %v1945 = vpack.c.b16 %v1594, %v1585
        %v1946 = vpack.c.b16 %v1595, %v1586
        %v1947 = vpack.c.b16 %v1596, %v1587
        %v1948 = vpack.c.b16 %v1597, %v1588
        %v1949 = vpack.c.b16 %v1607, %v1598
        %v1950 = vpack.c.b16 %v1608, %v1599
        %v1951 = vpack.c.b16 %v1609, %v1600
        %v1952 = vpack.c.b16 %v1610, %v1601
        %v1953 = vpack.c.b16 %v1611, %v1602
        %v1954 = vpack.c.b16 %v1612, %v1603
        %v1955 = vpack.c.b16 %v1613, %v1604
        %v1956 = vpack.c.b16 %v1614, %v1605
        %v1957 = vpack.c.b16 %v1615, %v1606
        %v1958 = vpack.c.b16 %v1625, %v1616
        %v1959 = vpack.c.b16 %v1626, %v1617
        %v1960 = vpack.c.b16 %v1627, %v1618
        %v1961 = vpack.c.b16 %v1628, %v1619
        %v1962 = vpack.c.b16 %v1629, %v1620
        %v1963 = vpack.c.b16 %v1630, %v1621
        %v1964 = vpack.c.b16 %v1631, %v1622
        %v1965 = vpack.c.b16 %v1632, %v1623
        %v1966 = vpack.c.b16 %v1633, %v1624
        %v1967 = vpack.c.b16 %v1643, %v1634
        %v1968 = vpack.c.b16 %v1644, %v1635
        %v1969 = vpack.c.b16 %v1645, %v1636
        %v1970 = vpack.c.b16 %v1646, %v1637
        %v1971 = vpack.c.b16 %v1647, %v1638
        %v1972 = vpack.c.b16 %v1648, %v1639
        %v1973 = vpack.c.b16 %v1649, %v1640
        %v1974 = vpack.c.b16 %v1650, %v1641
        %v1975 = vpack.c.b16 %v1651, %v1642
        %v1976 = vpack.c.b16 %v1661, %v1652
        %v1977 = vpack.c.b16 %v1662, %v1653
        %v1978 = vpack.c.b16 %v1663, %v1654
        %v1979 = vpack.c.b16 %v1664, %v1655
        %v1980 = vpack.c.b16 %v1665, %v1656
        %v1981 = vpack.c.b16 %v1666, %v1657
        %v1982 = vpack.c.b16 %v1667, %v1658
        %v1983 = vpack.c.b16 %v1668, %v1659
        %v1984 = vpack.c.b16 %v1669, %v1660
        %v1985 = vpack.c.b16 %v1679, %v1670
        %v1986 = vpack.c.b16 %v1680, %v1671
        %v1987 = vpack.c.b16 %v1681, %v1672
        %v1988 = vpack.c.b16 %v1682, %v1673
        %v1989 = vpack.c.b16 %v1683, %v1674
        %v1990 = vpack.c.b16 %v1684, %v1675
        %v1991 = vpack.c.b16 %v1685, %v1676
        %v1992 = vpack.c.b16 %v1686, %v1677
        %v1993 = vpack.c.b16 %v1687, %v1678
        %v1994 = vpack.c.b16 %v1697, %v1688
        %v1995 = vpack.c.b16 %v1698, %v1689
        %v1996 = vpack.c.b16 %v1699, %v1690
        %v1997 = vpack.c.b16 %v1700, %v1691
        %v1998 = vpack.c.b16 %v1701, %v1692
        %v1999 = vpack.c.b16 %v1702, %v1693
        %v2000 = vpack.c.b16 %v1703, %v1694
        %v2001 = vpack.c.b16 %v1704, %v1695
        %v2002 = vpack.c.b16 %v1705, %v1696
        %v2003 = vpack.c.b16 %v1715, %v1706
        %v2004 = vpack.c.b16 %v1716, %v1707
        %v2005 = vpack.c.b16 %v1717, %v1708
        %v2006 = vpack.c.b16 %v1718, %v1709
        %v2007 = vpack.c.b16 %v1719, %v1710
        %v2008 = vpack.c.b16 %v1720, %v1711
        %v2009 = vpack.c.b16 %v1721, %v1712
        %v2010 = vpack.c.b16 %v1722, %v1713
        %v2011 = vpack.c.b16 %v1723, %v1714
        %v2397 = vunpack.c.l.b16 %v699
        %v2398 = vunpack.c.l.b16 %v700
        %v2399 = vunpack.c.l.b16 %v701
        %v2400 = vunpack.c.l.b16 %v702
        %v2401 = vunpack.c.l.b16 %v703
        %v2402 = vunpack.c.l.b16 %v704
        %v2403 = vunpack.c.l.b16 %v705
        %v2404 = vunpack.c.l.b16 %v706
        %v2405 = vunpack.c.l.b16 %v707
        %v2406 = vunpack.c.l.b16 %v708
        %v2407 = vunpack.c.l.b16 %v709
        %v2408 = vunpack.c.l.b16 %v710
        %v2409 = vunpack.c.l.b16 %v711
        %v2410 = vunpack.c.l.b16 %v712
        %v2411 = vunpack.c.l.b16 %v713
        %v2412 = vunpack.c.l.b16 %v714
        %v2413 = vunpack.c.l.b16 %v715
        %v2414 = vunpack.c.l.b16 %v716
        %v2415 = vunpack.c.l.b16 %v717
        %v2416 = vunpack.c.l.b16 %v718
        %v2417 = vunpack.c.l.b16 %v719
        %v2418 = vunpack.c.l.b16 %v720
        %v2419 = vunpack.c.l.b16 %v721
        %v2420 = vunpack.c.l.b16 %v722
        %v2421 = vunpack.c.l.b16 %v723
        %v2422 = vunpack.c.l.b16 %v724
        %v2423 = vunpack.c.l.b16 %v725
        %v2424 = vunpack.c.l.b16 %v726
        %v2425 = vunpack.c.l.b16 %v727
        %v2426 = vunpack.c.l.b16 %v728
        %v2427 = vunpack.c.l.b16 %v729
        %v2428 = vunpack.c.l.b16 %v730
        %v2429 = vunpack.c.l.b16 %v731
        %v2430 = vunpack.c.l.b16 %v732
        %v2431 = vunpack.c.l.b16 %v733
        %v2432 = vunpack.c.l.b16 %v734
        %v2433 = vunpack.c.l.b16 %v735
        %v2434 = vunpack.c.l.b16 %v736
        %v2435 = vunpack.c.l.b16 %v737
        %v2436 = vunpack.c.l.b16 %v738
        %v2437 = vunpack.c.l.b16 %v739
        %v2438 = vunpack.c.l.b16 %v740
        %v2439 = vunpack.c.l.b16 %v741
        %v2440 = vunpack.c.l.b16 %v742
        %v2441 = vunpack.c.l.b16 %v743
        %v2442 = vunpack.c.l.b16 %v744
        %v2443 = vunpack.c.l.b16 %v745
        %v2444 = vunpack.c.l.b16 %v746
        %v2445 = vunpack.c.l.b16 %v747
        %v2446 = vunpack.c.l.b16 %v748
        %v2447 = vunpack.c.l.b16 %v749
        %v2448 = vunpack.c.l.b16 %v750
        %v2449 = vunpack.c.l.b16 %v751
        %v2450 = vunpack.c.l.b16 %v752
        %v2451 = vunpack.c.l.b16 %v753
        %v2452 = vunpack.c.l.b16 %v754
        %v2453 = vunpack.c.l.b16 %v755
        %v2454 = vunpack.c.l.b16 %v756
        %v2455 = vunpack.c.l.b16 %v757
        %v2456 = vunpack.c.l.b16 %v758
        %v2457 = vunpack.c.l.b16 %v759
        %v2458 = vunpack.c.l.b16 %v760
        %v2459 = vunpack.c.l.b16 %v761
        %v2460 = vunpack.c.l.b16 %v762
        %v2461 = vunpack.c.l.b16 %v763
        %v2462 = vunpack.c.l.b16 %v764
        %v2463 = vunpack.c.l.b16 %v765
        %v2464 = vunpack.c.l.b16 %v766
        %v2465 = vunpack.c.l.b16 %v767
        %v2466 = vunpack.c.l.b16 %v768
        %v2467 = vunpack.c.l.b16 %v769
        %v2468 = vunpack.c.l.b16 %v770
        %v2469 = vunpack.c.l.b16 %v771
        %v2470 = vunpack.c.l.b16 %v772
        %v2471 = vunpack.c.l.b16 %v773
        %v2472 = vunpack.c.l.b16 %v774
        %v2473 = vunpack.c.l.b16 %v775
        %v2474 = vunpack.c.l.b16 %v776
        %v2475 = vunpack.c.l.b16 %v777
        %v2476 = vunpack.c.l.b16 %v778
        %v2477 = vunpack.c.l.b16 %v779
        %v2478 = vunpack.c.l.b16 %v780
        %v2479 = vunpack.c.l.b16 %v781
        %v2480 = vunpack.c.l.b16 %v782
        %v2481 = vunpack.c.l.b16 %v783
        %v2482 = vunpack.c.l.b16 %v784
        %v2483 = vunpack.c.l.b16 %v785
        %v2484 = vunpack.c.l.b16 %v786
        %v2485 = vunpack.c.l.b16 %v787
        %v2486 = vunpack.c.l.b16 %v788
        %v2487 = vunpack.c.l.b16 %v789
        %v2488 = vunpack.c.l.b16 %v790
        %v2489 = vunpack.c.l.b16 %v791
        %v2490 = vunpack.c.l.b16 %v792
        %v2491 = vunpack.c.l.b16 %v793
        %v2492 = vunpack.c.l.b16 %v794
        %v2493 = vunpack.c.l.b16 %v795
        %v2494 = vunpack.c.l.b16 %v796
        %v2495 = vunpack.c.l.b16 %v797
        %v2496 = vunpack.c.l.b16 %v798
        %v2497 = vunpack.c.l.b16 %v799
        %v2498 = vunpack.c.l.b16 %v800
        %v2499 = vunpack.c.l.b16 %v801
        %v2500 = vunpack.c.l.b16 %v802
        %v2501 = vunpack.c.l.b16 %v803
        %v2502 = vunpack.c.l.b16 %v804
        %v2503 = vunpack.c.l.b16 %v805
        %v2504 = vunpack.c.l.b16 %v806
        %v2505 = vunpack.c.l.b16 %v807
        %v2506 = vunpack.c.l.b16 %v808
        %v2507 = vunpack.c.l.b16 %v809
        %v2508 = vunpack.c.l.b16 %v810
        %v2509 = vunpack.c.l.b16 %v811
        %v2510 = vunpack.c.l.b16 %v812
        %v2511 = vunpack.c.l.b16 %v813
        %v2512 = vunpack.c.l.b16 %v814
        %v2513 = vunpack.c.l.b16 %v815
        %v2514 = vunpack.c.l.b16 %v816
        %v2515 = vunpack.c.l.b16 %v817
        %v2516 = vunpack.c.l.b16 %v818
        %v2517 = vunpack.c.l.b16 %v819
        %v2518 = vunpack.c.l.b16 %v820
        %v2519 = vunpack.c.l.b16 %v821
        %v2520 = vunpack.c.l.b16 %v822
        %v2521 = vunpack.c.l.b16 %v823
        %v2522 = vunpack.c.l.b16 %v824
        %v2523 = vunpack.c.l.b16 %v825
        %v2524 = vunpack.c.l.b16 %v826
        %v2525 = vunpack.c.l.b16 %v827
        %v2526 = vpack.c.b16 %v2398, %v2397
        %v2527 = vpack.c.b16 %v2400, %v2399
        %v2528 = vpack.c.b16 %v2402, %v2401
        %v2529 = vpack.c.b16 %v2404, %v2403
        %v2530 = vpack.c.b16 %v2406, %v2405
        %v2531 = vpack.c.b16 %v2408, %v2407
        %v2532 = vpack.c.b16 %v2410, %v2409
        %v2533 = vpack.c.b16 %v2412, %v2411
        %v2534 = vpack.c.b16 %v2414, %v2413
        %v2535 = vpack.c.b16 %v2416, %v2415
        %v2536 = vpack.c.b16 %v2418, %v2417
        %v2537 = vpack.c.b16 %v2420, %v2419
        %v2538 = vpack.c.b16 %v2422, %v2421
        %v2539 = vpack.c.b16 %v2424, %v2423
        %v2540 = vpack.c.b16 %v2426, %v2425
        %v2541 = vpack.c.b16 %v2428, %v2427
        %v2542 = vpack.c.b16 %v2430, %v2429
        %v2543 = vpack.c.b16 %v2432, %v2431
        %v2544 = vpack.c.b16 %v2434, %v2433
        %v2545 = vpack.c.b16 %v2436, %v2435
        %v2546 = vpack.c.b16 %v2438, %v2437
        %v2547 = vpack.c.b16 %v2440, %v2439
        %v2548 = vpack.c.b16 %v2442, %v2441
        %v2549 = vpack.c.b16 %v2444, %v2443
        %v2550 = vpack.c.b16 %v2446, %v2445
        %v2551 = vpack.c.b16 %v2448, %v2447
        %v2552 = vpack.c.b16 %v2450, %v2449
        %v2553 = vpack.c.b16 %v2452, %v2451
        %v2554 = vpack.c.b16 %v2454, %v2453
        %v2555 = vpack.c.b16 %v2456, %v2455
        %v2556 = vpack.c.b16 %v2458, %v2457
        %v2557 = vpack.c.b16 %v2460, %v2459
        %v2558 = vpack.c.b16 %v2462, %v2461
        %v2559 = vpack.c.b16 %v2464, %v2463
        %v2560 = vpack.c.b16 %v2466, %v2465
        %v2561 = vpack.c.b16 %v2468, %v2467
        %v2562 = vpack.c.b16 %v2470, %v2469
        %v2563 = vpack.c.b16 %v2472, %v2471
        %v2564 = vpack.c.b16 %v2474, %v2473
        %v2565 = vpack.c.b16 %v2476, %v2475
        %v2566 = vpack.c.b16 %v2478, %v2477
        %v2567 = vpack.c.b16 %v2480, %v2479
        %v2568 = vpack.c.b16 %v2482, %v2481
        %v2569 = vpack.c.b16 %v2484, %v2483
        %v2570 = vpack.c.b16 %v2486, %v2485
        %v2571 = vpack.c.b16 %v2488, %v2487
        %v2572 = vpack.c.b16 %v2490, %v2489
        %v2573 = vpack.c.b16 %v2492, %v2491
        %v2574 = vpack.c.b16 %v2494, %v2493
        %v2575 = vpack.c.b16 %v2496, %v2495
        %v2576 = vpack.c.b16 %v2498, %v2497
        %v2577 = vpack.c.b16 %v2500, %v2499
        %v2578 = vpack.c.b16 %v2502, %v2501
        %v2579 = vpack.c.b16 %v2504, %v2503
        %v2580 = vpack.c.b16 %v2506, %v2505
        %v2581 = vpack.c.b16 %v2508, %v2507
        %v2582 = vpack.c.b16 %v2510, %v2509
        %v2583 = vpack.c.b16 %v2512, %v2511
        %v2584 = vpack.c.b16 %v2514, %v2513
        %v2585 = vpack.c.b16 %v2516, %v2515
        %v2586 = vpack.c.b16 %v2518, %v2517
        %v2587 = vpack.c.b16 %v2520, %v2519
        %v2588 = vpack.c.b16 %v2522, %v2521
        %v2589 = vpack.c.b16 %v2524, %v2523
        %v2590 = vpack.c.b16 %v2525, %v2525
        %vm2655 = vcmask 39936
        %v2657 = vsel %vm2655, %v1732, 0
        %v2660 = vsel %vm2655, %v1741, 0
        %v2663 = vsel %vm2655, %v1750, 0
        %v2666 = vsel %vm2655, %v1759, 0
        %v2669 = vsel %vm2655, %v1768, 0
        %v2672 = vsel %vm2655, %v1777, 0
        %v2675 = vsel %vm2655, %v1786, 0
        %v2678 = vsel %vm2655, %v1795, 0
        %v2681 = vsel %vm2655, %v1804, 0
        %v2684 = vsel %vm2655, %v1813, 0
        %v2687 = vsel %vm2655, %v1822, 0
        %v2690 = vsel %vm2655, %v1831, 0
        %v2693 = vsel %vm2655, %v1840, 0
        %v2696 = vsel %vm2655, %v1849, 0
        %v2699 = vsel %vm2655, %v1858, 0
        %v2702 = vsel %vm2655, %v1867, 0
        %v2705 = vsel %vm2655, %v1876, 0
        %v2708 = vsel %vm2655, %v1885, 0
        %v2711 = vsel %vm2655, %v1894, 0
        %v2714 = vsel %vm2655, %v1903, 0
        %v2717 = vsel %vm2655, %v1912, 0
        %v2720 = vsel %vm2655, %v1921, 0
        %v2723 = vsel %vm2655, %v1930, 0
        %v2726 = vsel %vm2655, %v1939, 0
        %v2729 = vsel %vm2655, %v1948, 0
        %v2732 = vsel %vm2655, %v1957, 0
        %v2735 = vsel %vm2655, %v1966, 0
        %v2738 = vsel %vm2655, %v1975, 0
        %v2741 = vsel %vm2655, %v1984, 0
        %v2744 = vsel %vm2655, %v1993, 0
        %v2747 = vsel %vm2655, %v2002, 0
        %v2750 = vsel %vm2655, %v2011, 0
        %vm2752 = vcmask 1041408
        %vm2753 = vcmask 1042432
        %v2754 = vsel %vm2752, 4294967295, 65535
        %v2755 = vsel %vm2753, %v2754, 0
        %v2757 = vand.u32 %v2590, %v2755
        %2759 = vmatprep.subr.bf16.mxu0 0
        %2760 = vmatpush1.bf16.msra.mxu0 %v2526
        %2761 = vmatprep.subr.bf16.mxu0 0
        %2762 = vmatpush1.bf16.msra.mxu0 %v2527
        %2763 = vmatprep.subr.bf16.mxu0 0
        %2764 = vmatpush1.bf16.msra.mxu0 %v2528
        %2765 = vmatprep.subr.bf16.mxu0 0
        %2766 = vmatpush1.bf16.msra.mxu0 %v2529
        %2767 = vmatprep.subr.bf16.mxu0 0
        %2768 = vmatpush1.bf16.msra.mxu0 %v2530
        %2769 = vmatprep.subr.bf16.mxu0 0
        %2770 = vmatpush1.bf16.msra.mxu0 %v2531
        %2771 = vmatprep.subr.bf16.mxu0 0
        %2772 = vmatpush1.bf16.msra.mxu0 %v2532
        %2773 = vmatprep.subr.bf16.mxu0 0
        %2774 = vmatpush1.bf16.msra.mxu0 %v2533
        %2775 = vmatprep.subr.bf16.mxu0 0
        %2776 = vmatpush1.bf16.msra.mxu0 %v2534
        %2777 = vmatprep.subr.bf16.mxu0 0
        %2778 = vmatpush1.bf16.msra.mxu0 %v2535
        %2779 = vmatprep.subr.bf16.mxu0 0
        %2780 = vmatpush1.bf16.msra.mxu0 %v2536
        %2781 = vmatprep.subr.bf16.mxu0 0
        %2782 = vmatpush1.bf16.msra.mxu0 %v2537
        %2783 = vmatprep.subr.bf16.mxu0 0
        %2784 = vmatpush1.bf16.msra.mxu0 %v2538
        %2785 = vmatprep.subr.bf16.mxu0 0
        %2786 = vmatpush1.bf16.msra.mxu0 %v2539
        %2787 = vmatprep.subr.bf16.mxu0 0
        %2788 = vmatpush1.bf16.msra.mxu0 %v2540
        %2789 = vmatprep.subr.bf16.mxu0 0
        %2790 = vmatpush1.bf16.msra.mxu0 %v2541
        %2791 = vmatprep.mubr.bf16.mxu0 %v1725
        %2792 = vmatmul.mubr.bf16.gmra.mrb[0].mxu0 %v1724
        %v2793 = vpop.f32.mrb[0].mxu0
        %v2794 = vadd.f32 0.0, %v2793
        %v2795 = vpop.f32.mrb[0].mxu0
        %v2796 = vpop.f32.mrb[0].mxu0
        %v2797 = vadd.f32 0.0, %v2796
        %v2798 = vpop.f32.mrb[0].mxu0
        %2799 = vmatprep.mubr.bf16.mxu0 %v1734
        %2800 = vmatmul.mubr.bf16.gmra.mrb[0].mxu0 %v1733
        %v2801 = vpop.f32.mrb[0].mxu0
        %v2802 = vadd.f32 0.0, %v2801
        %v2803 = vpop.f32.mrb[0].mxu0
        %v2804 = vpop.f32.mrb[0].mxu0
        %v2805 = vadd.f32 0.0, %v2804
        %v2806 = vpop.f32.mrb[0].mxu0
        %2807 = vmatprep.mubr.bf16.mxu0 %v1743
        %2808 = vmatmul.mubr.bf16.gmra.mrb[0].mxu0 %v1742
        %v2809 = vpop.f32.mrb[0].mxu0
        %v2810 = vadd.f32 0.0, %v2809
        %v2811 = vpop.f32.mrb[0].mxu0
        %v2812 = vpop.f32.mrb[0].mxu0
        %v2813 = vadd.f32 0.0, %v2812
        %v2814 = vpop.f32.mrb[0].mxu0
        %2815 = vmatprep.mubr.bf16.mxu0 %v1752
        %2816 = vmatmul.mubr.bf16.gmra.mrb[0].mxu0 %v1751
        %v2817 = vpop.f32.mrb[0].mxu0
        %v2818 = vadd.f32 0.0, %v2817
        %v2819 = vpop.f32.mrb[0].mxu0
        %v2820 = vpop.f32.mrb[0].mxu0
        %v2821 = vadd.f32 0.0, %v2820
        %v2822 = vpop.f32.mrb[0].mxu0
        %2823 = vmatprep.mubr.bf16.mxu0 %v1761
        %2824 = vmatmul.mubr.bf16.gmra.mrb[0].mxu0 %v1760
        %v2825 = vpop.f32.mrb[0].mxu0
        %v2826 = vadd.f32 0.0, %v2825
        %v2827 = vpop.f32.mrb[0].mxu0
        %v2828 = vpop.f32.mrb[0].mxu0
        %v2829 = vadd.f32 0.0, %v2828
        %v2830 = vpop.f32.mrb[0].mxu0
        %2831 = vmatprep.mubr.bf16.mxu0 %v1770
        %2832 = vmatmul.mubr.bf16.gmra.mrb[0].mxu0 %v1769
        %v2833 = vpop.f32.mrb[0].mxu0
        %v2834 = vadd.f32 0.0, %v2833
        %v2835 = vpop.f32.mrb[0].mxu0
        %v2836 = vpop.f32.mrb[0].mxu0
        %v2837 = vadd.f32 0.0, %v2836
        %v2838 = vpop.f32.mrb[0].mxu0
        %2839 = vmatprep.mubr.bf16.mxu0 %v1779
        %2840 = vmatmul.mubr.bf16.gmra.mrb[0].mxu0 %v1778
        %v2841 = vpop.f32.mrb[0].mxu0
        %v2842 = vadd.f32 0.0, %v2841
        %v2843 = vpop.f32.mrb[0].mxu0
        %v2844 = vpop.f32.mrb[0].mxu0
        %v2845 = vadd.f32 0.0, %v2844
        %v2846 = vpop.f32.mrb[0].mxu0
        %2847 = vmatprep.mubr.bf16.mxu0 %v1788
        %2848 = vmatmul.mubr.bf16.gmra.mrb[0].mxu0 %v1787
        %v2849 = vpop.f32.mrb[0].mxu0
        %v2850 = vadd.f32 0.0, %v2849
        %v2851 = vpop.f32.mrb[0].mxu0
        %v2852 = vpop.f32.mrb[0].mxu0
        %v2853 = vadd.f32 0.0, %v2852
        %v2854 = vpop.f32.mrb[0].mxu0
        %2855 = vmatprep.mubr.bf16.mxu0 %v1797
        %2856 = vmatmul.mubr.bf16.gmra.mrb[0].mxu0 %v1796
        %v2857 = vpop.f32.mrb[0].mxu0
        %v2858 = vadd.f32 0.0, %v2857
        %v2859 = vpop.f32.mrb[0].mxu0
        %v2860 = vpop.f32.mrb[0].mxu0
        %v2861 = vadd.f32 0.0, %v2860
        %v2862 = vpop.f32.mrb[0].mxu0
        %2863 = vmatprep.mubr.bf16.mxu0 %v1806
        %2864 = vmatmul.mubr.bf16.gmra.mrb[0].mxu0 %v1805
        %v2865 = vpop.f32.mrb[0].mxu0
        %v2866 = vadd.f32 0.0, %v2865
        %v2867 = vpop.f32.mrb[0].mxu0
        %v2868 = vpop.f32.mrb[0].mxu0
        %v2869 = vadd.f32 0.0, %v2868
        %v2870 = vpop.f32.mrb[0].mxu0
        %2871 = vmatprep.mubr.bf16.mxu0 %v1815
        %2872 = vmatmul.mubr.bf16.gmra.mrb[0].mxu0 %v1814
        %v2873 = vpop.f32.mrb[0].mxu0
        %v2874 = vadd.f32 0.0, %v2873
        %v2875 = vpop.f32.mrb[0].mxu0
        %v2876 = vpop.f32.mrb[0].mxu0
        %v2877 = vadd.f32 0.0, %v2876
        %v2878 = vpop.f32.mrb[0].mxu0
        %2879 = vmatprep.mubr.bf16.mxu0 %v1824
        %2880 = vmatmul.mubr.bf16.gmra.mrb[0].mxu0 %v1823
        %v2881 = vpop.f32.mrb[0].mxu0
        %v2882 = vadd.f32 0.0, %v2881
        %v2883 = vpop.f32.mrb[0].mxu0
        %v2884 = vpop.f32.mrb[0].mxu0
        %v2885 = vadd.f32 0.0, %v2884
        %v2886 = vpop.f32.mrb[0].mxu0
        %2887 = vmatprep.mubr.bf16.mxu0 %v1833
        %2888 = vmatmul.mubr.bf16.gmra.mrb[0].mxu0 %v1832
        %v2889 = vpop.f32.mrb[0].mxu0
        %v2890 = vadd.f32 0.0, %v2889
        %v2891 = vpop.f32.mrb[0].mxu0
        %v2892 = vpop.f32.mrb[0].mxu0
        %v2893 = vadd.f32 0.0, %v2892
        %v2894 = vpop.f32.mrb[0].mxu0
        %2895 = vmatprep.mubr.bf16.mxu0 %v1842
        %2896 = vmatmul.mubr.bf16.gmra.mrb[0].mxu0 %v1841
        %v2897 = vpop.f32.mrb[0].mxu0
        %v2898 = vadd.f32 0.0, %v2897
        %v2899 = vpop.f32.mrb[0].mxu0
        %v2900 = vpop.f32.mrb[0].mxu0
        %v2901 = vadd.f32 0.0, %v2900
        %v2902 = vpop.f32.mrb[0].mxu0
        %2903 = vmatprep.mubr.bf16.mxu0 %v1851
        %2904 = vmatmul.mubr.bf16.gmra.mrb[0].mxu0 %v1850
        %v2905 = vpop.f32.mrb[0].mxu0
        %v2906 = vadd.f32 0.0, %v2905
        %v2907 = vpop.f32.mrb[0].mxu0
        %v2908 = vpop.f32.mrb[0].mxu0
        %v2909 = vadd.f32 0.0, %v2908
        %v2910 = vpop.f32.mrb[0].mxu0
        %2911 = vmatprep.mubr.bf16.mxu0 %v1860
        %2912 = vmatmul.mubr.bf16.gmra.mrb[0].mxu0 %v1859
        %v2913 = vpop.f32.mrb[0].mxu0
        %v2914 = vadd.f32 0.0, %v2913
        %v2915 = vpop.f32.mrb[0].mxu0
        %v2916 = vpop.f32.mrb[0].mxu0
        %v2917 = vadd.f32 0.0, %v2916
        %v2918 = vpop.f32.mrb[0].mxu0
        %2919 = vmatprep.mubr.bf16.mxu0 %v1869
        %2920 = vmatmul.mubr.bf16.gmra.mrb[0].mxu0 %v1868
        %v2921 = vpop.f32.mrb[0].mxu0
        %v2922 = vadd.f32 0.0, %v2921
        %v2923 = vpop.f32.mrb[0].mxu0
        %v2924 = vpop.f32.mrb[0].mxu0
        %v2925 = vadd.f32 0.0, %v2924
        %v2926 = vpop.f32.mrb[0].mxu0
        %2927 = vmatprep.mubr.bf16.mxu0 %v1878
        %2928 = vmatmul.mubr.bf16.gmra.mrb[0].mxu0 %v1877
        %v2929 = vpop.f32.mrb[0].mxu0
        %v2930 = vadd.f32 0.0, %v2929
        %v2931 = vpop.f32.mrb[0].mxu0
        %v2932 = vpop.f32.mrb[0].mxu0
        %v2933 = vadd.f32 0.0, %v2932
        %v2934 = vpop.f32.mrb[0].mxu0
        %2935 = vmatprep.mubr.bf16.mxu0 %v1887
        %2936 = vmatmul.mubr.bf16.gmra.mrb[0].mxu0 %v1886
        %v2937 = vpop.f32.mrb[0].mxu0
        %v2938 = vadd.f32 0.0, %v2937
        %v2939 = vpop.f32.mrb[0].mxu0
        %v2940 = vpop.f32.mrb[0].mxu0
        %v2941 = vadd.f32 0.0, %v2940
        %v2942 = vpop.f32.mrb[0].mxu0
        %2943 = vmatprep.mubr.bf16.mxu0 %v1896
        %2944 = vmatmul.mubr.bf16.gmra.mrb[0].mxu0 %v1895
        %v2945 = vpop.f32.mrb[0].mxu0
        %v2946 = vadd.f32 0.0, %v2945
        %v2947 = vpop.f32.mrb[0].mxu0
        %v2948 = vpop.f32.mrb[0].mxu0
        %v2949 = vadd.f32 0.0, %v2948
        %v2950 = vpop.f32.mrb[0].mxu0
        %2951 = vmatprep.mubr.bf16.mxu0 %v1905
        %2952 = vmatmul.mubr.bf16.gmra.mrb[0].mxu0 %v1904
        %v2953 = vpop.f32.mrb[0].mxu0
        %v2954 = vadd.f32 0.0, %v2953
        %v2955 = vpop.f32.mrb[0].mxu0
        %v2956 = vpop.f32.mrb[0].mxu0
        %v2957 = vadd.f32 0.0, %v2956
        %v2958 = vpop.f32.mrb[0].mxu0
        %2959 = vmatprep.mubr.bf16.mxu0 %v1914
        %2960 = vmatmul.mubr.bf16.gmra.mrb[0].mxu0 %v1913
        %v2961 = vpop.f32.mrb[0].mxu0
        %v2962 = vadd.f32 0.0, %v2961
        %v2963 = vpop.f32.mrb[0].mxu0
        %v2964 = vpop.f32.mrb[0].mxu0
        %v2965 = vadd.f32 0.0, %v2964
        %v2966 = vpop.f32.mrb[0].mxu0
        %2967 = vmatprep.mubr.bf16.mxu0 %v1923
        %2968 = vmatmul.mubr.bf16.gmra.mrb[0].mxu0 %v1922
        %v2969 = vpop.f32.mrb[0].mxu0
        %v2970 = vadd.f32 0.0, %v2969
        %v2971 = vpop.f32.mrb[0].mxu0
        %v2972 = vpop.f32.mrb[0].mxu0
        %v2973 = vadd.f32 0.0, %v2972
        %v2974 = vpop.f32.mrb[0].mxu0
        %2975 = vmatprep.mubr.bf16.mxu0 %v1932
        %2976 = vmatmul.mubr.bf16.gmra.mrb[0].mxu0 %v1931
        %v2977 = vpop.f32.mrb[0].mxu0
        %v2978 = vadd.f32 0.0, %v2977
        %v2979 = vpop.f32.mrb[0].mxu0
        %v2980 = vpop.f32.mrb[0].mxu0
        %v2981 = vadd.f32 0.0, %v2980
        %v2982 = vpop.f32.mrb[0].mxu0
        %2983 = vmatprep.mubr.bf16.mxu0 %v1941
        %2984 = vmatmul.mubr.bf16.gmra.mrb[0].mxu0 %v1940
        %v2985 = vpop.f32.mrb[0].mxu0
        %v2986 = vadd.f32 0.0, %v2985
        %v2987 = vpop.f32.mrb[0].mxu0
        %v2988 = vpop.f32.mrb[0].mxu0
        %v2989 = vadd.f32 0.0, %v2988
        %v2990 = vpop.f32.mrb[0].mxu0
        %2991 = vmatprep.mubr.bf16.mxu0 %v1950
        %2992 = vmatmul.mubr.bf16.gmra.mrb[0].mxu0 %v1949
        %v2993 = vpop.f32.mrb[0].mxu0
        %v2994 = vadd.f32 0.0, %v2993
        %v2995 = vpop.f32.mrb[0].mxu0
        %v2996 = vpop.f32.mrb[0].mxu0
        %v2997 = vadd.f32 0.0, %v2996
        %v2998 = vpop.f32.mrb[0].mxu0
        %2999 = vmatprep.mubr.bf16.mxu0 %v1959
        %3000 = vmatmul.mubr.bf16.gmra.mrb[0].mxu0 %v1958
        %v3001 = vpop.f32.mrb[0].mxu0
        %v3002 = vadd.f32 0.0, %v3001
        %v3003 = vpop.f32.mrb[0].mxu0
        %v3004 = vpop.f32.mrb[0].mxu0
        %v3005 = vadd.f32 0.0, %v3004
        %v3006 = vpop.f32.mrb[0].mxu0
        %3007 = vmatprep.mubr.bf16.mxu0 %v1968
        %3008 = vmatmul.mubr.bf16.gmra.mrb[0].mxu0 %v1967
        %v3009 = vpop.f32.mrb[0].mxu0
        %v3010 = vadd.f32 0.0, %v3009
        %v3011 = vpop.f32.mrb[0].mxu0
        %v3012 = vpop.f32.mrb[0].mxu0
        %v3013 = vadd.f32 0.0, %v3012
        %v3014 = vpop.f32.mrb[0].mxu0
        %3015 = vmatprep.mubr.bf16.mxu0 %v1977
        %3016 = vmatmul.mubr.bf16.gmra.mrb[0].mxu0 %v1976
        %v3017 = vpop.f32.mrb[0].mxu0
        %v3018 = vadd.f32 0.0, %v3017
        %v3019 = vpop.f32.mrb[0].mxu0
        %v3020 = vpop.f32.mrb[0].mxu0
        %v3021 = vadd.f32 0.0, %v3020
        %v3022 = vpop.f32.mrb[0].mxu0
        %3023 = vmatprep.mubr.bf16.mxu0 %v1986
        %3024 = vmatmul.mubr.bf16.gmra.mrb[0].mxu0 %v1985
        %v3025 = vpop.f32.mrb[0].mxu0
        %v3026 = vadd.f32 0.0, %v3025
        %v3027 = vpop.f32.mrb[0].mxu0
        %v3028 = vpop.f32.mrb[0].mxu0
        %v3029 = vadd.f32 0.0, %v3028
        %v3030 = vpop.f32.mrb[0].mxu0
        %3031 = vmatprep.mubr.bf16.mxu0 %v1995
        %3032 = vmatmul.mubr.bf16.gmra.mrb[0].mxu0 %v1994
        %v3033 = vpop.f32.mrb[0].mxu0
        %v3034 = vadd.f32 0.0, %v3033
        %v3035 = vpop.f32.mrb[0].mxu0
        %v3036 = vpop.f32.mrb[0].mxu0
        %v3037 = vadd.f32 0.0, %v3036
        %v3038 = vpop.f32.mrb[0].mxu0
        %3039 = vmatprep.mubr.bf16.mxu0 %v2004
        %3040 = vmatmul.mubr.bf16.gmra.mrb[0].mxu0 %v2003
        %v3041 = vpop.f32.mrb[0].mxu0
        %v3042 = vadd.f32 0.0, %v3041
        %v3043 = vpop.f32.mrb[0].mxu0
        %v3044 = vpop.f32.mrb[0].mxu0
        %v3045 = vadd.f32 0.0, %v3044
        %v3046 = vpop.f32.mrb[0].mxu0
        %3047 = vdwg.mxu0
        %3048 = vmatprep.subr.bf16.mxu0 0
        %3049 = vmatpush1.bf16.msra.mxu0 %v2542
        %3050 = vmatprep.subr.bf16.mxu0 0
        %3051 = vmatpush1.bf16.msra.mxu0 %v2543
        %3052 = vmatprep.subr.bf16.mxu0 0
        %3053 = vmatpush1.bf16.msra.mxu0 %v2544
        %3054 = vmatprep.subr.bf16.mxu0 0
        %3055 = vmatpush1.bf16.msra.mxu0 %v2545
        %3056 = vmatprep.subr.bf16.mxu0 0
        %3057 = vmatpush1.bf16.msra.mxu0 %v2546
        %3058 = vmatprep.subr.bf16.mxu0 0
        %3059 = vmatpush1.bf16.msra.mxu0 %v2547
        %3060 = vmatprep.subr.bf16.mxu0 0
        %3061 = vmatpush1.bf16.msra.mxu0 %v2548
        %3062 = vmatprep.subr.bf16.mxu0 0
        %3063 = vmatpush1.bf16.msra.mxu0 %v2549
        %3064 = vmatprep.subr.bf16.mxu0 0
        %3065 = vmatpush1.bf16.msra.mxu0 %v2550
        %3066 = vmatprep.subr.bf16.mxu0 0
        %3067 = vmatpush1.bf16.msra.mxu0 %v2551
        %3068 = vmatprep.subr.bf16.mxu0 0
        %3069 = vmatpush1.bf16.msra.mxu0 %v2552
        %3070 = vmatprep.subr.bf16.mxu0 0
        %3071 = vmatpush1.bf16.msra.mxu0 %v2553
        %3072 = vmatprep.subr.bf16.mxu0 0
        %3073 = vmatpush1.bf16.msra.mxu0 %v2554
        %3074 = vmatprep.subr.bf16.mxu0 0
        %3075 = vmatpush1.bf16.msra.mxu0 %v2555
        %3076 = vmatprep.subr.bf16.mxu0 0
        %3077 = vmatpush1.bf16.msra.mxu0 %v2556
        %3078 = vmatprep.subr.bf16.mxu0 0
        %3079 = vmatpush1.bf16.msra.mxu0 %v2557
        %3080 = vmatprep.mubr.bf16.mxu0 %v1727
        %3081 = vmatmul.mubr.bf16.gmra.mrb[0].mxu0 %v1726
        %v3082 = vpop.f32.mrb[0].mxu0
        %v3083 = vadd.f32 %v2794, %v3082
        %v3084 = vpop.f32.mrb[0].mxu0
        %v3085 = vpop.f32.mrb[0].mxu0
        %v3086 = vadd.f32 %v2797, %v3085
        %v3087 = vpop.f32.mrb[0].mxu0
        %3088 = vmatprep.mubr.bf16.mxu0 %v1736
        %3089 = vmatmul.mubr.bf16.gmra.mrb[0].mxu0 %v1735
        %v3090 = vpop.f32.mrb[0].mxu0
        %v3091 = vadd.f32 %v2802, %v3090
        %v3092 = vpop.f32.mrb[0].mxu0
        %v3093 = vpop.f32.mrb[0].mxu0
        %v3094 = vadd.f32 %v2805, %v3093
        %v3095 = vpop.f32.mrb[0].mxu0
        %3096 = vmatprep.mubr.bf16.mxu0 %v1745
        %3097 = vmatmul.mubr.bf16.gmra.mrb[0].mxu0 %v1744
        %v3098 = vpop.f32.mrb[0].mxu0
        %v3099 = vadd.f32 %v2810, %v3098
        %v3100 = vpop.f32.mrb[0].mxu0
        %v3101 = vpop.f32.mrb[0].mxu0
        %v3102 = vadd.f32 %v2813, %v3101
        %v3103 = vpop.f32.mrb[0].mxu0
        %3104 = vmatprep.mubr.bf16.mxu0 %v1754
        %3105 = vmatmul.mubr.bf16.gmra.mrb[0].mxu0 %v1753
        %v3106 = vpop.f32.mrb[0].mxu0
        %v3107 = vadd.f32 %v2818, %v3106
        %v3108 = vpop.f32.mrb[0].mxu0
        %v3109 = vpop.f32.mrb[0].mxu0
        %v3110 = vadd.f32 %v2821, %v3109
        %v3111 = vpop.f32.mrb[0].mxu0
        %3112 = vmatprep.mubr.bf16.mxu0 %v1763
        %3113 = vmatmul.mubr.bf16.gmra.mrb[0].mxu0 %v1762
        %v3114 = vpop.f32.mrb[0].mxu0
        %v3115 = vadd.f32 %v2826, %v3114
        %v3116 = vpop.f32.mrb[0].mxu0
        %v3117 = vpop.f32.mrb[0].mxu0
        %v3118 = vadd.f32 %v2829, %v3117
        %v3119 = vpop.f32.mrb[0].mxu0
        %3120 = vmatprep.mubr.bf16.mxu0 %v1772
        %3121 = vmatmul.mubr.bf16.gmra.mrb[0].mxu0 %v1771
        %v3122 = vpop.f32.mrb[0].mxu0
        %v3123 = vadd.f32 %v2834, %v3122
        %v3124 = vpop.f32.mrb[0].mxu0
        %v3125 = vpop.f32.mrb[0].mxu0
        %v3126 = vadd.f32 %v2837, %v3125
        %v3127 = vpop.f32.mrb[0].mxu0
        %3128 = vmatprep.mubr.bf16.mxu0 %v1781
        %3129 = vmatmul.mubr.bf16.gmra.mrb[0].mxu0 %v1780
        %v3130 = vpop.f32.mrb[0].mxu0
        %v3131 = vadd.f32 %v2842, %v3130
        %v3132 = vpop.f32.mrb[0].mxu0
        %v3133 = vpop.f32.mrb[0].mxu0
        %v3134 = vadd.f32 %v2845, %v3133
        %v3135 = vpop.f32.mrb[0].mxu0
        %3136 = vmatprep.mubr.bf16.mxu0 %v1790
        %3137 = vmatmul.mubr.bf16.gmra.mrb[0].mxu0 %v1789
        %v3138 = vpop.f32.mrb[0].mxu0
        %v3139 = vadd.f32 %v2850, %v3138
        %v3140 = vpop.f32.mrb[0].mxu0
        %v3141 = vpop.f32.mrb[0].mxu0
        %v3142 = vadd.f32 %v2853, %v3141
        %v3143 = vpop.f32.mrb[0].mxu0
        %3144 = vmatprep.mubr.bf16.mxu0 %v1799
        %3145 = vmatmul.mubr.bf16.gmra.mrb[0].mxu0 %v1798
        %v3146 = vpop.f32.mrb[0].mxu0
        %v3147 = vadd.f32 %v2858, %v3146
        %v3148 = vpop.f32.mrb[0].mxu0
        %v3149 = vpop.f32.mrb[0].mxu0
        %v3150 = vadd.f32 %v2861, %v3149
        %v3151 = vpop.f32.mrb[0].mxu0
        %3152 = vmatprep.mubr.bf16.mxu0 %v1808
        %3153 = vmatmul.mubr.bf16.gmra.mrb[0].mxu0 %v1807
        %v3154 = vpop.f32.mrb[0].mxu0
        %v3155 = vadd.f32 %v2866, %v3154
        %v3156 = vpop.f32.mrb[0].mxu0
        %v3157 = vpop.f32.mrb[0].mxu0
        %v3158 = vadd.f32 %v2869, %v3157
        %v3159 = vpop.f32.mrb[0].mxu0
        %3160 = vmatprep.mubr.bf16.mxu0 %v1817
        %3161 = vmatmul.mubr.bf16.gmra.mrb[0].mxu0 %v1816
        %v3162 = vpop.f32.mrb[0].mxu0
        %v3163 = vadd.f32 %v2874, %v3162
        %v3164 = vpop.f32.mrb[0].mxu0
        %v3165 = vpop.f32.mrb[0].mxu0
        %v3166 = vadd.f32 %v2877, %v3165
        %v3167 = vpop.f32.mrb[0].mxu0
        %3168 = vmatprep.mubr.bf16.mxu0 %v1826
        %3169 = vmatmul.mubr.bf16.gmra.mrb[0].mxu0 %v1825
        %v3170 = vpop.f32.mrb[0].mxu0
        %v3171 = vadd.f32 %v2882, %v3170
        %v3172 = vpop.f32.mrb[0].mxu0
        %v3173 = vpop.f32.mrb[0].mxu0
        %v3174 = vadd.f32 %v2885, %v3173
        %v3175 = vpop.f32.mrb[0].mxu0
        %3176 = vmatprep.mubr.bf16.mxu0 %v1835
        %3177 = vmatmul.mubr.bf16.gmra.mrb[0].mxu0 %v1834
        %v3178 = vpop.f32.mrb[0].mxu0
        %v3179 = vadd.f32 %v2890, %v3178
        %v3180 = vpop.f32.mrb[0].mxu0
        %v3181 = vpop.f32.mrb[0].mxu0
        %v3182 = vadd.f32 %v2893, %v3181
        %v3183 = vpop.f32.mrb[0].mxu0
        %3184 = vmatprep.mubr.bf16.mxu0 %v1844
        %3185 = vmatmul.mubr.bf16.gmra.mrb[0].mxu0 %v1843
        %v3186 = vpop.f32.mrb[0].mxu0
        %v3187 = vadd.f32 %v2898, %v3186
        %v3188 = vpop.f32.mrb[0].mxu0
        %v3189 = vpop.f32.mrb[0].mxu0
        %v3190 = vadd.f32 %v2901, %v3189
        %v3191 = vpop.f32.mrb[0].mxu0
        %3192 = vmatprep.mubr.bf16.mxu0 %v1853
        %3193 = vmatmul.mubr.bf16.gmra.mrb[0].mxu0 %v1852
        %v3194 = vpop.f32.mrb[0].mxu0
        %v3195 = vadd.f32 %v2906, %v3194
        %v3196 = vpop.f32.mrb[0].mxu0
        %v3197 = vpop.f32.mrb[0].mxu0
        %v3198 = vadd.f32 %v2909, %v3197
        %v3199 = vpop.f32.mrb[0].mxu0
        %3200 = vmatprep.mubr.bf16.mxu0 %v1862
        %3201 = vmatmul.mubr.bf16.gmra.mrb[0].mxu0 %v1861
        %v3202 = vpop.f32.mrb[0].mxu0
        %v3203 = vadd.f32 %v2914, %v3202
        %v3204 = vpop.f32.mrb[0].mxu0
        %v3205 = vpop.f32.mrb[0].mxu0
        %v3206 = vadd.f32 %v2917, %v3205
        %v3207 = vpop.f32.mrb[0].mxu0
        %3208 = vmatprep.mubr.bf16.mxu0 %v1871
        %3209 = vmatmul.mubr.bf16.gmra.mrb[0].mxu0 %v1870
        %v3210 = vpop.f32.mrb[0].mxu0
        %v3211 = vadd.f32 %v2922, %v3210
        %v3212 = vpop.f32.mrb[0].mxu0
        %v3213 = vpop.f32.mrb[0].mxu0
        %v3214 = vadd.f32 %v2925, %v3213
        %v3215 = vpop.f32.mrb[0].mxu0
        %3216 = vmatprep.mubr.bf16.mxu0 %v1880
        %3217 = vmatmul.mubr.bf16.gmra.mrb[0].mxu0 %v1879
        %v3218 = vpop.f32.mrb[0].mxu0
        %v3219 = vadd.f32 %v2930, %v3218
        %v3220 = vpop.f32.mrb[0].mxu0
        %v3221 = vpop.f32.mrb[0].mxu0
        %v3222 = vadd.f32 %v2933, %v3221
        %v3223 = vpop.f32.mrb[0].mxu0
        %3224 = vmatprep.mubr.bf16.mxu0 %v1889
        %3225 = vmatmul.mubr.bf16.gmra.mrb[0].mxu0 %v1888
        %v3226 = vpop.f32.mrb[0].mxu0
        %v3227 = vadd.f32 %v2938, %v3226
        %v3228 = vpop.f32.mrb[0].mxu0
        %v3229 = vpop.f32.mrb[0].mxu0
        %v3230 = vadd.f32 %v2941, %v3229
        %v3231 = vpop.f32.mrb[0].mxu0
        %3232 = vmatprep.mubr.bf16.mxu0 %v1898
        %3233 = vmatmul.mubr.bf16.gmra.mrb[0].mxu0 %v1897
        %v3234 = vpop.f32.mrb[0].mxu0
        %v3235 = vadd.f32 %v2946, %v3234
        %v3236 = vpop.f32.mrb[0].mxu0
        %v3237 = vpop.f32.mrb[0].mxu0
        %v3238 = vadd.f32 %v2949, %v3237
        %v3239 = vpop.f32.mrb[0].mxu0
        %3240 = vmatprep.mubr.bf16.mxu0 %v1907
        %3241 = vmatmul.mubr.bf16.gmra.mrb[0].mxu0 %v1906
        %v3242 = vpop.f32.mrb[0].mxu0
        %v3243 = vadd.f32 %v2954, %v3242
        %v3244 = vpop.f32.mrb[0].mxu0
        %v3245 = vpop.f32.mrb[0].mxu0
        %v3246 = vadd.f32 %v2957, %v3245
        %v3247 = vpop.f32.mrb[0].mxu0
        %3248 = vmatprep.mubr.bf16.mxu0 %v1916
        %3249 = vmatmul.mubr.bf16.gmra.mrb[0].mxu0 %v1915
        %v3250 = vpop.f32.mrb[0].mxu0
        %v3251 = vadd.f32 %v2962, %v3250
        %v3252 = vpop.f32.mrb[0].mxu0
        %v3253 = vpop.f32.mrb[0].mxu0
        %v3254 = vadd.f32 %v2965, %v3253
        %v3255 = vpop.f32.mrb[0].mxu0
        %3256 = vmatprep.mubr.bf16.mxu0 %v1925
        %3257 = vmatmul.mubr.bf16.gmra.mrb[0].mxu0 %v1924
        %v3258 = vpop.f32.mrb[0].mxu0
        %v3259 = vadd.f32 %v2970, %v3258
        %v3260 = vpop.f32.mrb[0].mxu0
        %v3261 = vpop.f32.mrb[0].mxu0
        %v3262 = vadd.f32 %v2973, %v3261
        %v3263 = vpop.f32.mrb[0].mxu0
        %3264 = vmatprep.mubr.bf16.mxu0 %v1934
        %3265 = vmatmul.mubr.bf16.gmra.mrb[0].mxu0 %v1933
        %v3266 = vpop.f32.mrb[0].mxu0
        %v3267 = vadd.f32 %v2978, %v3266
        %v3268 = vpop.f32.mrb[0].mxu0
        %v3269 = vpop.f32.mrb[0].mxu0
        %v3270 = vadd.f32 %v2981, %v3269
        %v3271 = vpop.f32.mrb[0].mxu0
        %3272 = vmatprep.mubr.bf16.mxu0 %v1943
        %3273 = vmatmul.mubr.bf16.gmra.mrb[0].mxu0 %v1942
        %v3274 = vpop.f32.mrb[0].mxu0
        %v3275 = vadd.f32 %v2986, %v3274
        %v3276 = vpop.f32.mrb[0].mxu0
        %v3277 = vpop.f32.mrb[0].mxu0
        %v3278 = vadd.f32 %v2989, %v3277
        %v3279 = vpop.f32.mrb[0].mxu0
        %3280 = vmatprep.mubr.bf16.mxu0 %v1952
        %3281 = vmatmul.mubr.bf16.gmra.mrb[0].mxu0 %v1951
        %v3282 = vpop.f32.mrb[0].mxu0
        %v3283 = vadd.f32 %v2994, %v3282
        %v3284 = vpop.f32.mrb[0].mxu0
        %v3285 = vpop.f32.mrb[0].mxu0
        %v3286 = vadd.f32 %v2997, %v3285
        %v3287 = vpop.f32.mrb[0].mxu0
        %3288 = vmatprep.mubr.bf16.mxu0 %v1961
        %3289 = vmatmul.mubr.bf16.gmra.mrb[0].mxu0 %v1960
        %v3290 = vpop.f32.mrb[0].mxu0
        %v3291 = vadd.f32 %v3002, %v3290
        %v3292 = vpop.f32.mrb[0].mxu0
        %v3293 = vpop.f32.mrb[0].mxu0
        %v3294 = vadd.f32 %v3005, %v3293
        %v3295 = vpop.f32.mrb[0].mxu0
        %3296 = vmatprep.mubr.bf16.mxu0 %v1970
        %3297 = vmatmul.mubr.bf16.gmra.mrb[0].mxu0 %v1969
        %v3298 = vpop.f32.mrb[0].mxu0
        %v3299 = vadd.f32 %v3010, %v3298
        %v3300 = vpop.f32.mrb[0].mxu0
        %v3301 = vpop.f32.mrb[0].mxu0
        %v3302 = vadd.f32 %v3013, %v3301
        %v3303 = vpop.f32.mrb[0].mxu0
        %3304 = vmatprep.mubr.bf16.mxu0 %v1979
        %3305 = vmatmul.mubr.bf16.gmra.mrb[0].mxu0 %v1978
        %v3306 = vpop.f32.mrb[0].mxu0
        %v3307 = vadd.f32 %v3018, %v3306
        %v3308 = vpop.f32.mrb[0].mxu0
        %v3309 = vpop.f32.mrb[0].mxu0
        %v3310 = vadd.f32 %v3021, %v3309
        %v3311 = vpop.f32.mrb[0].mxu0
        %3312 = vmatprep.mubr.bf16.mxu0 %v1988
        %3313 = vmatmul.mubr.bf16.gmra.mrb[0].mxu0 %v1987
        %v3314 = vpop.f32.mrb[0].mxu0
        %v3315 = vadd.f32 %v3026, %v3314
        %v3316 = vpop.f32.mrb[0].mxu0
        %v3317 = vpop.f32.mrb[0].mxu0
        %v3318 = vadd.f32 %v3029, %v3317
        %v3319 = vpop.f32.mrb[0].mxu0
        %3320 = vmatprep.mubr.bf16.mxu0 %v1997
        %3321 = vmatmul.mubr.bf16.gmra.mrb[0].mxu0 %v1996
        %v3322 = vpop.f32.mrb[0].mxu0
        %v3323 = vadd.f32 %v3034, %v3322
        %v3324 = vpop.f32.mrb[0].mxu0
        %v3325 = vpop.f32.mrb[0].mxu0
        %v3326 = vadd.f32 %v3037, %v3325
        %v3327 = vpop.f32.mrb[0].mxu0
        %3328 = vmatprep.mubr.bf16.mxu0 %v2006
        %3329 = vmatmul.mubr.bf16.gmra.mrb[0].mxu0 %v2005
        %v3330 = vpop.f32.mrb[0].mxu0
        %v3331 = vadd.f32 %v3042, %v3330
        %v3332 = vpop.f32.mrb[0].mxu0
        %v3333 = vpop.f32.mrb[0].mxu0
        %v3334 = vadd.f32 %v3045, %v3333
        %v3335 = vpop.f32.mrb[0].mxu0
        %3336 = vdwg.mxu0
        %3337 = vmatprep.subr.bf16.mxu0 0
        %3338 = vmatpush1.bf16.msra.mxu0 %v2558
        %3339 = vmatprep.subr.bf16.mxu0 0
        %3340 = vmatpush1.bf16.msra.mxu0 %v2559
        %3341 = vmatprep.subr.bf16.mxu0 0
        %3342 = vmatpush1.bf16.msra.mxu0 %v2560
        %3343 = vmatprep.subr.bf16.mxu0 0
        %3344 = vmatpush1.bf16.msra.mxu0 %v2561
        %3345 = vmatprep.subr.bf16.mxu0 0
        %3346 = vmatpush1.bf16.msra.mxu0 %v2562
        %3347 = vmatprep.subr.bf16.mxu0 0
        %3348 = vmatpush1.bf16.msra.mxu0 %v2563
        %3349 = vmatprep.subr.bf16.mxu0 0
        %3350 = vmatpush1.bf16.msra.mxu0 %v2564
        %3351 = vmatprep.subr.bf16.mxu0 0
        %3352 = vmatpush1.bf16.msra.mxu0 %v2565
        %3353 = vmatprep.subr.bf16.mxu0 0
        %3354 = vmatpush1.bf16.msra.mxu0 %v2566
        %3355 = vmatprep.subr.bf16.mxu0 0
        %3356 = vmatpush1.bf16.msra.mxu0 %v2567
        %3357 = vmatprep.subr.bf16.mxu0 0
        %3358 = vmatpush1.bf16.msra.mxu0 %v2568
        %3359 = vmatprep.subr.bf16.mxu0 0
        %3360 = vmatpush1.bf16.msra.mxu0 %v2569
        %3361 = vmatprep.subr.bf16.mxu0 0
        %3362 = vmatpush1.bf16.msra.mxu0 %v2570
        %3363 = vmatprep.subr.bf16.mxu0 0
        %3364 = vmatpush1.bf16.msra.mxu0 %v2571
        %3365 = vmatprep.subr.bf16.mxu0 0
        %3366 = vmatpush1.bf16.msra.mxu0 %v2572
        %3367 = vmatprep.subr.bf16.mxu0 0
        %3368 = vmatpush1.bf16.msra.mxu0 %v2573
        %3369 = vmatprep.mubr.bf16.mxu0 %v1729
        %3370 = vmatmul.mubr.bf16.gmra.mrb[0].mxu0 %v1728
        %v3371 = vpop.f32.mrb[0].mxu0
        %v3372 = vadd.f32 %v3083, %v3371
        %v3373 = vpop.f32.mrb[0].mxu0
        %v3374 = vpop.f32.mrb[0].mxu0
        %v3375 = vadd.f32 %v3086, %v3374
        %v3376 = vpop.f32.mrb[0].mxu0
        %3377 = vmatprep.mubr.bf16.mxu0 %v1738
        %3378 = vmatmul.mubr.bf16.gmra.mrb[0].mxu0 %v1737
        %v3379 = vpop.f32.mrb[0].mxu0
        %v3380 = vadd.f32 %v3091, %v3379
        %v3381 = vpop.f32.mrb[0].mxu0
        %v3382 = vpop.f32.mrb[0].mxu0
        %v3383 = vadd.f32 %v3094, %v3382
        %v3384 = vpop.f32.mrb[0].mxu0
        %3385 = vmatprep.mubr.bf16.mxu0 %v1747
        %3386 = vmatmul.mubr.bf16.gmra.mrb[0].mxu0 %v1746
        %v3387 = vpop.f32.mrb[0].mxu0
        %v3388 = vadd.f32 %v3099, %v3387
        %v3389 = vpop.f32.mrb[0].mxu0
        %v3390 = vpop.f32.mrb[0].mxu0
        %v3391 = vadd.f32 %v3102, %v3390
        %v3392 = vpop.f32.mrb[0].mxu0
        %3393 = vmatprep.mubr.bf16.mxu0 %v1756
        %3394 = vmatmul.mubr.bf16.gmra.mrb[0].mxu0 %v1755
        %v3395 = vpop.f32.mrb[0].mxu0
        %v3396 = vadd.f32 %v3107, %v3395
        %v3397 = vpop.f32.mrb[0].mxu0
        %v3398 = vpop.f32.mrb[0].mxu0
        %v3399 = vadd.f32 %v3110, %v3398
        %v3400 = vpop.f32.mrb[0].mxu0
        %3401 = vmatprep.mubr.bf16.mxu0 %v1765
        %3402 = vmatmul.mubr.bf16.gmra.mrb[0].mxu0 %v1764
        %v3403 = vpop.f32.mrb[0].mxu0
        %v3404 = vadd.f32 %v3115, %v3403
        %v3405 = vpop.f32.mrb[0].mxu0
        %v3406 = vpop.f32.mrb[0].mxu0
        %v3407 = vadd.f32 %v3118, %v3406
        %v3408 = vpop.f32.mrb[0].mxu0
        %3409 = vmatprep.mubr.bf16.mxu0 %v1774
        %3410 = vmatmul.mubr.bf16.gmra.mrb[0].mxu0 %v1773
        %v3411 = vpop.f32.mrb[0].mxu0
        %v3412 = vadd.f32 %v3123, %v3411
        %v3413 = vpop.f32.mrb[0].mxu0
        %v3414 = vpop.f32.mrb[0].mxu0
        %v3415 = vadd.f32 %v3126, %v3414
        %v3416 = vpop.f32.mrb[0].mxu0
        %3417 = vmatprep.mubr.bf16.mxu0 %v1783
        %3418 = vmatmul.mubr.bf16.gmra.mrb[0].mxu0 %v1782
        %v3419 = vpop.f32.mrb[0].mxu0
        %v3420 = vadd.f32 %v3131, %v3419
        %v3421 = vpop.f32.mrb[0].mxu0
        %v3422 = vpop.f32.mrb[0].mxu0
        %v3423 = vadd.f32 %v3134, %v3422
        %v3424 = vpop.f32.mrb[0].mxu0
        %3425 = vmatprep.mubr.bf16.mxu0 %v1792
        %3426 = vmatmul.mubr.bf16.gmra.mrb[0].mxu0 %v1791
        %v3427 = vpop.f32.mrb[0].mxu0
        %v3428 = vadd.f32 %v3139, %v3427
        %v3429 = vpop.f32.mrb[0].mxu0
        %v3430 = vpop.f32.mrb[0].mxu0
        %v3431 = vadd.f32 %v3142, %v3430
        %v3432 = vpop.f32.mrb[0].mxu0
        %3433 = vmatprep.mubr.bf16.mxu0 %v1801
        %3434 = vmatmul.mubr.bf16.gmra.mrb[0].mxu0 %v1800
        %v3435 = vpop.f32.mrb[0].mxu0
        %v3436 = vadd.f32 %v3147, %v3435
        %v3437 = vpop.f32.mrb[0].mxu0
        %v3438 = vpop.f32.mrb[0].mxu0
        %v3439 = vadd.f32 %v3150, %v3438
        %v3440 = vpop.f32.mrb[0].mxu0
        %3441 = vmatprep.mubr.bf16.mxu0 %v1810
        %3442 = vmatmul.mubr.bf16.gmra.mrb[0].mxu0 %v1809
        %v3443 = vpop.f32.mrb[0].mxu0
        %v3444 = vadd.f32 %v3155, %v3443
        %v3445 = vpop.f32.mrb[0].mxu0
        %v3446 = vpop.f32.mrb[0].mxu0
        %v3447 = vadd.f32 %v3158, %v3446
        %v3448 = vpop.f32.mrb[0].mxu0
        %3449 = vmatprep.mubr.bf16.mxu0 %v1819
        %3450 = vmatmul.mubr.bf16.gmra.mrb[0].mxu0 %v1818
        %v3451 = vpop.f32.mrb[0].mxu0
        %v3452 = vadd.f32 %v3163, %v3451
        %v3453 = vpop.f32.mrb[0].mxu0
        %v3454 = vpop.f32.mrb[0].mxu0
        %v3455 = vadd.f32 %v3166, %v3454
        %v3456 = vpop.f32.mrb[0].mxu0
        %3457 = vmatprep.mubr.bf16.mxu0 %v1828
        %3458 = vmatmul.mubr.bf16.gmra.mrb[0].mxu0 %v1827
        %v3459 = vpop.f32.mrb[0].mxu0
        %v3460 = vadd.f32 %v3171, %v3459
        %v3461 = vpop.f32.mrb[0].mxu0
        %v3462 = vpop.f32.mrb[0].mxu0
        %v3463 = vadd.f32 %v3174, %v3462
        %v3464 = vpop.f32.mrb[0].mxu0
        %3465 = vmatprep.mubr.bf16.mxu0 %v1837
        %3466 = vmatmul.mubr.bf16.gmra.mrb[0].mxu0 %v1836
        %v3467 = vpop.f32.mrb[0].mxu0
        %v3468 = vadd.f32 %v3179, %v3467
        %v3469 = vpop.f32.mrb[0].mxu0
        %v3470 = vpop.f32.mrb[0].mxu0
        %v3471 = vadd.f32 %v3182, %v3470
        %v3472 = vpop.f32.mrb[0].mxu0
        %3473 = vmatprep.mubr.bf16.mxu0 %v1846
        %3474 = vmatmul.mubr.bf16.gmra.mrb[0].mxu0 %v1845
        %v3475 = vpop.f32.mrb[0].mxu0
        %v3476 = vadd.f32 %v3187, %v3475
        %v3477 = vpop.f32.mrb[0].mxu0
        %v3478 = vpop.f32.mrb[0].mxu0
        %v3479 = vadd.f32 %v3190, %v3478
        %v3480 = vpop.f32.mrb[0].mxu0
        %3481 = vmatprep.mubr.bf16.mxu0 %v1855
        %3482 = vmatmul.mubr.bf16.gmra.mrb[0].mxu0 %v1854
        %v3483 = vpop.f32.mrb[0].mxu0
        %v3484 = vadd.f32 %v3195, %v3483
        %v3485 = vpop.f32.mrb[0].mxu0
        %v3486 = vpop.f32.mrb[0].mxu0
        %v3487 = vadd.f32 %v3198, %v3486
        %v3488 = vpop.f32.mrb[0].mxu0
        %3489 = vmatprep.mubr.bf16.mxu0 %v1864
        %3490 = vmatmul.mubr.bf16.gmra.mrb[0].mxu0 %v1863
        %v3491 = vpop.f32.mrb[0].mxu0
        %v3492 = vadd.f32 %v3203, %v3491
        %v3493 = vpop.f32.mrb[0].mxu0
        %v3494 = vpop.f32.mrb[0].mxu0
        %v3495 = vadd.f32 %v3206, %v3494
        %v3496 = vpop.f32.mrb[0].mxu0
        %3497 = vmatprep.mubr.bf16.mxu0 %v1873
        %3498 = vmatmul.mubr.bf16.gmra.mrb[0].mxu0 %v1872
        %v3499 = vpop.f32.mrb[0].mxu0
        %v3500 = vadd.f32 %v3211, %v3499
        %v3501 = vpop.f32.mrb[0].mxu0
        %v3502 = vpop.f32.mrb[0].mxu0
        %v3503 = vadd.f32 %v3214, %v3502
        %v3504 = vpop.f32.mrb[0].mxu0
        %3505 = vmatprep.mubr.bf16.mxu0 %v1882
        %3506 = vmatmul.mubr.bf16.gmra.mrb[0].mxu0 %v1881
        %v3507 = vpop.f32.mrb[0].mxu0
        %v3508 = vadd.f32 %v3219, %v3507
        %v3509 = vpop.f32.mrb[0].mxu0
        %v3510 = vpop.f32.mrb[0].mxu0
        %v3511 = vadd.f32 %v3222, %v3510
        %v3512 = vpop.f32.mrb[0].mxu0
        %3513 = vmatprep.mubr.bf16.mxu0 %v1891
        %3514 = vmatmul.mubr.bf16.gmra.mrb[0].mxu0 %v1890
        %v3515 = vpop.f32.mrb[0].mxu0
        %v3516 = vadd.f32 %v3227, %v3515
        %v3517 = vpop.f32.mrb[0].mxu0
        %v3518 = vpop.f32.mrb[0].mxu0
        %v3519 = vadd.f32 %v3230, %v3518
        %v3520 = vpop.f32.mrb[0].mxu0
        %3521 = vmatprep.mubr.bf16.mxu0 %v1900
        %3522 = vmatmul.mubr.bf16.gmra.mrb[0].mxu0 %v1899
        %v3523 = vpop.f32.mrb[0].mxu0
        %v3524 = vadd.f32 %v3235, %v3523
        %v3525 = vpop.f32.mrb[0].mxu0
        %v3526 = vpop.f32.mrb[0].mxu0
        %v3527 = vadd.f32 %v3238, %v3526
        %v3528 = vpop.f32.mrb[0].mxu0
        %3529 = vmatprep.mubr.bf16.mxu0 %v1909
        %3530 = vmatmul.mubr.bf16.gmra.mrb[0].mxu0 %v1908
        %v3531 = vpop.f32.mrb[0].mxu0
        %v3532 = vadd.f32 %v3243, %v3531
        %v3533 = vpop.f32.mrb[0].mxu0
        %v3534 = vpop.f32.mrb[0].mxu0
        %v3535 = vadd.f32 %v3246, %v3534
        %v3536 = vpop.f32.mrb[0].mxu0
        %3537 = vmatprep.mubr.bf16.mxu0 %v1918
        %3538 = vmatmul.mubr.bf16.gmra.mrb[0].mxu0 %v1917
        %v3539 = vpop.f32.mrb[0].mxu0
        %v3540 = vadd.f32 %v3251, %v3539
        %v3541 = vpop.f32.mrb[0].mxu0
        %v3542 = vpop.f32.mrb[0].mxu0
        %v3543 = vadd.f32 %v3254, %v3542
        %v3544 = vpop.f32.mrb[0].mxu0
        %3545 = vmatprep.mubr.bf16.mxu0 %v1927
        %3546 = vmatmul.mubr.bf16.gmra.mrb[0].mxu0 %v1926
        %v3547 = vpop.f32.mrb[0].mxu0
        %v3548 = vadd.f32 %v3259, %v3547
        %v3549 = vpop.f32.mrb[0].mxu0
        %v3550 = vpop.f32.mrb[0].mxu0
        %v3551 = vadd.f32 %v3262, %v3550
        %v3552 = vpop.f32.mrb[0].mxu0
        %3553 = vmatprep.mubr.bf16.mxu0 %v1936
        %3554 = vmatmul.mubr.bf16.gmra.mrb[0].mxu0 %v1935
        %v3555 = vpop.f32.mrb[0].mxu0
        %v3556 = vadd.f32 %v3267, %v3555
        %v3557 = vpop.f32.mrb[0].mxu0
        %v3558 = vpop.f32.mrb[0].mxu0
        %v3559 = vadd.f32 %v3270, %v3558
        %v3560 = vpop.f32.mrb[0].mxu0
        %3561 = vmatprep.mubr.bf16.mxu0 %v1945
        %3562 = vmatmul.mubr.bf16.gmra.mrb[0].mxu0 %v1944
        %v3563 = vpop.f32.mrb[0].mxu0
        %v3564 = vadd.f32 %v3275, %v3563
        %v3565 = vpop.f32.mrb[0].mxu0
        %v3566 = vpop.f32.mrb[0].mxu0
        %v3567 = vadd.f32 %v3278, %v3566
        %v3568 = vpop.f32.mrb[0].mxu0
        %3569 = vmatprep.mubr.bf16.mxu0 %v1954
        %3570 = vmatmul.mubr.bf16.gmra.mrb[0].mxu0 %v1953
        %v3571 = vpop.f32.mrb[0].mxu0
        %v3572 = vadd.f32 %v3283, %v3571
        %v3573 = vpop.f32.mrb[0].mxu0
        %v3574 = vpop.f32.mrb[0].mxu0
        %v3575 = vadd.f32 %v3286, %v3574
        %v3576 = vpop.f32.mrb[0].mxu0
        %3577 = vmatprep.mubr.bf16.mxu0 %v1963
        %3578 = vmatmul.mubr.bf16.gmra.mrb[0].mxu0 %v1962
        %v3579 = vpop.f32.mrb[0].mxu0
        %v3580 = vadd.f32 %v3291, %v3579
        %v3581 = vpop.f32.mrb[0].mxu0
        %v3582 = vpop.f32.mrb[0].mxu0
        %v3583 = vadd.f32 %v3294, %v3582
        %v3584 = vpop.f32.mrb[0].mxu0
        %3585 = vmatprep.mubr.bf16.mxu0 %v1972
        %3586 = vmatmul.mubr.bf16.gmra.mrb[0].mxu0 %v1971
        %v3587 = vpop.f32.mrb[0].mxu0
        %v3588 = vadd.f32 %v3299, %v3587
        %v3589 = vpop.f32.mrb[0].mxu0
        %v3590 = vpop.f32.mrb[0].mxu0
        %v3591 = vadd.f32 %v3302, %v3590
        %v3592 = vpop.f32.mrb[0].mxu0
        %3593 = vmatprep.mubr.bf16.mxu0 %v1981
        %3594 = vmatmul.mubr.bf16.gmra.mrb[0].mxu0 %v1980
        %v3595 = vpop.f32.mrb[0].mxu0
        %v3596 = vadd.f32 %v3307, %v3595
        %v3597 = vpop.f32.mrb[0].mxu0
        %v3598 = vpop.f32.mrb[0].mxu0
        %v3599 = vadd.f32 %v3310, %v3598
        %v3600 = vpop.f32.mrb[0].mxu0
        %3601 = vmatprep.mubr.bf16.mxu0 %v1990
        %3602 = vmatmul.mubr.bf16.gmra.mrb[0].mxu0 %v1989
        %v3603 = vpop.f32.mrb[0].mxu0
        %v3604 = vadd.f32 %v3315, %v3603
        %v3605 = vpop.f32.mrb[0].mxu0
        %v3606 = vpop.f32.mrb[0].mxu0
        %v3607 = vadd.f32 %v3318, %v3606
        %v3608 = vpop.f32.mrb[0].mxu0
        %3609 = vmatprep.mubr.bf16.mxu0 %v1999
        %3610 = vmatmul.mubr.bf16.gmra.mrb[0].mxu0 %v1998
        %v3611 = vpop.f32.mrb[0].mxu0
        %v3612 = vadd.f32 %v3323, %v3611
        %v3613 = vpop.f32.mrb[0].mxu0
        %v3614 = vpop.f32.mrb[0].mxu0
        %v3615 = vadd.f32 %v3326, %v3614
        %v3616 = vpop.f32.mrb[0].mxu0
        %3617 = vmatprep.mubr.bf16.mxu0 %v2008
        %3618 = vmatmul.mubr.bf16.gmra.mrb[0].mxu0 %v2007
        %v3619 = vpop.f32.mrb[0].mxu0
        %v3620 = vadd.f32 %v3331, %v3619
        %v3621 = vpop.f32.mrb[0].mxu0
        %v3622 = vpop.f32.mrb[0].mxu0
        %v3623 = vadd.f32 %v3334, %v3622
        %v3624 = vpop.f32.mrb[0].mxu0
        %3625 = vdwg.mxu0
        %3626 = vmatprep.subr.bf16.mxu0 0
        %3627 = vmatpush1.bf16.msra.mxu0 %v2574
        %3628 = vmatprep.subr.bf16.mxu0 0
        %3629 = vmatpush1.bf16.msra.mxu0 %v2575
        %3630 = vmatprep.subr.bf16.mxu0 0
        %3631 = vmatpush1.bf16.msra.mxu0 %v2576
        %3632 = vmatprep.subr.bf16.mxu0 0
        %3633 = vmatpush1.bf16.msra.mxu0 %v2577
        %3634 = vmatprep.subr.bf16.mxu0 0
        %3635 = vmatpush1.bf16.msra.mxu0 %v2578
        %3636 = vmatprep.subr.bf16.mxu0 0
        %3637 = vmatpush1.bf16.msra.mxu0 %v2579
        %3638 = vmatprep.subr.bf16.mxu0 0
        %3639 = vmatpush1.bf16.msra.mxu0 %v2580
        %3640 = vmatprep.subr.bf16.mxu0 0
        %3641 = vmatpush1.bf16.msra.mxu0 %v2581
        %3642 = vmatprep.subr.bf16.mxu0 0
        %3643 = vmatpush1.bf16.msra.mxu0 %v2582
        %3644 = vmatprep.subr.bf16.mxu0 0
        %3645 = vmatpush1.bf16.msra.mxu0 %v2583
        %3646 = vmatprep.subr.bf16.mxu0 0
        %3647 = vmatpush1.bf16.msra.mxu0 %v2584
        %3648 = vmatprep.subr.bf16.mxu0 0
        %3649 = vmatpush1.bf16.msra.mxu0 %v2585
        %3650 = vmatprep.subr.bf16.mxu0 0
        %3651 = vmatpush1.bf16.msra.mxu0 %v2586
        %3652 = vmatprep.subr.bf16.mxu0 0
        %3653 = vmatpush1.bf16.msra.mxu0 %v2587
        %3654 = vmatprep.subr.bf16.mxu0 0
        %3655 = vmatpush1.bf16.msra.mxu0 %v2588
        %3656 = vmatprep.subr.bf16.mxu0 0
        %3657 = vmatpush1.bf16.msra.mxu0 %v2589
        %3658 = vmatprep.mubr.bf16.mxu0 %v1731
        %3659 = vmatmul.mubr.bf16.gmra.mrb[0].mxu0 %v1730
        %v3660 = vpop.f32.mrb[0].mxu0
        %v3661 = vadd.f32 %v3372, %v3660
        %v3662 = vpop.f32.mrb[0].mxu0
        %v3663 = vpop.f32.mrb[0].mxu0
        %v3664 = vadd.f32 %v3375, %v3663
        %v3665 = vpop.f32.mrb[0].mxu0
        %3666 = vmatprep.mubr.bf16.mxu0 %v1740
        %3667 = vmatmul.mubr.bf16.gmra.mrb[0].mxu0 %v1739
        %v3668 = vpop.f32.mrb[0].mxu0
        %v3669 = vadd.f32 %v3380, %v3668
        %v3670 = vpop.f32.mrb[0].mxu0
        %v3671 = vpop.f32.mrb[0].mxu0
        %v3672 = vadd.f32 %v3383, %v3671
        %v3673 = vpop.f32.mrb[0].mxu0
        %3674 = vmatprep.mubr.bf16.mxu0 %v1749
        %3675 = vmatmul.mubr.bf16.gmra.mrb[0].mxu0 %v1748
        %v3676 = vpop.f32.mrb[0].mxu0
        %v3677 = vadd.f32 %v3388, %v3676
        %v3678 = vpop.f32.mrb[0].mxu0
        %v3679 = vpop.f32.mrb[0].mxu0
        %v3680 = vadd.f32 %v3391, %v3679
        %v3681 = vpop.f32.mrb[0].mxu0
        %3682 = vmatprep.mubr.bf16.mxu0 %v1758
        %3683 = vmatmul.mubr.bf16.gmra.mrb[0].mxu0 %v1757
        %v3684 = vpop.f32.mrb[0].mxu0
        %v3685 = vadd.f32 %v3396, %v3684
        %v3686 = vpop.f32.mrb[0].mxu0
        %v3687 = vpop.f32.mrb[0].mxu0
        %v3688 = vadd.f32 %v3399, %v3687
        %v3689 = vpop.f32.mrb[0].mxu0
        %3690 = vmatprep.mubr.bf16.mxu0 %v1767
        %3691 = vmatmul.mubr.bf16.gmra.mrb[0].mxu0 %v1766
        %v3692 = vpop.f32.mrb[0].mxu0
        %v3693 = vadd.f32 %v3404, %v3692
        %v3694 = vpop.f32.mrb[0].mxu0
        %v3695 = vpop.f32.mrb[0].mxu0
        %v3696 = vadd.f32 %v3407, %v3695
        %v3697 = vpop.f32.mrb[0].mxu0
        %3698 = vmatprep.mubr.bf16.mxu0 %v1776
        %3699 = vmatmul.mubr.bf16.gmra.mrb[0].mxu0 %v1775
        %v3700 = vpop.f32.mrb[0].mxu0
        %v3701 = vadd.f32 %v3412, %v3700
        %v3702 = vpop.f32.mrb[0].mxu0
        %v3703 = vpop.f32.mrb[0].mxu0
        %v3704 = vadd.f32 %v3415, %v3703
        %v3705 = vpop.f32.mrb[0].mxu0
        %3706 = vmatprep.mubr.bf16.mxu0 %v1785
        %3707 = vmatmul.mubr.bf16.gmra.mrb[0].mxu0 %v1784
        %v3708 = vpop.f32.mrb[0].mxu0
        %v3709 = vadd.f32 %v3420, %v3708
        %v3710 = vpop.f32.mrb[0].mxu0
        %v3711 = vpop.f32.mrb[0].mxu0
        %v3712 = vadd.f32 %v3423, %v3711
        %v3713 = vpop.f32.mrb[0].mxu0
        %3714 = vmatprep.mubr.bf16.mxu0 %v1794
        %3715 = vmatmul.mubr.bf16.gmra.mrb[0].mxu0 %v1793
        %v3716 = vpop.f32.mrb[0].mxu0
        %v3717 = vadd.f32 %v3428, %v3716
        %v3718 = vpop.f32.mrb[0].mxu0
        %v3719 = vpop.f32.mrb[0].mxu0
        %v3720 = vadd.f32 %v3431, %v3719
        %v3721 = vpop.f32.mrb[0].mxu0
        %3722 = vmatprep.mubr.bf16.mxu0 %v1803
        %3723 = vmatmul.mubr.bf16.gmra.mrb[0].mxu0 %v1802
        %v3724 = vpop.f32.mrb[0].mxu0
        %v3725 = vadd.f32 %v3436, %v3724
        %v3726 = vpop.f32.mrb[0].mxu0
        %v3727 = vpop.f32.mrb[0].mxu0
        %v3728 = vadd.f32 %v3439, %v3727
        %v3729 = vpop.f32.mrb[0].mxu0
        %3730 = vmatprep.mubr.bf16.mxu0 %v1812
        %3731 = vmatmul.mubr.bf16.gmra.mrb[0].mxu0 %v1811
        %v3732 = vpop.f32.mrb[0].mxu0
        %v3733 = vadd.f32 %v3444, %v3732
        %v3734 = vpop.f32.mrb[0].mxu0
        %v3735 = vpop.f32.mrb[0].mxu0
        %v3736 = vadd.f32 %v3447, %v3735
        %v3737 = vpop.f32.mrb[0].mxu0
        %3738 = vmatprep.mubr.bf16.mxu0 %v1821
        %3739 = vmatmul.mubr.bf16.gmra.mrb[0].mxu0 %v1820
        %v3740 = vpop.f32.mrb[0].mxu0
        %v3741 = vadd.f32 %v3452, %v3740
        %v3742 = vpop.f32.mrb[0].mxu0
        %v3743 = vpop.f32.mrb[0].mxu0
        %v3744 = vadd.f32 %v3455, %v3743
        %v3745 = vpop.f32.mrb[0].mxu0
        %3746 = vmatprep.mubr.bf16.mxu0 %v1830
        %3747 = vmatmul.mubr.bf16.gmra.mrb[0].mxu0 %v1829
        %v3748 = vpop.f32.mrb[0].mxu0
        %v3749 = vadd.f32 %v3460, %v3748
        %v3750 = vpop.f32.mrb[0].mxu0
        %v3751 = vpop.f32.mrb[0].mxu0
        %v3752 = vadd.f32 %v3463, %v3751
        %v3753 = vpop.f32.mrb[0].mxu0
        %3754 = vmatprep.mubr.bf16.mxu0 %v1839
        %3755 = vmatmul.mubr.bf16.gmra.mrb[0].mxu0 %v1838
        %v3756 = vpop.f32.mrb[0].mxu0
        %v3757 = vadd.f32 %v3468, %v3756
        %v3758 = vpop.f32.mrb[0].mxu0
        %v3759 = vpop.f32.mrb[0].mxu0
        %v3760 = vadd.f32 %v3471, %v3759
        %v3761 = vpop.f32.mrb[0].mxu0
        %3762 = vmatprep.mubr.bf16.mxu0 %v1848
        %3763 = vmatmul.mubr.bf16.gmra.mrb[0].mxu0 %v1847
        %v3764 = vpop.f32.mrb[0].mxu0
        %v3765 = vadd.f32 %v3476, %v3764
        %v3766 = vpop.f32.mrb[0].mxu0
        %v3767 = vpop.f32.mrb[0].mxu0
        %v3768 = vadd.f32 %v3479, %v3767
        %v3769 = vpop.f32.mrb[0].mxu0
        %3770 = vmatprep.mubr.bf16.mxu0 %v1857
        %3771 = vmatmul.mubr.bf16.gmra.mrb[0].mxu0 %v1856
        %v3772 = vpop.f32.mrb[0].mxu0
        %v3773 = vadd.f32 %v3484, %v3772
        %v3774 = vpop.f32.mrb[0].mxu0
        %v3775 = vpop.f32.mrb[0].mxu0
        %v3776 = vadd.f32 %v3487, %v3775
        %v3777 = vpop.f32.mrb[0].mxu0
        %3778 = vmatprep.mubr.bf16.mxu0 %v1866
        %3779 = vmatmul.mubr.bf16.gmra.mrb[0].mxu0 %v1865
        %v3780 = vpop.f32.mrb[0].mxu0
        %v3781 = vadd.f32 %v3492, %v3780
        %v3782 = vpop.f32.mrb[0].mxu0
        %v3783 = vpop.f32.mrb[0].mxu0
        %v3784 = vadd.f32 %v3495, %v3783
        %v3785 = vpop.f32.mrb[0].mxu0
        %3786 = vmatprep.mubr.bf16.mxu0 %v1875
        %3787 = vmatmul.mubr.bf16.gmra.mrb[0].mxu0 %v1874
        %v3788 = vpop.f32.mrb[0].mxu0
        %v3789 = vadd.f32 %v3500, %v3788
        %v3790 = vpop.f32.mrb[0].mxu0
        %v3791 = vpop.f32.mrb[0].mxu0
        %v3792 = vadd.f32 %v3503, %v3791
        %v3793 = vpop.f32.mrb[0].mxu0
        %3794 = vmatprep.mubr.bf16.mxu0 %v1884
        %3795 = vmatmul.mubr.bf16.gmra.mrb[0].mxu0 %v1883
        %v3796 = vpop.f32.mrb[0].mxu0
        %v3797 = vadd.f32 %v3508, %v3796
        %v3798 = vpop.f32.mrb[0].mxu0
        %v3799 = vpop.f32.mrb[0].mxu0
        %v3800 = vadd.f32 %v3511, %v3799
        %v3801 = vpop.f32.mrb[0].mxu0
        %3802 = vmatprep.mubr.bf16.mxu0 %v1893
        %3803 = vmatmul.mubr.bf16.gmra.mrb[0].mxu0 %v1892
        %v3804 = vpop.f32.mrb[0].mxu0
        %v3805 = vadd.f32 %v3516, %v3804
        %v3806 = vpop.f32.mrb[0].mxu0
        %v3807 = vpop.f32.mrb[0].mxu0
        %v3808 = vadd.f32 %v3519, %v3807
        %v3809 = vpop.f32.mrb[0].mxu0
        %3810 = vmatprep.mubr.bf16.mxu0 %v1902
        %3811 = vmatmul.mubr.bf16.gmra.mrb[0].mxu0 %v1901
        %v3812 = vpop.f32.mrb[0].mxu0
        %v3813 = vadd.f32 %v3524, %v3812
        %v3814 = vpop.f32.mrb[0].mxu0
        %v3815 = vpop.f32.mrb[0].mxu0
        %v3816 = vadd.f32 %v3527, %v3815
        %v3817 = vpop.f32.mrb[0].mxu0
        %3818 = vmatprep.mubr.bf16.mxu0 %v1911
        %3819 = vmatmul.mubr.bf16.gmra.mrb[0].mxu0 %v1910
        %v3820 = vpop.f32.mrb[0].mxu0
        %v3821 = vadd.f32 %v3532, %v3820
        %v3822 = vpop.f32.mrb[0].mxu0
        %v3823 = vpop.f32.mrb[0].mxu0
        %v3824 = vadd.f32 %v3535, %v3823
        %v3825 = vpop.f32.mrb[0].mxu0
        %3826 = vmatprep.mubr.bf16.mxu0 %v1920
        %3827 = vmatmul.mubr.bf16.gmra.mrb[0].mxu0 %v1919
        %v3828 = vpop.f32.mrb[0].mxu0
        %v3829 = vadd.f32 %v3540, %v3828
        %v3830 = vpop.f32.mrb[0].mxu0
        %v3831 = vpop.f32.mrb[0].mxu0
        %v3832 = vadd.f32 %v3543, %v3831
        %v3833 = vpop.f32.mrb[0].mxu0
        %3834 = vmatprep.mubr.bf16.mxu0 %v1929
        %3835 = vmatmul.mubr.bf16.gmra.mrb[0].mxu0 %v1928
        %v3836 = vpop.f32.mrb[0].mxu0
        %v3837 = vadd.f32 %v3548, %v3836
        %v3838 = vpop.f32.mrb[0].mxu0
        %v3839 = vpop.f32.mrb[0].mxu0
        %v3840 = vadd.f32 %v3551, %v3839
        %v3841 = vpop.f32.mrb[0].mxu0
        %3842 = vmatprep.mubr.bf16.mxu0 %v1938
        %3843 = vmatmul.mubr.bf16.gmra.mrb[0].mxu0 %v1937
        %v3844 = vpop.f32.mrb[0].mxu0
        %v3845 = vadd.f32 %v3556, %v3844
        %v3846 = vpop.f32.mrb[0].mxu0
        %v3847 = vpop.f32.mrb[0].mxu0
        %v3848 = vadd.f32 %v3559, %v3847
        %v3849 = vpop.f32.mrb[0].mxu0
        %3850 = vmatprep.mubr.bf16.mxu0 %v1947
        %3851 = vmatmul.mubr.bf16.gmra.mrb[0].mxu0 %v1946
        %v3852 = vpop.f32.mrb[0].mxu0
        %v3853 = vadd.f32 %v3564, %v3852
        %v3854 = vpop.f32.mrb[0].mxu0
        %v3855 = vpop.f32.mrb[0].mxu0
        %v3856 = vadd.f32 %v3567, %v3855
        %v3857 = vpop.f32.mrb[0].mxu0
        %3858 = vmatprep.mubr.bf16.mxu0 %v1956
        %3859 = vmatmul.mubr.bf16.gmra.mrb[0].mxu0 %v1955
        %v3860 = vpop.f32.mrb[0].mxu0
        %v3861 = vadd.f32 %v3572, %v3860
        %v3862 = vpop.f32.mrb[0].mxu0
        %v3863 = vpop.f32.mrb[0].mxu0
        %v3864 = vadd.f32 %v3575, %v3863
        %v3865 = vpop.f32.mrb[0].mxu0
        %3866 = vmatprep.mubr.bf16.mxu0 %v1965
        %3867 = vmatmul.mubr.bf16.gmra.mrb[0].mxu0 %v1964
        %v3868 = vpop.f32.mrb[0].mxu0
        %v3869 = vadd.f32 %v3580, %v3868
        %v3870 = vpop.f32.mrb[0].mxu0
        %v3871 = vpop.f32.mrb[0].mxu0
        %v3872 = vadd.f32 %v3583, %v3871
        %v3873 = vpop.f32.mrb[0].mxu0
        %3874 = vmatprep.mubr.bf16.mxu0 %v1974
        %3875 = vmatmul.mubr.bf16.gmra.mrb[0].mxu0 %v1973
        %v3876 = vpop.f32.mrb[0].mxu0
        %v3877 = vadd.f32 %v3588, %v3876
        %v3878 = vpop.f32.mrb[0].mxu0
        %v3879 = vpop.f32.mrb[0].mxu0
        %v3880 = vadd.f32 %v3591, %v3879
        %v3881 = vpop.f32.mrb[0].mxu0
        %3882 = vmatprep.mubr.bf16.mxu0 %v1983
        %3883 = vmatmul.mubr.bf16.gmra.mrb[0].mxu0 %v1982
        %v3884 = vpop.f32.mrb[0].mxu0
        %v3885 = vadd.f32 %v3596, %v3884
        %v3886 = vpop.f32.mrb[0].mxu0
        %v3887 = vpop.f32.mrb[0].mxu0
        %v3888 = vadd.f32 %v3599, %v3887
        %v3889 = vpop.f32.mrb[0].mxu0
        %3890 = vmatprep.mubr.bf16.mxu0 %v1992
        %3891 = vmatmul.mubr.bf16.gmra.mrb[0].mxu0 %v1991
        %v3892 = vpop.f32.mrb[0].mxu0
        %v3893 = vadd.f32 %v3604, %v3892
        %v3894 = vpop.f32.mrb[0].mxu0
        %v3895 = vpop.f32.mrb[0].mxu0
        %v3896 = vadd.f32 %v3607, %v3895
        %v3897 = vpop.f32.mrb[0].mxu0
        %3898 = vmatprep.mubr.bf16.mxu0 %v2001
        %3899 = vmatmul.mubr.bf16.gmra.mrb[0].mxu0 %v2000
        %v3900 = vpop.f32.mrb[0].mxu0
        %v3901 = vadd.f32 %v3612, %v3900
        %v3902 = vpop.f32.mrb[0].mxu0
        %v3903 = vpop.f32.mrb[0].mxu0
        %v3904 = vadd.f32 %v3615, %v3903
        %v3905 = vpop.f32.mrb[0].mxu0
        %3906 = vmatprep.mubr.bf16.mxu0 %v2010
        %3907 = vmatmul.mubr.bf16.gmra.mrb[0].mxu0 %v2009
        %v3908 = vpop.f32.mrb[0].mxu0
        %v3909 = vadd.f32 %v3620, %v3908
        %v3910 = vpop.f32.mrb[0].mxu0
        %v3911 = vpop.f32.mrb[0].mxu0
        %v3912 = vadd.f32 %v3623, %v3911
        %v3913 = vpop.f32.mrb[0].mxu0
        %3914 = vdwg.mxu0
        %3915 = vmatprep.subr.bf16.mxu0 0
        %3916 = vmatpush1.bf16.msra.mxu0 %v2757
        %3917 = vmatprep.subr.bf16.mxu0 0
        %3918 = vmatpush1.bf16.msra.mxu0 0
        %3919 = vmatprep.subr.bf16.mxu0 0
        %3920 = vmatpush1.bf16.msra.mxu0 0
        %3921 = vmatprep.subr.bf16.mxu0 0
        %3922 = vmatpush1.bf16.msra.mxu0 0
        %3923 = vmatprep.subr.bf16.mxu0 0
        %3924 = vmatpush1.bf16.msra.mxu0 0
        %3925 = vmatprep.subr.bf16.mxu0 0
        %3926 = vmatpush1.bf16.msra.mxu0 0
        %3927 = vmatprep.subr.bf16.mxu0 0
        %3928 = vmatpush1.bf16.msra.mxu0 0
        %3929 = vmatprep.subr.bf16.mxu0 0
        %3930 = vmatpush1.bf16.msra.mxu0 0
        %3931 = vmatprep.subr.bf16.mxu0 0
        %3932 = vmatpush1.bf16.msra.mxu0 0
        %3933 = vmatprep.subr.bf16.mxu0 0
        %3934 = vmatpush1.bf16.msra.mxu0 0
        %3935 = vmatprep.subr.bf16.mxu0 0
        %3936 = vmatpush1.bf16.msra.mxu0 0
        %3937 = vmatprep.subr.bf16.mxu0 0
        %3938 = vmatpush1.bf16.msra.mxu0 0
        %3939 = vmatprep.subr.bf16.mxu0 0
        %3940 = vmatpush1.bf16.msra.mxu0 0
        %3941 = vmatprep.subr.bf16.mxu0 0
        %3942 = vmatpush1.bf16.msra.mxu0 0
        %3943 = vmatprep.subr.bf16.mxu0 0
        %3944 = vmatpush1.bf16.msra.mxu0 0
        %3945 = vmatprep.subr.bf16.mxu0 0
        %3946 = vmatpush1.bf16.msra.mxu0 0
        %3947 = vmatprep.mubr.bf16.mxu0 0
        %3948 = vmatmul.mubr.bf16.gmra.mrb[0].mxu0 %v2657
        %v3949 = vpop.f32.mrb[0].mxu0
        %v3950 = vadd.f32 %v3661, %v3949
        %v3951 = vpop.f32.mrb[0].mxu0
        %v3952 = vpop.f32.mrb[0].mxu0
        %v3953 = vadd.f32 %v3664, %v3952
        %v3954 = vpop.f32.mrb[0].mxu0
        %3955 = vmatprep.mubr.bf16.mxu0 0
        %3956 = vmatmul.mubr.bf16.gmra.mrb[0].mxu0 %v2660
        %v3957 = vpop.f32.mrb[0].mxu0
        %v3958 = vadd.f32 %v3669, %v3957
        %v3959 = vpop.f32.mrb[0].mxu0
        %v3960 = vpop.f32.mrb[0].mxu0
        %v3961 = vadd.f32 %v3672, %v3960
        %v3962 = vpop.f32.mrb[0].mxu0
        %3963 = vmatprep.mubr.bf16.mxu0 0
        %3964 = vmatmul.mubr.bf16.gmra.mrb[0].mxu0 %v2663
        %v3965 = vpop.f32.mrb[0].mxu0
        %v3966 = vadd.f32 %v3677, %v3965
        %v3967 = vpop.f32.mrb[0].mxu0
        %v3968 = vpop.f32.mrb[0].mxu0
        %v3969 = vadd.f32 %v3680, %v3968
        %v3970 = vpop.f32.mrb[0].mxu0
        %3971 = vmatprep.mubr.bf16.mxu0 0
        %3972 = vmatmul.mubr.bf16.gmra.mrb[0].mxu0 %v2666
        %v3973 = vpop.f32.mrb[0].mxu0
        %v3974 = vadd.f32 %v3685, %v3973
        %v3975 = vpop.f32.mrb[0].mxu0
        %v3976 = vpop.f32.mrb[0].mxu0
        %v3977 = vadd.f32 %v3688, %v3976
        %v3978 = vpop.f32.mrb[0].mxu0
        %3979 = vmatprep.mubr.bf16.mxu0 0
        %3980 = vmatmul.mubr.bf16.gmra.mrb[0].mxu0 %v2669
        %v3981 = vpop.f32.mrb[0].mxu0
        %v3982 = vadd.f32 %v3693, %v3981
        %v3983 = vpop.f32.mrb[0].mxu0
        %v3984 = vpop.f32.mrb[0].mxu0
        %v3985 = vadd.f32 %v3696, %v3984
        %v3986 = vpop.f32.mrb[0].mxu0
        %3987 = vmatprep.mubr.bf16.mxu0 0
        %3988 = vmatmul.mubr.bf16.gmra.mrb[0].mxu0 %v2672
        %v3989 = vpop.f32.mrb[0].mxu0
        %v3990 = vadd.f32 %v3701, %v3989
        %v3991 = vpop.f32.mrb[0].mxu0
        %v3992 = vpop.f32.mrb[0].mxu0
        %v3993 = vadd.f32 %v3704, %v3992
        %v3994 = vpop.f32.mrb[0].mxu0
        %3995 = vmatprep.mubr.bf16.mxu0 0
        %3996 = vmatmul.mubr.bf16.gmra.mrb[0].mxu0 %v2675
        %v3997 = vpop.f32.mrb[0].mxu0
        %v3998 = vadd.f32 %v3709, %v3997
        %v3999 = vpop.f32.mrb[0].mxu0
        %v4000 = vpop.f32.mrb[0].mxu0
        %v4001 = vadd.f32 %v3712, %v4000
        %v4002 = vpop.f32.mrb[0].mxu0
        %4003 = vmatprep.mubr.bf16.mxu0 0
        %4004 = vmatmul.mubr.bf16.gmra.mrb[0].mxu0 %v2678
        %v4005 = vpop.f32.mrb[0].mxu0
        %v4006 = vadd.f32 %v3717, %v4005
        %v4007 = vpop.f32.mrb[0].mxu0
        %v4008 = vpop.f32.mrb[0].mxu0
        %v4009 = vadd.f32 %v3720, %v4008
        %v4010 = vpop.f32.mrb[0].mxu0
        %4011 = vmatprep.mubr.bf16.mxu0 0
        %4012 = vmatmul.mubr.bf16.gmra.mrb[0].mxu0 %v2681
        %v4013 = vpop.f32.mrb[0].mxu0
        %v4014 = vadd.f32 %v3725, %v4013
        %v4015 = vpop.f32.mrb[0].mxu0
        %v4016 = vpop.f32.mrb[0].mxu0
        %v4017 = vadd.f32 %v3728, %v4016
        %v4018 = vpop.f32.mrb[0].mxu0
        %4019 = vmatprep.mubr.bf16.mxu0 0
        %4020 = vmatmul.mubr.bf16.gmra.mrb[0].mxu0 %v2684
        %v4021 = vpop.f32.mrb[0].mxu0
        %v4022 = vadd.f32 %v3733, %v4021
        %v4023 = vpop.f32.mrb[0].mxu0
        %v4024 = vpop.f32.mrb[0].mxu0
        %v4025 = vadd.f32 %v3736, %v4024
        %v4026 = vpop.f32.mrb[0].mxu0
        %4027 = vmatprep.mubr.bf16.mxu0 0
        %4028 = vmatmul.mubr.bf16.gmra.mrb[0].mxu0 %v2687
        %v4029 = vpop.f32.mrb[0].mxu0
        %v4030 = vadd.f32 %v3741, %v4029
        %v4031 = vpop.f32.mrb[0].mxu0
        %v4032 = vpop.f32.mrb[0].mxu0
        %v4033 = vadd.f32 %v3744, %v4032
        %v4034 = vpop.f32.mrb[0].mxu0
        %4035 = vmatprep.mubr.bf16.mxu0 0
        %4036 = vmatmul.mubr.bf16.gmra.mrb[0].mxu0 %v2690
        %v4037 = vpop.f32.mrb[0].mxu0
        %v4038 = vadd.f32 %v3749, %v4037
        %v4039 = vpop.f32.mrb[0].mxu0
        %v4040 = vpop.f32.mrb[0].mxu0
        %v4041 = vadd.f32 %v3752, %v4040
        %v4042 = vpop.f32.mrb[0].mxu0
        %4043 = vmatprep.mubr.bf16.mxu0 0
        %4044 = vmatmul.mubr.bf16.gmra.mrb[0].mxu0 %v2693
        %v4045 = vpop.f32.mrb[0].mxu0
        %v4046 = vadd.f32 %v3757, %v4045
        %v4047 = vpop.f32.mrb[0].mxu0
        %v4048 = vpop.f32.mrb[0].mxu0
        %v4049 = vadd.f32 %v3760, %v4048
        %v4050 = vpop.f32.mrb[0].mxu0
        %4051 = vmatprep.mubr.bf16.mxu0 0
        %4052 = vmatmul.mubr.bf16.gmra.mrb[0].mxu0 %v2696
        %v4053 = vpop.f32.mrb[0].mxu0
        %v4054 = vadd.f32 %v3765, %v4053
        %v4055 = vpop.f32.mrb[0].mxu0
        %v4056 = vpop.f32.mrb[0].mxu0
        %v4057 = vadd.f32 %v3768, %v4056
        %v4058 = vpop.f32.mrb[0].mxu0
        %4059 = vmatprep.mubr.bf16.mxu0 0
        %4060 = vmatmul.mubr.bf16.gmra.mrb[0].mxu0 %v2699
        %v4061 = vpop.f32.mrb[0].mxu0
        %v4062 = vadd.f32 %v3773, %v4061
        %v4063 = vpop.f32.mrb[0].mxu0
        %v4064 = vpop.f32.mrb[0].mxu0
        %v4065 = vadd.f32 %v3776, %v4064
        %v4066 = vpop.f32.mrb[0].mxu0
        %4067 = vmatprep.mubr.bf16.mxu0 0
        %4068 = vmatmul.mubr.bf16.gmra.mrb[0].mxu0 %v2702
        %v4069 = vpop.f32.mrb[0].mxu0
        %v4070 = vadd.f32 %v3781, %v4069
        %v4071 = vpop.f32.mrb[0].mxu0
        %v4072 = vpop.f32.mrb[0].mxu0
        %v4073 = vadd.f32 %v3784, %v4072
        %v4074 = vpop.f32.mrb[0].mxu0
        %4075 = vmatprep.mubr.bf16.mxu0 0
        %4076 = vmatmul.mubr.bf16.gmra.mrb[0].mxu0 %v2705
        %v4077 = vpop.f32.mrb[0].mxu0
        %v4078 = vadd.f32 %v3789, %v4077
        %v4079 = vpop.f32.mrb[0].mxu0
        %v4080 = vpop.f32.mrb[0].mxu0
        %v4081 = vadd.f32 %v3792, %v4080
        %v4082 = vpop.f32.mrb[0].mxu0
        %4083 = vmatprep.mubr.bf16.mxu0 0
        %4084 = vmatmul.mubr.bf16.gmra.mrb[0].mxu0 %v2708
        %v4085 = vpop.f32.mrb[0].mxu0
        %v4086 = vadd.f32 %v3797, %v4085
        %v4087 = vpop.f32.mrb[0].mxu0
        %v4088 = vpop.f32.mrb[0].mxu0
        %v4089 = vadd.f32 %v3800, %v4088
        %v4090 = vpop.f32.mrb[0].mxu0
        %4091 = vmatprep.mubr.bf16.mxu0 0
        %4092 = vmatmul.mubr.bf16.gmra.mrb[0].mxu0 %v2711
        %v4093 = vpop.f32.mrb[0].mxu0
        %v4094 = vadd.f32 %v3805, %v4093
        %v4095 = vpop.f32.mrb[0].mxu0
        %v4096 = vpop.f32.mrb[0].mxu0
        %v4097 = vadd.f32 %v3808, %v4096
        %v4098 = vpop.f32.mrb[0].mxu0
        %4099 = vmatprep.mubr.bf16.mxu0 0
        %4100 = vmatmul.mubr.bf16.gmra.mrb[0].mxu0 %v2714
        %v4101 = vpop.f32.mrb[0].mxu0
        %v4102 = vadd.f32 %v3813, %v4101
        %v4103 = vpop.f32.mrb[0].mxu0
        %v4104 = vpop.f32.mrb[0].mxu0
        %v4105 = vadd.f32 %v3816, %v4104
        %v4106 = vpop.f32.mrb[0].mxu0
        %4107 = vmatprep.mubr.bf16.mxu0 0
        %4108 = vmatmul.mubr.bf16.gmra.mrb[0].mxu0 %v2717
        %v4109 = vpop.f32.mrb[0].mxu0
        %v4110 = vadd.f32 %v3821, %v4109
        %v4111 = vpop.f32.mrb[0].mxu0
        %v4112 = vpop.f32.mrb[0].mxu0
        %v4113 = vadd.f32 %v3824, %v4112
        %v4114 = vpop.f32.mrb[0].mxu0
        %4115 = vmatprep.mubr.bf16.mxu0 0
        %4116 = vmatmul.mubr.bf16.gmra.mrb[0].mxu0 %v2720
        %v4117 = vpop.f32.mrb[0].mxu0
        %v4118 = vadd.f32 %v3829, %v4117
        %v4119 = vpop.f32.mrb[0].mxu0
        %v4120 = vpop.f32.mrb[0].mxu0
        %v4121 = vadd.f32 %v3832, %v4120
        %v4122 = vpop.f32.mrb[0].mxu0
        %4123 = vmatprep.mubr.bf16.mxu0 0
        %4124 = vmatmul.mubr.bf16.gmra.mrb[0].mxu0 %v2723
        %v4125 = vpop.f32.mrb[0].mxu0
        %v4126 = vadd.f32 %v3837, %v4125
        %v4127 = vpop.f32.mrb[0].mxu0
        %v4128 = vpop.f32.mrb[0].mxu0
        %v4129 = vadd.f32 %v3840, %v4128
        %v4130 = vpop.f32.mrb[0].mxu0
        %4131 = vmatprep.mubr.bf16.mxu0 0
        %4132 = vmatmul.mubr.bf16.gmra.mrb[0].mxu0 %v2726
        %v4133 = vpop.f32.mrb[0].mxu0
        %v4134 = vadd.f32 %v3845, %v4133
        %v4135 = vpop.f32.mrb[0].mxu0
        %v4136 = vpop.f32.mrb[0].mxu0
        %v4137 = vadd.f32 %v3848, %v4136
        %v4138 = vpop.f32.mrb[0].mxu0
        %4139 = vmatprep.mubr.bf16.mxu0 0
        %4140 = vmatmul.mubr.bf16.gmra.mrb[0].mxu0 %v2729
        %v4141 = vpop.f32.mrb[0].mxu0
        %v4142 = vadd.f32 %v3853, %v4141
        %v4143 = vpop.f32.mrb[0].mxu0
        %v4144 = vpop.f32.mrb[0].mxu0
        %v4145 = vadd.f32 %v3856, %v4144
        %v4146 = vpop.f32.mrb[0].mxu0
        %4147 = vmatprep.mubr.bf16.mxu0 0
        %4148 = vmatmul.mubr.bf16.gmra.mrb[0].mxu0 %v2732
        %v4149 = vpop.f32.mrb[0].mxu0
        %v4150 = vadd.f32 %v3861, %v4149
        %v4151 = vpop.f32.mrb[0].mxu0
        %v4152 = vpop.f32.mrb[0].mxu0
        %v4153 = vadd.f32 %v3864, %v4152
        %v4154 = vpop.f32.mrb[0].mxu0
        %4155 = vmatprep.mubr.bf16.mxu0 0
        %4156 = vmatmul.mubr.bf16.gmra.mrb[0].mxu0 %v2735
        %v4157 = vpop.f32.mrb[0].mxu0
        %v4158 = vadd.f32 %v3869, %v4157
        %v4159 = vpop.f32.mrb[0].mxu0
        %v4160 = vpop.f32.mrb[0].mxu0
        %v4161 = vadd.f32 %v3872, %v4160
        %v4162 = vpop.f32.mrb[0].mxu0
        %4163 = vmatprep.mubr.bf16.mxu0 0
        %4164 = vmatmul.mubr.bf16.gmra.mrb[0].mxu0 %v2738
        %v4165 = vpop.f32.mrb[0].mxu0
        %v4166 = vadd.f32 %v3877, %v4165
        %v4167 = vpop.f32.mrb[0].mxu0
        %v4168 = vpop.f32.mrb[0].mxu0
        %v4169 = vadd.f32 %v3880, %v4168
        %v4170 = vpop.f32.mrb[0].mxu0
        %4171 = vmatprep.mubr.bf16.mxu0 0
        %4172 = vmatmul.mubr.bf16.gmra.mrb[0].mxu0 %v2741
        %v4173 = vpop.f32.mrb[0].mxu0
        %v4174 = vadd.f32 %v3885, %v4173
        %v4175 = vpop.f32.mrb[0].mxu0
        %v4176 = vpop.f32.mrb[0].mxu0
        %v4177 = vadd.f32 %v3888, %v4176
        %v4178 = vpop.f32.mrb[0].mxu0
        %4179 = vmatprep.mubr.bf16.mxu0 0
        %4180 = vmatmul.mubr.bf16.gmra.mrb[0].mxu0 %v2744
        %v4181 = vpop.f32.mrb[0].mxu0
        %v4182 = vadd.f32 %v3893, %v4181
        %v4183 = vpop.f32.mrb[0].mxu0
        %v4184 = vpop.f32.mrb[0].mxu0
        %v4185 = vadd.f32 %v3896, %v4184
        %v4186 = vpop.f32.mrb[0].mxu0
        %4187 = vmatprep.mubr.bf16.mxu0 0
        %4188 = vmatmul.mubr.bf16.gmra.mrb[0].mxu0 %v2747
        %v4189 = vpop.f32.mrb[0].mxu0
        %v4190 = vadd.f32 %v3901, %v4189
        %v4191 = vpop.f32.mrb[0].mxu0
        %v4192 = vpop.f32.mrb[0].mxu0
        %v4193 = vadd.f32 %v3904, %v4192
        %v4194 = vpop.f32.mrb[0].mxu0
        %4195 = vmatprep.mubr.bf16.mxu0 0
        %4196 = vmatmul.mubr.bf16.gmra.mrb[0].mxu0 %v2750
        %v4197 = vpop.f32.mrb[0].mxu0
        %v4198 = vadd.f32 %v3909, %v4197
        %v4199 = vpop.f32.mrb[0].mxu0
        %v4200 = vpop.f32.mrb[0].mxu0
        %v4201 = vadd.f32 %v3912, %v4200
        %v4202 = vpop.f32.mrb[0].mxu0
        %4203 = vdwg.mxu0
        %v4204 = vadd.f32 %v315, %v3950
        %v4205 = vadd.f32 %v316, %v3953
        %v4206 = vadd.f32 %v317, %v3958
        %v4207 = vadd.f32 %v318, %v3961
        %v4208 = vadd.f32 %v319, %v3966
        %v4209 = vadd.f32 %v320, %v3969
        %v4210 = vadd.f32 %v321, %v3974
        %v4211 = vadd.f32 %v322, %v3977
        %v4212 = vadd.f32 %v323, %v3982
        %v4213 = vadd.f32 %v324, %v3985
        %v4214 = vadd.f32 %v325, %v3990
        %v4215 = vadd.f32 %v326, %v3993
        %v4216 = vadd.f32 %v327, %v3998
        %v4217 = vadd.f32 %v328, %v4001
        %v4218 = vadd.f32 %v329, %v4006
        %v4219 = vadd.f32 %v330, %v4009
        %v4220 = vadd.f32 %v331, %v4014
        %v4221 = vadd.f32 %v332, %v4017
        %v4222 = vadd.f32 %v333, %v4022
        %v4223 = vadd.f32 %v334, %v4025
        %v4224 = vadd.f32 %v335, %v4030
        %v4225 = vadd.f32 %v336, %v4033
        %v4226 = vadd.f32 %v337, %v4038
        %v4227 = vadd.f32 %v338, %v4041
        %v4228 = vadd.f32 %v339, %v4046
        %v4229 = vadd.f32 %v340, %v4049
        %v4230 = vadd.f32 %v341, %v4054
        %v4231 = vadd.f32 %v342, %v4057
        %v4232 = vadd.f32 %v343, %v4062
        %v4233 = vadd.f32 %v344, %v4065
        %v4234 = vadd.f32 %v345, %v4070
        %v4235 = vadd.f32 %v346, %v4073
        %v4236 = vadd.f32 %v347, %v4078
        %v4237 = vadd.f32 %v348, %v4081
        %v4238 = vadd.f32 %v349, %v4086
        %v4239 = vadd.f32 %v350, %v4089
        %v4240 = vadd.f32 %v351, %v4094
        %v4241 = vadd.f32 %v352, %v4097
        %v4242 = vadd.f32 %v353, %v4102
        %v4243 = vadd.f32 %v354, %v4105
        %v4244 = vadd.f32 %v355, %v4110
        %v4245 = vadd.f32 %v356, %v4113
        %v4246 = vadd.f32 %v357, %v4118
        %v4247 = vadd.f32 %v358, %v4121
        %v4248 = vadd.f32 %v359, %v4126
        %v4249 = vadd.f32 %v360, %v4129
        %v4250 = vadd.f32 %v361, %v4134
        %v4251 = vadd.f32 %v362, %v4137
        %v4252 = vadd.f32 %v363, %v4142
        %v4253 = vadd.f32 %v364, %v4145
        %v4254 = vadd.f32 %v365, %v4150
        %v4255 = vadd.f32 %v366, %v4153
        %v4256 = vadd.f32 %v367, %v4158
        %v4257 = vadd.f32 %v368, %v4161
        %v4258 = vadd.f32 %v369, %v4166
        %v4259 = vadd.f32 %v370, %v4169
        %v4260 = vadd.f32 %v371, %v4174
        %v4261 = vadd.f32 %v372, %v4177
        %v4262 = vadd.f32 %v373, %v4182
        %v4263 = vadd.f32 %v374, %v4185
        %v4264 = vadd.f32 %v375, %v4190
        %v4265 = vadd.f32 %v376, %v4193
        %v4266 = vadd.f32 %v377, %v4198
        %v4267 = vadd.f32 %v378, %v4201
        %vm4268 = vcmask 523264
        %4269 = vst.msk [vmem:[#allocation2] sm:$0xff] %vm4268, %v4204
        %4270 = vst.msk [vmem:[#allocation2 + $0x8] sm:$0xff] %vm4268, %v4205
        %4271 = vst.msk [vmem:[#allocation2 + $0x10] sm:$0xff] %vm4268, %v4206
        %4272 = vst.msk [vmem:[#allocation2 + $0x18] sm:$0xff] %vm4268, %v4207
        %4273 = vst.msk [vmem:[#allocation2 + $0x20] sm:$0xff] %vm4268, %v4208
        %4274 = vst.msk [vmem:[#allocation2 + $0x28] sm:$0xff] %vm4268, %v4209
        %4275 = vst.msk [vmem:[#allocation2 + $0x30] sm:$0xff] %vm4268, %v4210
        %4276 = vst.msk [vmem:[#allocation2 + $0x38] sm:$0xff] %vm4268, %v4211
        %4277 = vst.msk [vmem:[#allocation2 + $0x40] sm:$0xff] %vm4268, %v4212
        %4278 = vst.msk [vmem:[#allocation2 + $0x48] sm:$0xff] %vm4268, %v4213
        %4279 = vst.msk [vmem:[#allocation2 + $0x50] sm:$0xff] %vm4268, %v4214
        %4280 = vst.msk [vmem:[#allocation2 + $0x58] sm:$0xff] %vm4268, %v4215
        %4281 = vst.msk [vmem:[#allocation2 + $0x60] sm:$0xff] %vm4268, %v4216
        %4282 = vst.msk [vmem:[#allocation2 + $0x68] sm:$0xff] %vm4268, %v4217
        %4283 = vst.msk [vmem:[#allocation2 + $0x70] sm:$0xff] %vm4268, %v4218
        %4284 = vst.msk [vmem:[#allocation2 + $0x78] sm:$0xff] %vm4268, %v4219
        %4285 = vst.msk [vmem:[#allocation2 + $0x80] sm:$0xff] %vm4268, %v4220
        %4286 = vst.msk [vmem:[#allocation2 + $0x88] sm:$0xff] %vm4268, %v4221
        %4287 = vst.msk [vmem:[#allocation2 + $0x90] sm:$0xff] %vm4268, %v4222
        %4288 = vst.msk [vmem:[#allocation2 + $0x98] sm:$0xff] %vm4268, %v4223
        %4289 = vst.msk [vmem:[#allocation2 + $0xa0] sm:$0xff] %vm4268, %v4224
        %4290 = vst.msk [vmem:[#allocation2 + $0xa8] sm:$0xff] %vm4268, %v4225
        %4291 = vst.msk [vmem:[#allocation2 + $0xb0] sm:$0xff] %vm4268, %v4226
        %4292 = vst.msk [vmem:[#allocation2 + $0xb8] sm:$0xff] %vm4268, %v4227
        %4293 = vst.msk [vmem:[#allocation2 + $0xc0] sm:$0xff] %vm4268, %v4228
        %4294 = vst.msk [vmem:[#allocation2 + $0xc8] sm:$0xff] %vm4268, %v4229
        %4295 = vst.msk [vmem:[#allocation2 + $0xd0] sm:$0xff] %vm4268, %v4230
        %4296 = vst.msk [vmem:[#allocation2 + $0xd8] sm:$0xff] %vm4268, %v4231
        %4297 = vst.msk [vmem:[#allocation2 + $0xe0] sm:$0xff] %vm4268, %v4232
        %4298 = vst.msk [vmem:[#allocation2 + $0xe8] sm:$0xff] %vm4268, %v4233
        %4299 = vst.msk [vmem:[#allocation2 + $0xf0] sm:$0xff] %vm4268, %v4234
        %4300 = vst.msk [vmem:[#allocation2 + $0xf8] sm:$0xff] %vm4268, %v4235
        %4301 = vst.msk [vmem:[#allocation2 + $0x100] sm:$0xff] %vm4268, %v4236
        %4302 = vst.msk [vmem:[#allocation2 + $0x108] sm:$0xff] %vm4268, %v4237
        %4303 = vst.msk [vmem:[#allocation2 + $0x110] sm:$0xff] %vm4268, %v4238
        %4304 = vst.msk [vmem:[#allocation2 + $0x118] sm:$0xff] %vm4268, %v4239
        %4305 = vst.msk [vmem:[#allocation2 + $0x120] sm:$0xff] %vm4268, %v4240
        %4306 = vst.msk [vmem:[#allocation2 + $0x128] sm:$0xff] %vm4268, %v4241
        %4307 = vst.msk [vmem:[#allocation2 + $0x130] sm:$0xff] %vm4268, %v4242
        %4308 = vst.msk [vmem:[#allocation2 + $0x138] sm:$0xff] %vm4268, %v4243
        %4309 = vst.msk [vmem:[#allocation2 + $0x140] sm:$0xff] %vm4268, %v4244
        %4310 = vst.msk [vmem:[#allocation2 + $0x148] sm:$0xff] %vm4268, %v4245
        %4311 = vst.msk [vmem:[#allocation2 + $0x150] sm:$0xff] %vm4268, %v4246
        %4312 = vst.msk [vmem:[#allocation2 + $0x158] sm:$0xff] %vm4268, %v4247
        %4313 = vst.msk [vmem:[#allocation2 + $0x160] sm:$0xff] %vm4268, %v4248
        %4314 = vst.msk [vmem:[#allocation2 + $0x168] sm:$0xff] %vm4268, %v4249
        %4315 = vst.msk [vmem:[#allocation2 + $0x170] sm:$0xff] %vm4268, %v4250
        %4316 = vst.msk [vmem:[#allocation2 + $0x178] sm:$0xff] %vm4268, %v4251
        %4317 = vst.msk [vmem:[#allocation2 + $0x180] sm:$0xff] %vm4268, %v4252
        %4318 = vst.msk [vmem:[#allocation2 + $0x188] sm:$0xff] %vm4268, %v4253
        %4319 = vst.msk [vmem:[#allocation2 + $0x190] sm:$0xff] %vm4268, %v4254
        %4320 = vst.msk [vmem:[#allocation2 + $0x198] sm:$0xff] %vm4268, %v4255
        %4321 = vst.msk [vmem:[#allocation2 + $0x1a0] sm:$0xff] %vm4268, %v4256
        %4322 = vst.msk [vmem:[#allocation2 + $0x1a8] sm:$0xff] %vm4268, %v4257
        %4323 = vst.msk [vmem:[#allocation2 + $0x1b0] sm:$0xff] %vm4268, %v4258
        %4324 = vst.msk [vmem:[#allocation2 + $0x1b8] sm:$0xff] %vm4268, %v4259
        %4325 = vst.msk [vmem:[#allocation2 + $0x1c0] sm:$0xff] %vm4268, %v4260
        %4326 = vst.msk [vmem:[#allocation2 + $0x1c8] sm:$0xff] %vm4268, %v4261
        %4327 = vst.msk [vmem:[#allocation2 + $0x1d0] sm:$0xff] %vm4268, %v4262
        %4328 = vst.msk [vmem:[#allocation2 + $0x1d8] sm:$0xff] %vm4268, %v4263
        %4329 = vst.msk [vmem:[#allocation2 + $0x1e0] sm:$0xff] %vm4268, %v4264
        %4330 = vst.msk [vmem:[#allocation2 + $0x1e8] sm:$0xff] %vm4268, %v4265
        %4331 = vst.msk [vmem:[#allocation2 + $0x1f0] sm:$0xff] %vm4268, %v4266
        %4332 = vst.msk [vmem:[#allocation2 + $0x1f8] sm:$0xff] %vm4268, %v4267
        // Predicated region
        $region49: #{tpu_custom_call.1} parent=31 // pred_check
          %p4333 = pneg %p246
        $region50: #{tpu_custom_call.1} parent=31 // pred_check_branch
          %4335 = sbr.rel (%p4333) target = $region52
        $region51: #{tpu_custom_call.1} parent=31 // pred_region
          %v4336 = vld [vmem:[#allocation2] sm:$0xff]
          %v4337 = vld [vmem:[#allocation2 + $0x8] sm:$0xff]
          %v4338 = vld [vmem:[#allocation2 + $0x10] sm:$0xff]
          %v4339 = vld [vmem:[#allocation2 + $0x18] sm:$0xff]
          %v4340 = vld [vmem:[#allocation2 + $0x20] sm:$0xff]
          %v4341 = vld [vmem:[#allocation2 + $0x28] sm:$0xff]
          %v4342 = vld [vmem:[#allocation2 + $0x30] sm:$0xff]
          %v4343 = vld [vmem:[#allocation2 + $0x38] sm:$0xff]
          %v4344 = vld [vmem:[#allocation2 + $0x40] sm:$0xff]
          %v4345 = vld [vmem:[#allocation2 + $0x48] sm:$0xff]
          %v4346 = vld [vmem:[#allocation2 + $0x50] sm:$0xff]
          %v4347 = vld [vmem:[#allocation2 + $0x58] sm:$0xff]
          %v4348 = vld [vmem:[#allocation2 + $0x60] sm:$0xff]
          %v4349 = vld [vmem:[#allocation2 + $0x68] sm:$0xff]
          %v4350 = vld [vmem:[#allocation2 + $0x70] sm:$0xff]
          %v4351 = vld [vmem:[#allocation2 + $0x78] sm:$0xff]
          %v4352 = vld [vmem:[#allocation2 + $0x80] sm:$0xff]
          %v4353 = vld [vmem:[#allocation2 + $0x88] sm:$0xff]
          %v4354 = vld [vmem:[#allocation2 + $0x90] sm:$0xff]
          %v4355 = vld [vmem:[#allocation2 + $0x98] sm:$0xff]
          %v4356 = vld [vmem:[#allocation2 + $0xa0] sm:$0xff]
          %v4357 = vld [vmem:[#allocation2 + $0xa8] sm:$0xff]
          %v4358 = vld [vmem:[#allocation2 + $0xb0] sm:$0xff]
          %v4359 = vld [vmem:[#allocation2 + $0xb8] sm:$0xff]
          %v4360 = vld [vmem:[#allocation2 + $0xc0] sm:$0xff]
          %v4361 = vld [vmem:[#allocation2 + $0xc8] sm:$0xff]
          %v4362 = vld [vmem:[#allocation2 + $0xd0] sm:$0xff]
          %v4363 = vld [vmem:[#allocation2 + $0xd8] sm:$0xff]
          %v4364 = vld [vmem:[#allocation2 + $0xe0] sm:$0xff]
          %v4365 = vld [vmem:[#allocation2 + $0xe8] sm:$0xff]
          %v4366 = vld [vmem:[#allocation2 + $0xf0] sm:$0xff]
          %v4367 = vld [vmem:[#allocation2 + $0xf8] sm:$0xff]
          %v4368 = vld [vmem:[#allocation2 + $0x100] sm:$0xff]
          %v4369 = vld [vmem:[#allocation2 + $0x108] sm:$0xff]
          %v4370 = vld [vmem:[#allocation2 + $0x110] sm:$0xff]
          %v4371 = vld [vmem:[#allocation2 + $0x118] sm:$0xff]
          %v4372 = vld [vmem:[#allocation2 + $0x120] sm:$0xff]
          %v4373 = vld [vmem:[#allocation2 + $0x128] sm:$0xff]
          %v4374 = vld [vmem:[#allocation2 + $0x130] sm:$0xff]
          %v4375 = vld [vmem:[#allocation2 + $0x138] sm:$0xff]
          %v4376 = vld [vmem:[#allocation2 + $0x140] sm:$0xff]
          %v4377 = vld [vmem:[#allocation2 + $0x148] sm:$0xff]
          %v4378 = vld [vmem:[#allocation2 + $0x150] sm:$0xff]
          %v4379 = vld [vmem:[#allocation2 + $0x158] sm:$0xff]
          %v4380 = vld [vmem:[#allocation2 + $0x160] sm:$0xff]
          %v4381 = vld [vmem:[#allocation2 + $0x168] sm:$0xff]
          %v4382 = vld [vmem:[#allocation2 + $0x170] sm:$0xff]
          %v4383 = vld [vmem:[#allocation2 + $0x178] sm:$0xff]
          %v4384 = vld [vmem:[#allocation2 + $0x180] sm:$0xff]
          %v4385 = vld [vmem:[#allocation2 + $0x188] sm:$0xff]
          %v4386 = vld [vmem:[#allocation2 + $0x190] sm:$0xff]
          %v4387 = vld [vmem:[#allocation2 + $0x198] sm:$0xff]
          %v4388 = vld [vmem:[#allocation2 + $0x1a0] sm:$0xff]
          %v4389 = vld [vmem:[#allocation2 + $0x1a8] sm:$0xff]
          %v4390 = vld [vmem:[#allocation2 + $0x1b0] sm:$0xff]
          %v4391 = vld [vmem:[#allocation2 + $0x1b8] sm:$0xff]
          %v4392 = vld [vmem:[#allocation2 + $0x1c0] sm:$0xff]
          %v4393 = vld [vmem:[#allocation2 + $0x1c8] sm:$0xff]
          %v4394 = vld [vmem:[#allocation2 + $0x1d0] sm:$0xff]
          %v4395 = vld [vmem:[#allocation2 + $0x1d8] sm:$0xff]
          %v4396 = vld [vmem:[#allocation2 + $0x1e0] sm:$0xff]
          %v4397 = vld [vmem:[#allocation2 + $0x1e8] sm:$0xff]
          %v4398 = vld [vmem:[#allocation2 + $0x1f0] sm:$0xff]
          %v4399 = vld [vmem:[#allocation2 + $0x1f8] sm:$0xff]
          %v4400 = vld [vmem:[#allocation8] sm:$0x1]
          %v4402 = vlaneseq
          %v4403 = vshrl.u32 %v4402, 7
          %v4404 = vsub.s32 0, %v4403
          %v4405 = vrot.slane %v4400, %v4404
          %v4407 = vadd.f32 %v4336, %v4405
          %v4408 = vadd.f32 %v4337, %v4405
          %v4409 = vadd.f32 %v4338, %v4405
          %v4410 = vadd.f32 %v4339, %v4405
          %v4411 = vadd.f32 %v4340, %v4405
          %v4412 = vadd.f32 %v4341, %v4405
          %v4413 = vadd.f32 %v4342, %v4405
          %v4414 = vadd.f32 %v4343, %v4405
          %v4415 = vadd.f32 %v4344, %v4405
          %v4416 = vadd.f32 %v4345, %v4405
          %v4417 = vadd.f32 %v4346, %v4405
          %v4418 = vadd.f32 %v4347, %v4405
          %v4419 = vadd.f32 %v4348, %v4405
          %v4420 = vadd.f32 %v4349, %v4405
          %v4421 = vadd.f32 %v4350, %v4405
          %v4422 = vadd.f32 %v4351, %v4405
          %v4423 = vadd.f32 %v4352, %v4405
          %v4424 = vadd.f32 %v4353, %v4405
          %v4425 = vadd.f32 %v4354, %v4405
          %v4426 = vadd.f32 %v4355, %v4405
          %v4427 = vadd.f32 %v4356, %v4405
          %v4428 = vadd.f32 %v4357, %v4405
          %v4429 = vadd.f32 %v4358, %v4405
          %v4430 = vadd.f32 %v4359, %v4405
          %v4431 = vadd.f32 %v4360, %v4405
          %v4432 = vadd.f32 %v4361, %v4405
          %v4433 = vadd.f32 %v4362, %v4405
          %v4434 = vadd.f32 %v4363, %v4405
          %v4435 = vadd.f32 %v4364, %v4405
          %v4436 = vadd.f32 %v4365, %v4405
          %v4437 = vadd.f32 %v4366, %v4405
          %v4438 = vadd.f32 %v4367, %v4405
          %v4439 = vadd.f32 %v4368, %v4405
          %v4440 = vadd.f32 %v4369, %v4405
          %v4441 = vadd.f32 %v4370, %v4405
          %v4442 = vadd.f32 %v4371, %v4405
          %v4443 = vadd.f32 %v4372, %v4405
          %v4444 = vadd.f32 %v4373, %v4405
          %v4445 = vadd.f32 %v4374, %v4405
          %v4446 = vadd.f32 %v4375, %v4405
          %v4447 = vadd.f32 %v4376, %v4405
          %v4448 = vadd.f32 %v4377, %v4405
          %v4449 = vadd.f32 %v4378, %v4405
          %v4450 = vadd.f32 %v4379, %v4405
          %v4451 = vadd.f32 %v4380, %v4405
          %v4452 = vadd.f32 %v4381, %v4405
          %v4453 = vadd.f32 %v4382, %v4405
          %v4454 = vadd.f32 %v4383, %v4405
          %v4455 = vadd.f32 %v4384, %v4405
          %v4456 = vadd.f32 %v4385, %v4405
          %v4457 = vadd.f32 %v4386, %v4405
          %v4458 = vadd.f32 %v4387, %v4405
          %v4459 = vadd.f32 %v4388, %v4405
          %v4460 = vadd.f32 %v4389, %v4405
          %v4461 = vadd.f32 %v4390, %v4405
          %v4462 = vadd.f32 %v4391, %v4405
          %v4463 = vadd.f32 %v4392, %v4405
          %v4464 = vadd.f32 %v4393, %v4405
          %v4465 = vadd.f32 %v4394, %v4405
          %v4466 = vadd.f32 %v4395, %v4405
          %v4467 = vadd.f32 %v4396, %v4405
          %v4468 = vadd.f32 %v4397, %v4405
          %v4469 = vadd.f32 %v4398, %v4405
          %v4470 = vadd.f32 %v4399, %v4405
          %v4471 = vmax.f32 %v4407, 0.0
          %v4472 = vmax.f32 %v4408, 0.0
          %v4473 = vmax.f32 %v4409, 0.0
          %v4474 = vmax.f32 %v4410, 0.0
          %v4475 = vmax.f32 %v4411, 0.0
          %v4476 = vmax.f32 %v4412, 0.0
          %v4477 = vmax.f32 %v4413, 0.0
          %v4478 = vmax.f32 %v4414, 0.0
          %v4479 = vmax.f32 %v4415, 0.0
          %v4480 = vmax.f32 %v4416, 0.0
          %v4481 = vmax.f32 %v4417, 0.0
          %v4482 = vmax.f32 %v4418, 0.0
          %v4483 = vmax.f32 %v4419, 0.0
          %v4484 = vmax.f32 %v4420, 0.0
          %v4485 = vmax.f32 %v4421, 0.0
          %v4486 = vmax.f32 %v4422, 0.0
          %v4487 = vmax.f32 %v4423, 0.0
          %v4488 = vmax.f32 %v4424, 0.0
          %v4489 = vmax.f32 %v4425, 0.0
          %v4490 = vmax.f32 %v4426, 0.0
          %v4491 = vmax.f32 %v4427, 0.0
          %v4492 = vmax.f32 %v4428, 0.0
          %v4493 = vmax.f32 %v4429, 0.0
          %v4494 = vmax.f32 %v4430, 0.0
          %v4495 = vmax.f32 %v4431, 0.0
          %v4496 = vmax.f32 %v4432, 0.0
          %v4497 = vmax.f32 %v4433, 0.0
          %v4498 = vmax.f32 %v4434, 0.0
          %v4499 = vmax.f32 %v4435, 0.0
          %v4500 = vmax.f32 %v4436, 0.0
          %v4501 = vmax.f32 %v4437, 0.0
          %v4502 = vmax.f32 %v4438, 0.0
          %v4503 = vmax.f32 %v4439, 0.0
          %v4504 = vmax.f32 %v4440, 0.0
          %v4505 = vmax.f32 %v4441, 0.0
          %v4506 = vmax.f32 %v4442, 0.0
          %v4507 = vmax.f32 %v4443, 0.0
          %v4508 = vmax.f32 %v4444, 0.0
          %v4509 = vmax.f32 %v4445, 0.0
          %v4510 = vmax.f32 %v4446, 0.0
          %v4511 = vmax.f32 %v4447, 0.0
          %v4512 = vmax.f32 %v4448, 0.0
          %v4513 = vmax.f32 %v4449, 0.0
          %v4514 = vmax.f32 %v4450, 0.0
          %v4515 = vmax.f32 %v4451, 0.0
          %v4516 = vmax.f32 %v4452, 0.0
          %v4517 = vmax.f32 %v4453, 0.0
          %v4518 = vmax.f32 %v4454, 0.0
          %v4519 = vmax.f32 %v4455, 0.0
          %v4520 = vmax.f32 %v4456, 0.0
          %v4521 = vmax.f32 %v4457, 0.0
          %v4522 = vmax.f32 %v4458, 0.0
          %v4523 = vmax.f32 %v4459, 0.0
          %v4524 = vmax.f32 %v4460, 0.0
          %v4525 = vmax.f32 %v4461, 0.0
          %v4526 = vmax.f32 %v4462, 0.0
          %v4527 = vmax.f32 %v4463, 0.0
          %v4528 = vmax.f32 %v4464, 0.0
          %v4529 = vmax.f32 %v4465, 0.0
          %v4530 = vmax.f32 %v4466, 0.0
          %v4531 = vmax.f32 %v4467, 0.0
          %v4532 = vmax.f32 %v4468, 0.0
          %v4533 = vmax.f32 %v4469, 0.0
          %v4534 = vmax.f32 %v4470, 0.0
          %v4535 = vpack.c.bf16 %v4472, %v4471
          %v4536 = vpack.c.bf16 %v4474, %v4473
          %v4537 = vpack.c.bf16 %v4476, %v4475
          %v4538 = vpack.c.bf16 %v4478, %v4477
          %v4539 = vpack.c.bf16 %v4480, %v4479
          %v4540 = vpack.c.bf16 %v4482, %v4481
          %v4541 = vpack.c.bf16 %v4484, %v4483
          %v4542 = vpack.c.bf16 %v4486, %v4485
          %v4543 = vpack.c.bf16 %v4488, %v4487
          %v4544 = vpack.c.bf16 %v4490, %v4489
          %v4545 = vpack.c.bf16 %v4492, %v4491
          %v4546 = vpack.c.bf16 %v4494, %v4493
          %v4547 = vpack.c.bf16 %v4496, %v4495
          %v4548 = vpack.c.bf16 %v4498, %v4497
          %v4549 = vpack.c.bf16 %v4500, %v4499
          %v4550 = vpack.c.bf16 %v4502, %v4501
          %v4551 = vpack.c.bf16 %v4504, %v4503
          %v4552 = vpack.c.bf16 %v4506, %v4505
          %v4553 = vpack.c.bf16 %v4508, %v4507
          %v4554 = vpack.c.bf16 %v4510, %v4509
          %v4555 = vpack.c.bf16 %v4512, %v4511
          %v4556 = vpack.c.bf16 %v4514, %v4513
          %v4557 = vpack.c.bf16 %v4516, %v4515
          %v4558 = vpack.c.bf16 %v4518, %v4517
          %v4559 = vpack.c.bf16 %v4520, %v4519
          %v4560 = vpack.c.bf16 %v4522, %v4521
          %v4561 = vpack.c.bf16 %v4524, %v4523
          %v4562 = vpack.c.bf16 %v4526, %v4525
          %v4563 = vpack.c.bf16 %v4528, %v4527
          %v4564 = vpack.c.bf16 %v4530, %v4529
          %v4565 = vpack.c.bf16 %v4532, %v4531
          %v4566 = vpack.c.bf16 %v4534, %v4533
          %v4599 = vunpack.c.l.b16 %v4535
          %v4600 = vunpack.c.h.b16 %v4535
          %v4601 = vunpack.c.l.b16 %v4536
          %v4602 = vunpack.c.h.b16 %v4536
          %v4603 = vunpack.c.l.b16 %v4537
          %v4604 = vunpack.c.h.b16 %v4537
          %v4605 = vunpack.c.l.b16 %v4538
          %v4606 = vunpack.c.h.b16 %v4538
          %v4607 = vunpack.c.l.b16 %v4539
          %v4608 = vunpack.c.h.b16 %v4539
          %v4609 = vunpack.c.l.b16 %v4540
          %v4610 = vunpack.c.h.b16 %v4540
          %v4611 = vunpack.c.l.b16 %v4541
          %v4612 = vunpack.c.h.b16 %v4541
          %v4613 = vunpack.c.l.b16 %v4542
          %v4614 = vunpack.c.h.b16 %v4542
          %v4615 = vunpack.c.l.b16 %v4543
          %v4616 = vunpack.c.h.b16 %v4543
          %v4617 = vunpack.c.l.b16 %v4544
          %v4618 = vunpack.c.h.b16 %v4544
          %v4619 = vunpack.c.l.b16 %v4545
          %v4620 = vunpack.c.h.b16 %v4545
          %v4621 = vunpack.c.l.b16 %v4546
          %v4622 = vunpack.c.h.b16 %v4546
          %v4623 = vunpack.c.l.b16 %v4547
          %v4624 = vunpack.c.h.b16 %v4547
          %v4625 = vunpack.c.l.b16 %v4548
          %v4626 = vunpack.c.h.b16 %v4548
          %v4627 = vunpack.c.l.b16 %v4549
          %v4628 = vunpack.c.h.b16 %v4549
          %v4629 = vunpack.c.l.b16 %v4550
          %v4630 = vunpack.c.h.b16 %v4550
          %v4631 = vunpack.c.l.b16 %v4551
          %v4632 = vunpack.c.h.b16 %v4551
          %v4633 = vunpack.c.l.b16 %v4552
          %v4634 = vunpack.c.h.b16 %v4552
          %v4635 = vunpack.c.l.b16 %v4553
          %v4636 = vunpack.c.h.b16 %v4553
          %v4637 = vunpack.c.l.b16 %v4554
          %v4638 = vunpack.c.h.b16 %v4554
          %v4639 = vunpack.c.l.b16 %v4555
          %v4640 = vunpack.c.h.b16 %v4555
          %v4641 = vunpack.c.l.b16 %v4556
          %v4642 = vunpack.c.h.b16 %v4556
          %v4643 = vunpack.c.l.b16 %v4557
          %v4644 = vunpack.c.h.b16 %v4557
          %v4645 = vunpack.c.l.b16 %v4558
          %v4646 = vunpack.c.h.b16 %v4558
          %v4647 = vunpack.c.l.b16 %v4559
          %v4648 = vunpack.c.h.b16 %v4559
          %v4649 = vunpack.c.l.b16 %v4560
          %v4650 = vunpack.c.h.b16 %v4560
          %v4651 = vunpack.c.l.b16 %v4561
          %v4652 = vunpack.c.h.b16 %v4561
          %v4653 = vunpack.c.l.b16 %v4562
          %v4654 = vunpack.c.h.b16 %v4562
          %v4655 = vunpack.c.l.b16 %v4563
          %v4656 = vunpack.c.h.b16 %v4563
          %v4657 = vunpack.c.l.b16 %v4564
          %v4658 = vunpack.c.h.b16 %v4564
          %v4659 = vunpack.c.l.b16 %v4565
          %v4660 = vunpack.c.h.b16 %v4565
          %v4661 = vunpack.c.l.b16 %v4566
          %v4662 = vunpack.c.h.b16 %v4566
          %v4663 = vpack.c.b16 %v4599, %v4599
          %v4664 = vpack.c.b16 %v4600, %v4600
          %v4665 = vpack.c.b16 %v4601, %v4601
          %v4666 = vpack.c.b16 %v4602, %v4602
          %v4667 = vpack.c.b16 %v4603, %v4603
          %v4668 = vpack.c.b16 %v4604, %v4604
          %v4669 = vpack.c.b16 %v4605, %v4605
          %v4670 = vpack.c.b16 %v4606, %v4606
          %v4671 = vpack.c.b16 %v4607, %v4607
          %v4672 = vpack.c.b16 %v4608, %v4608
          %v4673 = vpack.c.b16 %v4609, %v4609
          %v4674 = vpack.c.b16 %v4610, %v4610
          %v4675 = vpack.c.b16 %v4611, %v4611
          %v4676 = vpack.c.b16 %v4612, %v4612
          %v4677 = vpack.c.b16 %v4613, %v4613
          %v4678 = vpack.c.b16 %v4614, %v4614
          %v4679 = vpack.c.b16 %v4615, %v4615
          %v4680 = vpack.c.b16 %v4616, %v4616
          %v4681 = vpack.c.b16 %v4617, %v4617
          %v4682 = vpack.c.b16 %v4618, %v4618
          %v4683 = vpack.c.b16 %v4619, %v4619
          %v4684 = vpack.c.b16 %v4620, %v4620
          %v4685 = vpack.c.b16 %v4621, %v4621
          %v4686 = vpack.c.b16 %v4622, %v4622
          %v4687 = vpack.c.b16 %v4623, %v4623
          %v4688 = vpack.c.b16 %v4624, %v4624
          %v4689 = vpack.c.b16 %v4625, %v4625
          %v4690 = vpack.c.b16 %v4626, %v4626
          %v4691 = vpack.c.b16 %v4627, %v4627
          %v4692 = vpack.c.b16 %v4628, %v4628
          %v4693 = vpack.c.b16 %v4629, %v4629
          %v4694 = vpack.c.b16 %v4630, %v4630
          %v4695 = vpack.c.b16 %v4631, %v4631
          %v4696 = vpack.c.b16 %v4632, %v4632
          %v4697 = vpack.c.b16 %v4633, %v4633
          %v4698 = vpack.c.b16 %v4634, %v4634
          %v4699 = vpack.c.b16 %v4635, %v4635
          %v4700 = vpack.c.b16 %v4636, %v4636
          %v4701 = vpack.c.b16 %v4637, %v4637
          %v4702 = vpack.c.b16 %v4638, %v4638
          %v4703 = vpack.c.b16 %v4639, %v4639
          %v4704 = vpack.c.b16 %v4640, %v4640
          %v4705 = vpack.c.b16 %v4641, %v4641
          %v4706 = vpack.c.b16 %v4642, %v4642
          %v4707 = vpack.c.b16 %v4643, %v4643
          %v4708 = vpack.c.b16 %v4644, %v4644
          %v4709 = vpack.c.b16 %v4645, %v4645
          %v4710 = vpack.c.b16 %v4646, %v4646
          %v4711 = vpack.c.b16 %v4647, %v4647
          %v4712 = vpack.c.b16 %v4648, %v4648
          %v4713 = vpack.c.b16 %v4649, %v4649
          %v4714 = vpack.c.b16 %v4650, %v4650
          %v4715 = vpack.c.b16 %v4651, %v4651
          %v4716 = vpack.c.b16 %v4652, %v4652
          %v4717 = vpack.c.b16 %v4653, %v4653
          %v4718 = vpack.c.b16 %v4654, %v4654
          %v4719 = vpack.c.b16 %v4655, %v4655
          %v4720 = vpack.c.b16 %v4656, %v4656
          %v4721 = vpack.c.b16 %v4657, %v4657
          %v4722 = vpack.c.b16 %v4658, %v4658
          %v4723 = vpack.c.b16 %v4659, %v4659
          %v4724 = vpack.c.b16 %v4660, %v4660
          %v4725 = vpack.c.b16 %v4661, %v4661
          %v4726 = vpack.c.b16 %v4662, %v4662
          %vm4791 = vcmask 519168
          %4792 = vst.msk [vmem:[%s240] sm:$0xf] %vm4791, %v4663
          %4793 = vst.msk [vmem:[%s240 + $0x4] sm:$0xf] %vm4791, %v4664
          %4794 = vst.msk [vmem:[%s240 + $0x8] sm:$0xf] %vm4791, %v4665
          %4795 = vst.msk [vmem:[%s240 + $0xc] sm:$0xf] %vm4791, %v4666
          %4796 = vst.msk [vmem:[%s240 + $0x10] sm:$0xf] %vm4791, %v4667
          %4797 = vst.msk [vmem:[%s240 + $0x14] sm:$0xf] %vm4791, %v4668
          %4798 = vst.msk [vmem:[%s240 + $0x18] sm:$0xf] %vm4791, %v4669
          %4799 = vst.msk [vmem:[%s240 + $0x1c] sm:$0xf] %vm4791, %v4670
          %4800 = vst.msk [vmem:[%s240 + $0x20] sm:$0xf] %vm4791, %v4671
          %4801 = vst.msk [vmem:[%s240 + $0x24] sm:$0xf] %vm4791, %v4672
          %4802 = vst.msk [vmem:[%s240 + $0x28] sm:$0xf] %vm4791, %v4673
          %4803 = vst.msk [vmem:[%s240 + $0x2c] sm:$0xf] %vm4791, %v4674
          %4804 = vst.msk [vmem:[%s240 + $0x30] sm:$0xf] %vm4791, %v4675
          %4805 = vst.msk [vmem:[%s240 + $0x34] sm:$0xf] %vm4791, %v4676
          %4806 = vst.msk [vmem:[%s240 + $0x38] sm:$0xf] %vm4791, %v4677
          %4807 = vst.msk [vmem:[%s240 + $0x3c] sm:$0xf] %vm4791, %v4678
          %4808 = vst.msk [vmem:[%s240 + $0x40] sm:$0xf] %vm4791, %v4679
          %4809 = vst.msk [vmem:[%s240 + $0x44] sm:$0xf] %vm4791, %v4680
          %4810 = vst.msk [vmem:[%s240 + $0x48] sm:$0xf] %vm4791, %v4681
          %4811 = vst.msk [vmem:[%s240 + $0x4c] sm:$0xf] %vm4791, %v4682
          %4812 = vst.msk [vmem:[%s240 + $0x50] sm:$0xf] %vm4791, %v4683
          %4813 = vst.msk [vmem:[%s240 + $0x54] sm:$0xf] %vm4791, %v4684
          %4814 = vst.msk [vmem:[%s240 + $0x58] sm:$0xf] %vm4791, %v4685
          %4815 = vst.msk [vmem:[%s240 + $0x5c] sm:$0xf] %vm4791, %v4686
          %4816 = vst.msk [vmem:[%s240 + $0x60] sm:$0xf] %vm4791, %v4687
          %4817 = vst.msk [vmem:[%s240 + $0x64] sm:$0xf] %vm4791, %v4688
          %4818 = vst.msk [vmem:[%s240 + $0x68] sm:$0xf] %vm4791, %v4689
          %4819 = vst.msk [vmem:[%s240 + $0x6c] sm:$0xf] %vm4791, %v4690
          %4820 = vst.msk [vmem:[%s240 + $0x70] sm:$0xf] %vm4791, %v4691
          %4821 = vst.msk [vmem:[%s240 + $0x74] sm:$0xf] %vm4791, %v4692
          %4822 = vst.msk [vmem:[%s240 + $0x78] sm:$0xf] %vm4791, %v4693
          %4823 = vst.msk [vmem:[%s240 + $0x7c] sm:$0xf] %vm4791, %v4694
          %4824 = vst.msk [vmem:[%s240 + $0x80] sm:$0xf] %vm4791, %v4695
          %4825 = vst.msk [vmem:[%s240 + $0x84] sm:$0xf] %vm4791, %v4696
          %4826 = vst.msk [vmem:[%s240 + $0x88] sm:$0xf] %vm4791, %v4697
          %4827 = vst.msk [vmem:[%s240 + $0x8c] sm:$0xf] %vm4791, %v4698
          %4828 = vst.msk [vmem:[%s240 + $0x90] sm:$0xf] %vm4791, %v4699
          %4829 = vst.msk [vmem:[%s240 + $0x94] sm:$0xf] %vm4791, %v4700
          %4830 = vst.msk [vmem:[%s240 + $0x98] sm:$0xf] %vm4791, %v4701
          %4831 = vst.msk [vmem:[%s240 + $0x9c] sm:$0xf] %vm4791, %v4702
          %4832 = vst.msk [vmem:[%s240 + $0xa0] sm:$0xf] %vm4791, %v4703
          %4833 = vst.msk [vmem:[%s240 + $0xa4] sm:$0xf] %vm4791, %v4704
          %4834 = vst.msk [vmem:[%s240 + $0xa8] sm:$0xf] %vm4791, %v4705
          %4835 = vst.msk [vmem:[%s240 + $0xac] sm:$0xf] %vm4791, %v4706
          %4836 = vst.msk [vmem:[%s240 + $0xb0] sm:$0xf] %vm4791, %v4707
          %4837 = vst.msk [vmem:[%s240 + $0xb4] sm:$0xf] %vm4791, %v4708
          %4838 = vst.msk [vmem:[%s240 + $0xb8] sm:$0xf] %vm4791, %v4709
          %4839 = vst.msk [vmem:[%s240 + $0xbc] sm:$0xf] %vm4791, %v4710
          %4840 = vst.msk [vmem:[%s240 + $0xc0] sm:$0xf] %vm4791, %v4711
          %4841 = vst.msk [vmem:[%s240 + $0xc4] sm:$0xf] %vm4791, %v4712
          %4842 = vst.msk [vmem:[%s240 + $0xc8] sm:$0xf] %vm4791, %v4713
          %4843 = vst.msk [vmem:[%s240 + $0xcc] sm:$0xf] %vm4791, %v4714
          %4844 = vst.msk [vmem:[%s240 + $0xd0] sm:$0xf] %vm4791, %v4715
          %4845 = vst.msk [vmem:[%s240 + $0xd4] sm:$0xf] %vm4791, %v4716
          %4846 = vst.msk [vmem:[%s240 + $0xd8] sm:$0xf] %vm4791, %v4717
          %4847 = vst.msk [vmem:[%s240 + $0xdc] sm:$0xf] %vm4791, %v4718
          %4848 = vst.msk [vmem:[%s240 + $0xe0] sm:$0xf] %vm4791, %v4719
          %4849 = vst.msk [vmem:[%s240 + $0xe4] sm:$0xf] %vm4791, %v4720
          %4850 = vst.msk [vmem:[%s240 + $0xe8] sm:$0xf] %vm4791, %v4721
          %4851 = vst.msk [vmem:[%s240 + $0xec] sm:$0xf] %vm4791, %v4722
          %4852 = vst.msk [vmem:[%s240 + $0xf0] sm:$0xf] %vm4791, %v4723
          %4853 = vst.msk [vmem:[%s240 + $0xf4] sm:$0xf] %vm4791, %v4724
          %4854 = vst.msk [vmem:[%s240 + $0xf8] sm:$0xf] %vm4791, %v4725
          %4855 = vst.msk [vmem:[%s240 + $0xfc] sm:$0xf] %vm4791, %v4726
        $region52: #{tpu_custom_call.1} parent=31 // pred_fallthru
          _
        %s4856 = sand.u32 %s116, 1
        %s4857 = scalar_lea.sflag [#allocation5], %s4856
        %s4858 = sand.u32 %s116, 1
        %s4859 = smul.addr %s4858, 256
        %s4860 = scalar_lea.vmem [#allocation9], %s4859
        // Predicated region
        $region53: #{tpu_custom_call.1} parent=31 // pred_check
          %p4861 = pneg %p126
        $region54: #{tpu_custom_call.1} parent=31 // pred_check_branch
          %4863 = sbr.rel (%p4861) target = $region56
        $region55: #{tpu_custom_call.1} parent=31 // pred_region
          %s4864 = smul.u32 64, %s25
          %s4866 = ssub.s32 4096, 4096
          %4867 = vsyncadd %s4857, %s4866
          %s4868 = smul.addr %s4864, 64
          %s4869 = scalar_lea.hbm %s3, %s4868
          %s4870 = sshll.u32 %s4860, 4
          %s4871 = int_to_ptr.vmem [resolvable:$true] %s4870
          %4876 = dma.vmem_to_hbm [thread:$0]  %s4871, 4096, %s4869, %s4857, 64, 64, 4
        $region56: #{tpu_custom_call.1} parent=31 // pred_fallthru
          _
      $region32: #{tpu_custom_call.1} parent=5 // pred_fallthru
        _
      %p4877 = scmp.le.s32.totalorder 2, %s16
      // Predicated region
      $region57: #{tpu_custom_call.1} parent=5 // pred_check
        %p4878 = pneg %p4877
      $region58: #{tpu_custom_call.1} parent=5 // pred_check_branch
        %4880 = sbr.rel (%p4878) target = $region60
      $region59: #{tpu_custom_call.1} parent=5 // pred_region
        %s4881 = ssub.s32 %s16, 2
        // Predicated region
        $region61: #{tpu_custom_call.1} parent=59 // pred_check
          %p4882 = pneg %p132
        $region62: #{tpu_custom_call.1} parent=59 // pred_check_branch
          %4884 = sbr.rel (%p4882) target = $region64
        $region63: #{tpu_custom_call.1} parent=59 // pred_region
          %s4885 = sand.u32 %s117, 1
          %s4886 = scalar_lea.sflag [#allocation5], %s4885
          %s4887 = sand.u32 %s117, 1
          %s4888 = smul.addr %s4887, 256
          %s4889 = scalar_lea.vmem [#allocation9], %s4888
          %4890 = dma.done %s4886, 4096
        $region64: #{tpu_custom_call.1} parent=59 // pred_fallthru
          _
      $region60: #{tpu_custom_call.1} parent=5 // pred_fallthru
        _
    $region6: #{tpu_custom_call.1} parent=1 // loop_footer
      %s20 = sadd.s32 1, %s16
    $region7: #{tpu_custom_call.1} parent=1 // loop_footer_branch
      %15 = sbr.rel target = $region3
    $region8: #{tpu_custom_call.1} parent=1 // loop_exit
      _
    %4891 = vsyncpa [#allocation4], 1
    %s4892 = scalar_lea.sflag [#allocation4], 1
    %4893 = vsyncpa %s4892, 1
    %4894 = vsyncpa [#allocation7], 1
    %4895 = vsyncpa [#allocation5], 1
    %s4896 = scalar_lea.sflag [#allocation5], 1
    %4897 = vsyncpa %s4896, 1

</llo_original>
